<compile_context>
chip_gen: v5e
topology: v5e:2x2
jax: 0.10.0
libtpu: 0.0.40
codegen_flags: <defaults>
</compile_context>

<pallas_src>
import functools
import math

import jax
import jax.numpy as jnp
from jax import lax
from jax.experimental import pallas as pl
from jax.experimental.pallas import tpu as pltpu


def _round_up(x, m):
    return (x + m - 1) // m * m


def _pick_batch_block(n, s_pad):
    """~256 MXU rows per grid step, but keep >=2 'parallel' steps when the
    batch allows it so both v7x TensorCores get work (1 TC on v5e/v6e)."""
    target = max(1, 256 // s_pad)
    if n >= 2 * target:
        return target
    return max(1, (n + 1) // 2)


# ----------------------------------------------------------------------------
# Fused kernel: embedding -> NLAYERS encoder layers (post-LN, ReLU FFN,
# key-padding mask) -> rtlinear head on the CLS token.
# ----------------------------------------------------------------------------
def _fused_forward_kernel(tok_ref, dec_ref, kv_ref, a_ref, p_ref, cls_ref,
                          pos_ref, wqkv_ref, bqkv_ref, wo_ref, bo_ref,
                          w1_ref, b1_ref, w2_ref, b2_ref,
                          g1_ref, be1_ref, g2_ref, be2_ref,
                          rtw_ref, rtb_ref, out_ref, *, nhead, nlayers):
    f32 = jnp.float32
    B, S, _ = tok_ref.shape            # S = sublane-padded sequence length
    Va, E = a_ref.shape
    Vp = p_ref.shape[0]
    hd = E // nhead
    M = B * S
    scale = 1.0 / math.sqrt(hd)
    eps = 1e-5

    # ---- Embedding: vectorized one-hot gathers on the MXU.  HIGHEST keeps the
    #      f32 table lookup exact.  Position 0 holds a -1 sentinel (CLS slot)
    #      and padded positions are -1 too, so they read zero from both tables.
    tok = tok_ref[...].reshape(M, 1)
    dec = dec_ref[...].reshape(M, 1)
    oh_a = (tok == lax.broadcasted_iota(jnp.int32, (M, Va), 1)).astype(f32)
    oh_p = (dec == lax.broadcasted_iota(jnp.int32, (M, Vp), 1)).astype(f32)
    emb = (jnp.dot(oh_a, a_ref[...], preferred_element_type=f32,
                   precision=lax.Precision.HIGHEST)
           + jnp.dot(oh_p, p_ref[...], preferred_element_type=f32,
                     precision=lax.Precision.HIGHEST))               # (M, E)

    is_cls = (lax.broadcasted_iota(jnp.int32, (1, S, 1), 1) == 0).astype(f32)
    x3 = (emb.reshape(B, S, E)
          + is_cls * cls_ref[...][None]          # cls_embedding(1) at pos 0
          + pos_ref[...][None])                  # positional rows (pre-sliced)
    xf = x3.reshape(M, E)

    # ---- Additive key-padding bias.  kv_len = peptide_length + 1 >= 1 always,
    #      so the softmax never sees an all-masked row (no NaN); the S padding
    #      columns are always masked since kv <= true S.
    kv = kv_ref[...]                                           # (B, 1, 1) int32
    key_pos = lax.broadcasted_iota(jnp.int32, (1, 1, S), 2)
    mask_bias = jnp.where(key_pos >= kv, -1e30, 0.0).astype(f32)   # (B, 1, S)

    # ---- Encoder layers; weights stacked on axis 0, everything VMEM-resident.
    for l in range(nlayers):
        # Fused QKV projection: one lane-dense (M,E)x(E,3E) matmul.
        qkv = (jnp.dot(xf, wqkv_ref[l], preferred_element_type=f32)
               + bqkv_ref[l])                                  # (M, 3E)
        qkv3 = qkv.reshape(B, S, 3 * E)

        heads = []
        for h in range(nhead):
            q_h = qkv3[:, :, h * hd:(h + 1) * hd]
            k_h = qkv3[:, :, E + h * hd:E + (h + 1) * hd]
            v_h = qkv3[:, :, 2 * E + h * hd:2 * E + (h + 1) * hd]
            s = jnp.einsum('bqd,bkd->bqk', q_h * scale, k_h,
                           preferred_element_type=f32) + mask_bias
            m = jnp.max(s, axis=-1, keepdims=True)
            p = jnp.exp(s - m)
            attn = p * pl.reciprocal(jnp.sum(p, axis=-1, keepdims=True),
                                     approx=True)
            heads.append(jnp.einsum('bqk,bkd->bqd', attn, v_h,
                                    preferred_element_type=f32))
        ctx = jnp.concatenate(heads, axis=-1).reshape(M, E)
        # Fused output projection: one (M,E)x(E,E) matmul.
        attn_out = (jnp.dot(ctx, wo_ref[l], preferred_element_type=f32)
                    + bo_ref[l])

        # Residual + LayerNorm 1
        h1 = xf + attn_out
        mu1 = jnp.mean(h1, axis=-1, keepdims=True)
        var1 = jnp.mean(jnp.square(h1 - mu1), axis=-1, keepdims=True)
        n1 = (h1 - mu1) * lax.rsqrt(var1 + eps) * g1_ref[l] + be1_ref[l]

        # FFN (ReLU) + residual + LayerNorm 2
        f = jnp.maximum(jnp.dot(n1, w1_ref[l], preferred_element_type=f32)
                        + b1_ref[l], 0.0)
        f2 = jnp.dot(f, w2_ref[l], preferred_element_type=f32) + b2_ref[l]
        h2 = n1 + f2
        mu2 = jnp.mean(h2, axis=-1, keepdims=True)
        var2 = jnp.mean(jnp.square(h2 - mu2), axis=-1, keepdims=True)
        xf = (h2 - mu2) * lax.rsqrt(var2 + eps) * g2_ref[l] + be2_ref[l]

    # ---- rtlinear head on the CLS token (sequence position 0).
    cls_rows = xf.reshape(B, S, E)[:, 0, :]                    # (B, E)
    pred = (jnp.sum(cls_rows * rtw_ref[...], axis=-1, keepdims=True)
            + rtb_ref[...])                                    # (B, 1)
    out_ref[...] = pred.reshape(B, 1, 1).astype(out_ref.dtype)


# ----------------------------------------------------------------------------
# One-time weight re-layout (hoisted out of the per-forward path).
# ----------------------------------------------------------------------------
def prepare_params(params):
    f32 = jnp.float32
    layers = params["layers"]

    def stack(fn):
        return jnp.stack([fn(p).astype(f32) for p in layers])

    return dict(
        a_table=params["a_embedding"].astype(f32),
        phos_table=params["phos_embedding"].astype(f32),
        cls_row=params["cls_embedding"][1:2].astype(f32),          # cls_embedding(1)
        pos_table=params["pos_embedding"].astype(f32),
        wqkv=stack(lambda p: jnp.transpose(p["in_proj_weight"])),  # (NL, E, 3E)
        bqkv=stack(lambda p: p["in_proj_bias"][None, :]),          # (NL, 1, 3E)
        wo=stack(lambda p: jnp.transpose(p["out_proj_weight"])),   # (NL, E, E)
        bo=stack(lambda p: p["out_proj_bias"][None, :]),
        w1=stack(lambda p: jnp.transpose(p["linear1_weight"])),    # (NL, E, F)
        b1=stack(lambda p: p["linear1_bias"][None, :]),
        w2=stack(lambda p: jnp.transpose(p["linear2_weight"])),    # (NL, F, E)
        b2=stack(lambda p: p["linear2_bias"][None, :]),
        g1=stack(lambda p: p["norm1_weight"][None, :]),
        be1=stack(lambda p: p["norm1_bias"][None, :]),
        g2=stack(lambda p: p["norm2_weight"][None, :]),
        be2=stack(lambda p: p["norm2_bias"][None, :]),
        rt_w=params["rtlinear_weight"].astype(f32),                # (1, E)
        rt_b=params["rtlinear_bias"].reshape(1, 1).astype(f32),    # (1, 1)
    )


# ----------------------------------------------------------------------------
# Full forward (eval mode; `charge` is unused, same as the PyTorch forward).
# ----------------------------------------------------------------------------
def model_forward_pallas(prepped, peptide_tokens, peptide_length, charge,
                         decoration, *, nhead):
    del charge                            # unused by the PyTorch forward too
    N, L = peptide_tokens.shape
    assert N == peptide_length.shape[0]
    assert peptide_tokens.shape == decoration.shape
    S = L + 1
    E = prepped["a_table"].shape[1]
    NL, _, F = prepped["w1"].shape

    S_pad = _round_up(S, 8)               # sublane-aligned sequence length
    B_blk = _pick_batch_block(N, S_pad)
    Np = _round_up(N, B_blk)

    # Token / decoration ids; -1 sentinel in the CLS slot and every padded
    # position (-1 matches no table row -> contributes zero in the gather).
    tok = jnp.concatenate(
        [jnp.full((N, 1), -1, jnp.int32), peptide_tokens.astype(jnp.int32)], axis=1)
    dec = jnp.concatenate(
        [jnp.full((N, 1), -1, jnp.int32), decoration.astype(jnp.int32)], axis=1)
    tok = jnp.pad(tok, ((0, Np - N), (0, S_pad - S)), constant_values=-1)[..., None]
    dec = jnp.pad(dec, ((0, Np - N), (0, S_pad - S)), constant_values=-1)[..., None]

    kv = (peptide_length.astype(jnp.int32) + 1).reshape(N, 1, 1)
    kv = jnp.pad(kv, ((0, Np - N), (0, 0), (0, 0)), constant_values=1)

    pos = jnp.pad(prepped["pos_table"][:S], ((0, S_pad - S), (0, 0)))

    def batch3(shape):
        return pl.BlockSpec(shape, lambda b: (b, 0, 0))

    def full2(shape):
        return pl.BlockSpec(shape, lambda b: (0, 0))

    def full3(shape):
        return pl.BlockSpec(shape, lambda b: (0, 0, 0))

    out = pl.pallas_call(
        functools.partial(_fused_forward_kernel, nhead=nhead, nlayers=NL),
        out_shape=jax.ShapeDtypeStruct((Np, 1, 1), jnp.float32),
        grid=(Np // B_blk,),
        in_specs=[
            batch3((B_blk, S_pad, 1)),             # token ids
            batch3((B_blk, S_pad, 1)),             # decoration ids
            batch3((B_blk, 1, 1)),                 # valid lengths (kv)
            full2(prepped["a_table"].shape),       # amino-acid table
            full2(prepped["phos_table"].shape),    # phos table
            full2((1, E)),                         # cls row
            full2((S_pad, E)),                     # positional rows (pre-sliced)
            full3((NL, E, 3 * E)), full3((NL, 1, 3 * E)),
            full3((NL, E, E)), full3((NL, 1, E)),
            full3((NL, E, F)), full3((NL, 1, F)),
            full3((NL, F, E)), full3((NL, 1, E)),
            full3((NL, 1, E)), full3((NL, 1, E)),
            full3((NL, 1, E)), full3((NL, 1, E)),
            full2((1, E)), full2((1, 1)),          # rtlinear
        ],
        out_specs=batch3((B_blk, 1, 1)),
        compiler_params=pltpu.CompilerParams(
            dimension_semantics=("parallel",)),
    )(tok, dec, kv, prepped["a_table"], prepped["phos_table"],
      prepped["cls_row"], pos,
      prepped["wqkv"], prepped["bqkv"], prepped["wo"], prepped["bo"],
      prepped["w1"], prepped["b1"], prepped["w2"], prepped["b2"],
      prepped["g1"], prepped["be1"], prepped["g2"], prepped["be2"],
      prepped["rt_w"], prepped["rt_b"])

    return {"pred": out[:N, 0, 0]}         # output[0] ... .squeeze()


# ----------------------------------------------------------------------------
# Pure-JAX reference (mirrors the PyTorch module in eval mode).
# ----------------------------------------------------------------------------
def reference_embedding(params, peptide_tokens, decoration):
    A, P = params["a_embedding"], params["phos_embedding"]
    C, POS = params["cls_embedding"], params["pos_embedding"]
    N, L = peptide_tokens.shape
    S, E = L + 1, A.shape[1]
    cls = jnp.broadcast_to(C[1], (N, 1, E))
    return jnp.concatenate([cls, A[peptide_tokens] + P[decoration]], axis=1) + POS[:S][None]


def _ref_layer_norm(x, w, b, eps=1e-5):
    mu = jnp.mean(x, axis=-1, keepdims=True)
    var = jnp.mean(jnp.square(x - mu), axis=-1, keepdims=True)
    return (x - mu) * lax.rsqrt(var + eps) * w + b


def _ref_encoder_layer(x, pad_mask, p, nhead):
    N, S, E = x.shape
    hd = E // nhead
    qkv = x @ p["in_proj_weight"].T + p["in_proj_bias"]
    q, k, v = jnp.split(qkv, 3, axis=-1)

    def split_heads(t):
        return t.reshape(N, S, nhead, hd).transpose(0, 2, 1, 3)

    qh, kh, vh = split_heads(q), split_heads(k), split_heads(v)
    scores = jnp.einsum("nhqd,nhkd->nhqk", qh, kh) / math.sqrt(hd)
    scores = scores + jnp.where(pad_mask, -1e30, 0.0)[:, None, None, :]
    attn = jax.nn.softmax(scores, axis=-1)
    o = jnp.einsum("nhqk,nhkd->nhqd", attn, vh).transpose(0, 2, 1, 3).reshape(N, S, E)
    o = o @ p["out_proj_weight"].T + p["out_proj_bias"]
    h1 = _ref_layer_norm(x + o, p["norm1_weight"], p["norm1_bias"])
    f = jax.nn.relu(h1 @ p["linear1_weight"].T + p["linear1_bias"])
    f = f @ p["linear2_weight"].T + p["linear2_bias"]
    return _ref_layer_norm(h1 + f, p["norm2_weight"], p["norm2_bias"])


def reference_forward(params, peptide_tokens, peptide_length, decoration, nhead):
    x = reference_embedding(params, peptide_tokens, decoration)
    N, S, _ = x.shape
    pad = jnp.arange(S)[None, :] >= (peptide_length + 1)[:, None]
    for lp in params["layers"]:
        x = _ref_encoder_layer(x, pad, lp, nhead)
    pred = x[:, 0, :] @ params["rtlinear_weight"].T + params["rtlinear_bias"]
    return pred[:, 0]


# ----------------------------------------------------------------------------
if __name__ == "__main__":
    MAXLEN, ACID, E, NHEAD, NLAYERS, FF = 64, 30, 32, 4, 2, 2048
    N, L = 2, 8

    keys = iter(jax.random.split(jax.random.PRNGKey(0), 64))

    def nrm(shape, scale=1.0):
        return scale * jax.random.normal(next(keys), shape, jnp.float32)

    a_emb = nrm((ACID, E)).at[0].set(0.0)        # padding_idx=0 row is zero
    phos_emb = nrm((5, E))
    cls_emb = nrm((2, E))
    pos_emb = nrm((MAXLEN, E))

    layers = []
    for _ in range(NLAYERS):
        layers.append(dict(
            in_proj_weight=nrm((3 * E, E), 1.0 / math.sqrt(E)),
            in_proj_bias=nrm((3 * E,), 0.02),
            out_proj_weight=nrm((E, E), 1.0 / math.sqrt(E)),
            out_proj_bias=nrm((E,), 0.02),
            linear1_weight=nrm((FF, E), 1.0 / math.sqrt(E)),
            linear1_bias=nrm((FF,), 0.02),
            linear2_weight=nrm((E, FF), 1.0 / math.sqrt(FF)),
            linear2_bias=nrm((E,), 0.02),
            norm1_weight=jnp.ones((E,), jnp.float32),
            norm1_bias=jnp.zeros((E,), jnp.float32),
            norm2_weight=jnp.ones((E,), jnp.float32),
            norm2_bias=jnp.zeros((E,), jnp.float32),
        ))

    params = dict(a_embedding=a_emb, phos_embedding=phos_emb,
                  cls_embedding=cls_emb, pos_embedding=pos_emb,
                  layers=layers,
                  rtlinear_weight=nrm((1, E), 1.0 / math.sqrt(E)),
                  rtlinear_bias=nrm((1,), 0.02))

    peptide_length = jnp.array([L, 5], dtype=jnp.int32)   # max == L (as PyTorch requires)
    valid = jnp.arange(L)[None, :] < peptide_length[:, None]
    peptide_tokens = jnp.where(
        valid, jax.random.randint(next(keys), (N, L), 1, ACID, dtype=jnp.int32), 0)
    decoration = jnp.where(
        valid, jax.random.randint(next(keys), (N, L), 0, 5, dtype=jnp.int32), 0)
    charge = jnp.array([2, 3], dtype=jnp.int32)           # unused by the forward

    prepped = prepare_params(params)                      # one-time weight re-layout
    forward = jax.jit(functools.partial(model_forward_pallas, nhead=NHEAD))
    out = forward(prepped, peptide_tokens, peptide_length, charge, decoration)
    pred = jax.block_until_ready(out["pred"])

    ref = reference_forward(params, peptide_tokens, peptide_length, decoration, NHEAD)
    assert pred.shape == (N,)
    # Kernel and reference both use native (single-pass) MXU matmul precision;
    # embedding gathers are exact (HIGHEST), so differences stay small.
    assert jnp.allclose(pred, ref, atol=1e-2, rtol=1e-2), (pred, ref)

    print("KERNEL_OK")
</pallas_src>

<mosaic_0001>
module attributes {stable_mosaic.version = 11 : i64} {
  func.func @_fused_forward_kernel(%arg0: i32, %arg1: memref<1x16x1xi32, #tpu.memory_space<vmem>>, %arg2: memref<1x16x1xi32, #tpu.memory_space<vmem>>, %arg3: memref<1x1x1xi32, #tpu.memory_space<vmem>>, %arg4: memref<30x32xf32, #tpu.memory_space<vmem>>, %arg5: memref<5x32xf32, #tpu.memory_space<vmem>>, %arg6: memref<1x32xf32, #tpu.memory_space<vmem>>, %arg7: memref<16x32xf32, #tpu.memory_space<vmem>>, %arg8: memref<2x32x96xf32, #tpu.memory_space<vmem>>, %arg9: memref<2x1x96xf32, #tpu.memory_space<vmem>>, %arg10: memref<2x32x32xf32, #tpu.memory_space<vmem>>, %arg11: memref<2x1x32xf32, #tpu.memory_space<vmem>>, %arg12: memref<2x32x2048xf32, #tpu.memory_space<vmem>>, %arg13: memref<2x1x2048xf32, #tpu.memory_space<vmem>>, %arg14: memref<2x2048x32xf32, #tpu.memory_space<vmem>>, %arg15: memref<2x1x32xf32, #tpu.memory_space<vmem>>, %arg16: memref<2x1x32xf32, #tpu.memory_space<vmem>>, %arg17: memref<2x1x32xf32, #tpu.memory_space<vmem>>, %arg18: memref<2x1x32xf32, #tpu.memory_space<vmem>>, %arg19: memref<2x1x32xf32, #tpu.memory_space<vmem>>, %arg20: memref<1x32xf32, #tpu.memory_space<vmem>>, %arg21: memref<1x1xf32, #tpu.memory_space<vmem>>, %arg22: memref<1x1x1xf32, #tpu.memory_space<vmem>>) attributes {dimension_semantics = [#tpu.dimension_semantics<parallel>], iteration_bounds = array<i64: 2>, scalar_prefetch = 0 : i64, scratch_operands = 0 : i64, tpu.core_type = #tpu.core_type<tc>, window_params = [{transform_indices = @transform_0, window_bounds = array<i64: 1, 16, 1>}, {transform_indices = @transform_1, window_bounds = array<i64: 1, 16, 1>}, {transform_indices = @transform_2, window_bounds = array<i64: 1, 1, 1>}, {pipeline_mode = #tpu.pipeline_mode<synchronous>, transform_indices = @transform_3, window_bounds = array<i64: 30, 32>}, {pipeline_mode = #tpu.pipeline_mode<synchronous>, transform_indices = @transform_4, window_bounds = array<i64: 5, 32>}, {pipeline_mode = #tpu.pipeline_mode<synchronous>, transform_indices = @transform_5, window_bounds = array<i64: 1, 32>}, {pipeline_mode = #tpu.pipeline_mode<synchronous>, transform_indices = @transform_6, window_bounds = array<i64: 16, 32>}, {pipeline_mode = #tpu.pipeline_mode<synchronous>, transform_indices = @transform_7, window_bounds = array<i64: 2, 32, 96>}, {pipeline_mode = #tpu.pipeline_mode<synchronous>, transform_indices = @transform_8, window_bounds = array<i64: 2, 1, 96>}, {pipeline_mode = #tpu.pipeline_mode<synchronous>, transform_indices = @transform_9, window_bounds = array<i64: 2, 32, 32>}, {pipeline_mode = #tpu.pipeline_mode<synchronous>, transform_indices = @transform_10, window_bounds = array<i64: 2, 1, 32>}, {pipeline_mode = #tpu.pipeline_mode<synchronous>, transform_indices = @transform_11, window_bounds = array<i64: 2, 32, 2048>}, {pipeline_mode = #tpu.pipeline_mode<synchronous>, transform_indices = @transform_12, window_bounds = array<i64: 2, 1, 2048>}, {pipeline_mode = #tpu.pipeline_mode<synchronous>, transform_indices = @transform_13, window_bounds = array<i64: 2, 2048, 32>}, {pipeline_mode = #tpu.pipeline_mode<synchronous>, transform_indices = @transform_14, window_bounds = array<i64: 2, 1, 32>}, {pipeline_mode = #tpu.pipeline_mode<synchronous>, transform_indices = @transform_15, window_bounds = array<i64: 2, 1, 32>}, {pipeline_mode = #tpu.pipeline_mode<synchronous>, transform_indices = @transform_16, window_bounds = array<i64: 2, 1, 32>}, {pipeline_mode = #tpu.pipeline_mode<synchronous>, transform_indices = @transform_17, window_bounds = array<i64: 2, 1, 32>}, {pipeline_mode = #tpu.pipeline_mode<synchronous>, transform_indices = @transform_18, window_bounds = array<i64: 2, 1, 32>}, {pipeline_mode = #tpu.pipeline_mode<synchronous>, transform_indices = @transform_19, window_bounds = array<i64: 1, 32>}, {pipeline_mode = #tpu.pipeline_mode<synchronous>, transform_indices = @transform_20, window_bounds = array<i64: 1, 1>}, {transform_indices = @transform_21, window_bounds = array<i64: 1, 1, 1>}]} {
    %c0 = arith.constant 0 : index
    %c0_0 = arith.constant 0 : index
    %c0_1 = arith.constant 0 : index
    %0 = vector.load %arg1[%c0, %c0_0, %c0_1] : memref<1x16x1xi32, #tpu.memory_space<vmem>>, vector<1x16x1xi32>
    %1 = vector.shape_cast %0 : vector<1x16x1xi32> to vector<16x1xi32>
    %c0_2 = arith.constant 0 : index
    %c0_3 = arith.constant 0 : index
    %c0_4 = arith.constant 0 : index
    %2 = vector.load %arg2[%c0_2, %c0_3, %c0_4] : memref<1x16x1xi32, #tpu.memory_space<vmem>>, vector<1x16x1xi32>
    %3 = vector.shape_cast %2 : vector<1x16x1xi32> to vector<16x1xi32>
    %4 = tpu.iota {dimensions = array<i32: 1>} : vector<16x30xi32>
    %5 = vector.broadcast %1 : vector<16x1xi32> to vector<16x30xi32>
    %6 = arith.cmpi eq, %5, %4 : vector<16x30xi32>
    %7 = arith.extui %6 : vector<16x30xi1> to vector<16x30xi32>
    %8 = arith.sitofp %7 : vector<16x30xi32> to vector<16x30xf32>
    %9 = tpu.iota {dimensions = array<i32: 1>} : vector<16x5xi32>
    %10 = vector.broadcast %3 : vector<16x1xi32> to vector<16x5xi32>
    %11 = arith.cmpi eq, %10, %9 : vector<16x5xi32>
    %12 = arith.extui %11 : vector<16x5xi1> to vector<16x5xi32>
    %13 = arith.sitofp %12 : vector<16x5xi32> to vector<16x5xf32>
    %c0_5 = arith.constant 0 : index
    %c0_6 = arith.constant 0 : index
    %14 = vector.load %arg4[%c0_5, %c0_6] : memref<30x32xf32, #tpu.memory_space<vmem>>, vector<30x32xf32>
    %cst = arith.constant dense<0.000000e+00> : vector<16x32xf32>
    %15 = tpu.matmul %8, %14, %cst {dimension_numbers = #tpu.dot_dimension_numbers<[1], [0], [0], [1], [0, 0, 1, 1], [], []>, precision = #tpu.contract_precision<fp32>} : vector<16x30xf32>, vector<30x32xf32>, vector<16x32xf32> -> vector<16x32xf32>
    %c0_7 = arith.constant 0 : index
    %c0_8 = arith.constant 0 : index
    %16 = vector.load %arg5[%c0_7, %c0_8] : memref<5x32xf32, #tpu.memory_space<vmem>>, vector<5x32xf32>
    %cst_9 = arith.constant dense<0.000000e+00> : vector<16x32xf32>
    %17 = tpu.matmul %13, %16, %cst_9 {dimension_numbers = #tpu.dot_dimension_numbers<[1], [0], [0], [1], [0, 0, 1, 1], [], []>, precision = #tpu.contract_precision<fp32>} : vector<16x5xf32>, vector<5x32xf32>, vector<16x32xf32> -> vector<16x32xf32>
    %18 = arith.addf %15, %17 : vector<16x32xf32>
    %19 = tpu.iota {dimensions = array<i32: 1>} : vector<1x16x1xi32>
    %c0_i32 = arith.constant 0 : i32
    %20 = vector.broadcast %c0_i32 : i32 to vector<1x16x1xi32>
    %21 = arith.cmpi eq, %19, %20 : vector<1x16x1xi32>
    %22 = arith.extui %21 : vector<1x16x1xi1> to vector<1x16x1xi32>
    %23 = arith.sitofp %22 : vector<1x16x1xi32> to vector<1x16x1xf32>
    %24 = vector.shape_cast %18 : vector<16x32xf32> to vector<1x16x32xf32>
    %c0_10 = arith.constant 0 : index
    %c0_11 = arith.constant 0 : index
    %25 = vector.load %arg6[%c0_10, %c0_11] : memref<1x32xf32, #tpu.memory_space<vmem>>, vector<1x32xf32>
    %26 = vector.shape_cast %25 : vector<1x32xf32> to vector<1x1x32xf32>
    %27 = vector.broadcast %23 : vector<1x16x1xf32> to vector<1x16x32xf32>
    %28 = vector.broadcast %26 : vector<1x1x32xf32> to vector<1x16x32xf32>
    %29 = arith.mulf %27, %28 : vector<1x16x32xf32>
    %30 = arith.addf %24, %29 : vector<1x16x32xf32>
    %c0_12 = arith.constant 0 : index
    %c0_13 = arith.constant 0 : index
    %31 = vector.load %arg7[%c0_12, %c0_13] : memref<16x32xf32, #tpu.memory_space<vmem>>, vector<16x32xf32>
    %32 = vector.shape_cast %31 : vector<16x32xf32> to vector<1x16x32xf32>
    %33 = arith.addf %30, %32 : vector<1x16x32xf32>
    %34 = vector.shape_cast %33 : vector<1x16x32xf32> to vector<16x32xf32>
    %c0_14 = arith.constant 0 : index
    %c0_15 = arith.constant 0 : index
    %c0_16 = arith.constant 0 : index
    %35 = vector.load %arg3[%c0_14, %c0_15, %c0_16] : memref<1x1x1xi32, #tpu.memory_space<vmem>>, vector<1x1x1xi32>
    %36 = tpu.iota {dimensions = array<i32: 2>} : vector<1x1x16xi32>
    %37 = vector.broadcast %35 : vector<1x1x1xi32> to vector<1x1x16xi32>
    %38 = arith.cmpi sge, %36, %37 : vector<1x1x16xi32>
    %cst_17 = arith.constant -1.000000e+30 : f32
    %cst_18 = arith.constant 0.000000e+00 : f32
    %39 = vector.broadcast %cst_17 : f32 to vector<1x1x16xf32>
    %40 = vector.broadcast %cst_18 : f32 to vector<1x1x16xf32>
    %41 = arith.select %38, %39, %40 : vector<1x1x16xi1>, vector<1x1x16xf32>
    %c0_19 = arith.constant 0 : index
    %c0_20 = arith.constant 0 : index
    %c0_21 = arith.constant 0 : index
    %42 = vector.load %arg8[%c0_19, %c0_20, %c0_21] : memref<2x32x96xf32, #tpu.memory_space<vmem>>, vector<1x32x96xf32>
    %43 = vector.shape_cast %42 : vector<1x32x96xf32> to vector<32x96xf32>
    %cst_22 = arith.constant dense<0.000000e+00> : vector<16x96xf32>
    %44 = tpu.matmul %34, %43, %cst_22 {dimension_numbers = #tpu.dot_dimension_numbers<[1], [0], [0], [1], [0, 0, 1, 1], [], []>} : vector<16x32xf32>, vector<32x96xf32>, vector<16x96xf32> -> vector<16x96xf32>
    %c0_23 = arith.constant 0 : index
    %c0_24 = arith.constant 0 : index
    %c0_25 = arith.constant 0 : index
    %45 = vector.load %arg9[%c0_23, %c0_24, %c0_25] : memref<2x1x96xf32, #tpu.memory_space<vmem>>, vector<1x1x96xf32>
    %46 = vector.shape_cast %45 : vector<1x1x96xf32> to vector<1x96xf32>
    %47 = vector.broadcast %46 : vector<1x96xf32> to vector<16x96xf32>
    %48 = arith.addf %44, %47 : vector<16x96xf32>
    %49 = vector.shape_cast %48 : vector<16x96xf32> to vector<1x16x96xf32>
    %50 = vector.extract_strided_slice %49 {offsets = [0, 0, 0], sizes = [1, 16, 8], strides = [1, 1, 1]} : vector<1x16x96xf32> to vector<1x16x8xf32>
    %51 = vector.extract_strided_slice %49 {offsets = [0, 0, 32], sizes = [1, 16, 8], strides = [1, 1, 1]} : vector<1x16x96xf32> to vector<1x16x8xf32>
    %52 = vector.extract_strided_slice %49 {offsets = [0, 0, 64], sizes = [1, 16, 8], strides = [1, 1, 1]} : vector<1x16x96xf32> to vector<1x16x8xf32>
    %cst_26 = arith.constant 0.353553385 : f32
    %53 = vector.broadcast %cst_26 : f32 to vector<1x16x8xf32>
    %54 = arith.mulf %50, %53 : vector<1x16x8xf32>
    "tpu.trace_start"() <{level = 10 : i32, message = "bqd,bkd->bqk"}> : () -> ()
    %cst_27 = arith.constant dense<0.000000e+00> : vector<1x16x16xf32>
    %55 = tpu.matmul %54, %51, %cst_27 {dimension_numbers = #tpu.dot_dimension_numbers<[2], [2], [1], [1], [0, 0, 0, 1, 1, 1], [0], [0]>} : vector<1x16x8xf32>, vector<1x16x8xf32>, vector<1x16x16xf32> -> vector<1x16x16xf32>
    "tpu.trace_stop"() : () -> ()
    %56 = vector.broadcast %41 : vector<1x1x16xf32> to vector<1x16x16xf32>
    %57 = arith.addf %55, %56 : vector<1x16x16xf32>
    %cst_28 = arith.constant dense<0xFF800000> : vector<1x16xf32>
    %58 = vector.multi_reduction <maximumf>, %57, %cst_28 [2] : vector<1x16x16xf32> to vector<1x16xf32>
    %59 = vector.shape_cast %58 : vector<1x16xf32> to vector<1x16x1xf32>
    %60 = vector.broadcast %59 : vector<1x16x1xf32> to vector<1x16x16xf32>
    %61 = arith.subf %57, %60 : vector<1x16x16xf32>
    %62 = math.exp %61 : vector<1x16x16xf32>
    %cst_29 = arith.constant dense<0.000000e+00> : vector<1x16xf32>
    %63 = vector.multi_reduction <add>, %62, %cst_29 [2] : vector<1x16x16xf32> to vector<1x16xf32>
    %64 = vector.shape_cast %63 : vector<1x16xf32> to vector<1x16x1xf32>
    %65 = tpu.reciprocal %64 {approx = true} : vector<1x16x1xf32> -> vector<1x16x1xf32>
    %66 = vector.broadcast %65 : vector<1x16x1xf32> to vector<1x16x16xf32>
    %67 = arith.mulf %62, %66 : vector<1x16x16xf32>
    "tpu.trace_start"() <{level = 10 : i32, message = "bqk,bkd->bqd"}> : () -> ()
    %cst_30 = arith.constant dense<0.000000e+00> : vector<1x16x8xf32>
    %68 = tpu.matmul %67, %52, %cst_30 {dimension_numbers = #tpu.dot_dimension_numbers<[2], [1], [1], [2], [0, 0, 0, 1, 1, 2], [0], [0]>} : vector<1x16x16xf32>, vector<1x16x8xf32>, vector<1x16x8xf32> -> vector<1x16x8xf32>
    "tpu.trace_stop"() : () -> ()
    %69 = vector.extract_strided_slice %49 {offsets = [0, 0, 8], sizes = [1, 16, 8], strides = [1, 1, 1]} : vector<1x16x96xf32> to vector<1x16x8xf32>
    %70 = vector.extract_strided_slice %49 {offsets = [0, 0, 40], sizes = [1, 16, 8], strides = [1, 1, 1]} : vector<1x16x96xf32> to vector<1x16x8xf32>
    %71 = vector.extract_strided_slice %49 {offsets = [0, 0, 72], sizes = [1, 16, 8], strides = [1, 1, 1]} : vector<1x16x96xf32> to vector<1x16x8xf32>
    %cst_31 = arith.constant 0.353553385 : f32
    %72 = vector.broadcast %cst_31 : f32 to vector<1x16x8xf32>
    %73 = arith.mulf %69, %72 : vector<1x16x8xf32>
    "tpu.trace_start"() <{level = 10 : i32, message = "bqd,bkd->bqk"}> : () -> ()
    %cst_32 = arith.constant dense<0.000000e+00> : vector<1x16x16xf32>
    %74 = tpu.matmul %73, %70, %cst_32 {dimension_numbers = #tpu.dot_dimension_numbers<[2], [2], [1], [1], [0, 0, 0, 1, 1, 1], [0], [0]>} : vector<1x16x8xf32>, vector<1x16x8xf32>, vector<1x16x16xf32> -> vector<1x16x16xf32>
    "tpu.trace_stop"() : () -> ()
    %75 = vector.broadcast %41 : vector<1x1x16xf32> to vector<1x16x16xf32>
    %76 = arith.addf %74, %75 : vector<1x16x16xf32>
    %cst_33 = arith.constant dense<0xFF800000> : vector<1x16xf32>
    %77 = vector.multi_reduction <maximumf>, %76, %cst_33 [2] : vector<1x16x16xf32> to vector<1x16xf32>
    %78 = vector.shape_cast %77 : vector<1x16xf32> to vector<1x16x1xf32>
    %79 = vector.broadcast %78 : vector<1x16x1xf32> to vector<1x16x16xf32>
    %80 = arith.subf %76, %79 : vector<1x16x16xf32>
    %81 = math.exp %80 : vector<1x16x16xf32>
    %cst_34 = arith.constant dense<0.000000e+00> : vector<1x16xf32>
    %82 = vector.multi_reduction <add>, %81, %cst_34 [2] : vector<1x16x16xf32> to vector<1x16xf32>
    %83 = vector.shape_cast %82 : vector<1x16xf32> to vector<1x16x1xf32>
    %84 = tpu.reciprocal %83 {approx = true} : vector<1x16x1xf32> -> vector<1x16x1xf32>
    %85 = vector.broadcast %84 : vector<1x16x1xf32> to vector<1x16x16xf32>
    %86 = arith.mulf %81, %85 : vector<1x16x16xf32>
    "tpu.trace_start"() <{level = 10 : i32, message = "bqk,bkd->bqd"}> : () -> ()
    %cst_35 = arith.constant dense<0.000000e+00> : vector<1x16x8xf32>
    %87 = tpu.matmul %86, %71, %cst_35 {dimension_numbers = #tpu.dot_dimension_numbers<[2], [1], [1], [2], [0, 0, 0, 1, 1, 2], [0], [0]>} : vector<1x16x16xf32>, vector<1x16x8xf32>, vector<1x16x8xf32> -> vector<1x16x8xf32>
    "tpu.trace_stop"() : () -> ()
    %88 = vector.extract_strided_slice %49 {offsets = [0, 0, 16], sizes = [1, 16, 8], strides = [1, 1, 1]} : vector<1x16x96xf32> to vector<1x16x8xf32>
    %89 = vector.extract_strided_slice %49 {offsets = [0, 0, 48], sizes = [1, 16, 8], strides = [1, 1, 1]} : vector<1x16x96xf32> to vector<1x16x8xf32>
    %90 = vector.extract_strided_slice %49 {offsets = [0, 0, 80], sizes = [1, 16, 8], strides = [1, 1, 1]} : vector<1x16x96xf32> to vector<1x16x8xf32>
    %cst_36 = arith.constant 0.353553385 : f32
    %91 = vector.broadcast %cst_36 : f32 to vector<1x16x8xf32>
    %92 = arith.mulf %88, %91 : vector<1x16x8xf32>
    "tpu.trace_start"() <{level = 10 : i32, message = "bqd,bkd->bqk"}> : () -> ()
    %cst_37 = arith.constant dense<0.000000e+00> : vector<1x16x16xf32>
    %93 = tpu.matmul %92, %89, %cst_37 {dimension_numbers = #tpu.dot_dimension_numbers<[2], [2], [1], [1], [0, 0, 0, 1, 1, 1], [0], [0]>} : vector<1x16x8xf32>, vector<1x16x8xf32>, vector<1x16x16xf32> -> vector<1x16x16xf32>
    "tpu.trace_stop"() : () -> ()
    %94 = vector.broadcast %41 : vector<1x1x16xf32> to vector<1x16x16xf32>
    %95 = arith.addf %93, %94 : vector<1x16x16xf32>
    %cst_38 = arith.constant dense<0xFF800000> : vector<1x16xf32>
    %96 = vector.multi_reduction <maximumf>, %95, %cst_38 [2] : vector<1x16x16xf32> to vector<1x16xf32>
    %97 = vector.shape_cast %96 : vector<1x16xf32> to vector<1x16x1xf32>
    %98 = vector.broadcast %97 : vector<1x16x1xf32> to vector<1x16x16xf32>
    %99 = arith.subf %95, %98 : vector<1x16x16xf32>
    %100 = math.exp %99 : vector<1x16x16xf32>
    %cst_39 = arith.constant dense<0.000000e+00> : vector<1x16xf32>
    %101 = vector.multi_reduction <add>, %100, %cst_39 [2] : vector<1x16x16xf32> to vector<1x16xf32>
    %102 = vector.shape_cast %101 : vector<1x16xf32> to vector<1x16x1xf32>
    %103 = tpu.reciprocal %102 {approx = true} : vector<1x16x1xf32> -> vector<1x16x1xf32>
    %104 = vector.broadcast %103 : vector<1x16x1xf32> to vector<1x16x16xf32>
    %105 = arith.mulf %100, %104 : vector<1x16x16xf32>
    "tpu.trace_start"() <{level = 10 : i32, message = "bqk,bkd->bqd"}> : () -> ()
    %cst_40 = arith.constant dense<0.000000e+00> : vector<1x16x8xf32>
    %106 = tpu.matmul %105, %90, %cst_40 {dimension_numbers = #tpu.dot_dimension_numbers<[2], [1], [1], [2], [0, 0, 0, 1, 1, 2], [0], [0]>} : vector<1x16x16xf32>, vector<1x16x8xf32>, vector<1x16x8xf32> -> vector<1x16x8xf32>
    "tpu.trace_stop"() : () -> ()
    %107 = vector.extract_strided_slice %49 {offsets = [0, 0, 24], sizes = [1, 16, 8], strides = [1, 1, 1]} : vector<1x16x96xf32> to vector<1x16x8xf32>
    %108 = vector.extract_strided_slice %49 {offsets = [0, 0, 56], sizes = [1, 16, 8], strides = [1, 1, 1]} : vector<1x16x96xf32> to vector<1x16x8xf32>
    %109 = vector.extract_strided_slice %49 {offsets = [0, 0, 88], sizes = [1, 16, 8], strides = [1, 1, 1]} : vector<1x16x96xf32> to vector<1x16x8xf32>
    %cst_41 = arith.constant 0.353553385 : f32
    %110 = vector.broadcast %cst_41 : f32 to vector<1x16x8xf32>
    %111 = arith.mulf %107, %110 : vector<1x16x8xf32>
    "tpu.trace_start"() <{level = 10 : i32, message = "bqd,bkd->bqk"}> : () -> ()
    %cst_42 = arith.constant dense<0.000000e+00> : vector<1x16x16xf32>
    %112 = tpu.matmul %111, %108, %cst_42 {dimension_numbers = #tpu.dot_dimension_numbers<[2], [2], [1], [1], [0, 0, 0, 1, 1, 1], [0], [0]>} : vector<1x16x8xf32>, vector<1x16x8xf32>, vector<1x16x16xf32> -> vector<1x16x16xf32>
    "tpu.trace_stop"() : () -> ()
    %113 = vector.broadcast %41 : vector<1x1x16xf32> to vector<1x16x16xf32>
    %114 = arith.addf %112, %113 : vector<1x16x16xf32>
    %cst_43 = arith.constant dense<0xFF800000> : vector<1x16xf32>
    %115 = vector.multi_reduction <maximumf>, %114, %cst_43 [2] : vector<1x16x16xf32> to vector<1x16xf32>
    %116 = vector.shape_cast %115 : vector<1x16xf32> to vector<1x16x1xf32>
    %117 = vector.broadcast %116 : vector<1x16x1xf32> to vector<1x16x16xf32>
    %118 = arith.subf %114, %117 : vector<1x16x16xf32>
    %119 = math.exp %118 : vector<1x16x16xf32>
    %cst_44 = arith.constant dense<0.000000e+00> : vector<1x16xf32>
    %120 = vector.multi_reduction <add>, %119, %cst_44 [2] : vector<1x16x16xf32> to vector<1x16xf32>
    %121 = vector.shape_cast %120 : vector<1x16xf32> to vector<1x16x1xf32>
    %122 = tpu.reciprocal %121 {approx = true} : vector<1x16x1xf32> -> vector<1x16x1xf32>
    %123 = vector.broadcast %122 : vector<1x16x1xf32> to vector<1x16x16xf32>
    %124 = arith.mulf %119, %123 : vector<1x16x16xf32>
    "tpu.trace_start"() <{level = 10 : i32, message = "bqk,bkd->bqd"}> : () -> ()
    %cst_45 = arith.constant dense<0.000000e+00> : vector<1x16x8xf32>
    %125 = tpu.matmul %124, %109, %cst_45 {dimension_numbers = #tpu.dot_dimension_numbers<[2], [1], [1], [2], [0, 0, 0, 1, 1, 2], [0], [0]>} : vector<1x16x16xf32>, vector<1x16x8xf32>, vector<1x16x8xf32> -> vector<1x16x8xf32>
    "tpu.trace_stop"() : () -> ()
    %126 = tpu.concatenate %68, %87, %106, %125 in 2 : vector<1x16x8xf32>, vector<1x16x8xf32>, vector<1x16x8xf32>, vector<1x16x8xf32> -> vector<1x16x32xf32>
    %127 = vector.shape_cast %126 : vector<1x16x32xf32> to vector<16x32xf32>
    %c0_46 = arith.constant 0 : index
    %c0_47 = arith.constant 0 : index
    %c0_48 = arith.constant 0 : index
    %128 = vector.load %arg10[%c0_46, %c0_47, %c0_48] : memref<2x32x32xf32, #tpu.memory_space<vmem>>, vector<1x32x32xf32>
    %129 = vector.shape_cast %128 : vector<1x32x32xf32> to vector<32x32xf32>
    %cst_49 = arith.constant dense<0.000000e+00> : vector<16x32xf32>
    %130 = tpu.matmul %127, %129, %cst_49 {dimension_numbers = #tpu.dot_dimension_numbers<[1], [0], [0], [1], [0, 0, 1, 1], [], []>} : vector<16x32xf32>, vector<32x32xf32>, vector<16x32xf32> -> vector<16x32xf32>
    %c0_50 = arith.constant 0 : index
    %c0_51 = arith.constant 0 : index
    %c0_52 = arith.constant 0 : index
    %131 = vector.load %arg11[%c0_50, %c0_51, %c0_52] : memref<2x1x32xf32, #tpu.memory_space<vmem>>, vector<1x1x32xf32>
    %132 = vector.shape_cast %131 : vector<1x1x32xf32> to vector<1x32xf32>
    %133 = vector.broadcast %132 : vector<1x32xf32> to vector<16x32xf32>
    %134 = arith.addf %130, %133 : vector<16x32xf32>
    %135 = arith.addf %34, %134 : vector<16x32xf32>
    %cst_53 = arith.constant dense<0.000000e+00> : vector<16xf32>
    %136 = vector.multi_reduction <add>, %135, %cst_53 [1] : vector<16x32xf32> to vector<16xf32>
    %137 = vector.shape_cast %136 : vector<16xf32> to vector<16x1xf32>
    %cst_54 = arith.constant 3.200000e+01 : f32
    %138 = vector.broadcast %cst_54 : f32 to vector<16x1xf32>
    %139 = arith.divf %137, %138 : vector<16x1xf32>
    %140 = vector.broadcast %139 : vector<16x1xf32> to vector<16x32xf32>
    %141 = arith.subf %135, %140 : vector<16x32xf32>
    %142 = arith.mulf %141, %141 : vector<16x32xf32>
    %cst_55 = arith.constant dense<0.000000e+00> : vector<16xf32>
    %143 = vector.multi_reduction <add>, %142, %cst_55 [1] : vector<16x32xf32> to vector<16xf32>
    %144 = vector.shape_cast %143 : vector<16xf32> to vector<16x1xf32>
    %cst_56 = arith.constant 3.200000e+01 : f32
    %145 = vector.broadcast %cst_56 : f32 to vector<16x1xf32>
    %146 = arith.divf %144, %145 : vector<16x1xf32>
    %147 = vector.broadcast %139 : vector<16x1xf32> to vector<16x32xf32>
    %148 = arith.subf %135, %147 : vector<16x32xf32>
    %cst_57 = arith.constant 9.99999974E-6 : f32
    %149 = vector.broadcast %cst_57 : f32 to vector<16x1xf32>
    %150 = arith.addf %146, %149 : vector<16x1xf32>
    %151 = math.rsqrt %150 : vector<16x1xf32>
    %152 = vector.broadcast %151 : vector<16x1xf32> to vector<16x32xf32>
    %153 = arith.mulf %148, %152 : vector<16x32xf32>
    %c0_58 = arith.constant 0 : index
    %c0_59 = arith.constant 0 : index
    %c0_60 = arith.constant 0 : index
    %154 = vector.load %arg16[%c0_58, %c0_59, %c0_60] : memref<2x1x32xf32, #tpu.memory_space<vmem>>, vector<1x1x32xf32>
    %155 = vector.shape_cast %154 : vector<1x1x32xf32> to vector<1x32xf32>
    %156 = vector.broadcast %155 : vector<1x32xf32> to vector<16x32xf32>
    %157 = arith.mulf %153, %156 : vector<16x32xf32>
    %c0_61 = arith.constant 0 : index
    %c0_62 = arith.constant 0 : index
    %c0_63 = arith.constant 0 : index
    %158 = vector.load %arg17[%c0_61, %c0_62, %c0_63] : memref<2x1x32xf32, #tpu.memory_space<vmem>>, vector<1x1x32xf32>
    %159 = vector.shape_cast %158 : vector<1x1x32xf32> to vector<1x32xf32>
    %160 = vector.broadcast %159 : vector<1x32xf32> to vector<16x32xf32>
    %161 = arith.addf %157, %160 : vector<16x32xf32>
    %c0_64 = arith.constant 0 : index
    %c0_65 = arith.constant 0 : index
    %c0_66 = arith.constant 0 : index
    %162 = vector.load %arg12[%c0_64, %c0_65, %c0_66] : memref<2x32x2048xf32, #tpu.memory_space<vmem>>, vector<1x32x2048xf32>
    %163 = vector.shape_cast %162 : vector<1x32x2048xf32> to vector<32x2048xf32>
    %cst_67 = arith.constant dense<0.000000e+00> : vector<16x2048xf32>
    %164 = tpu.matmul %161, %163, %cst_67 {dimension_numbers = #tpu.dot_dimension_numbers<[1], [0], [0], [1], [0, 0, 1, 1], [], []>} : vector<16x32xf32>, vector<32x2048xf32>, vector<16x2048xf32> -> vector<16x2048xf32>
    %c0_68 = arith.constant 0 : index
    %c0_69 = arith.constant 0 : index
    %c0_70 = arith.constant 0 : index
    %165 = vector.load %arg13[%c0_68, %c0_69, %c0_70] : memref<2x1x2048xf32, #tpu.memory_space<vmem>>, vector<1x1x2048xf32>
    %166 = vector.shape_cast %165 : vector<1x1x2048xf32> to vector<1x2048xf32>
    %167 = vector.broadcast %166 : vector<1x2048xf32> to vector<16x2048xf32>
    %168 = arith.addf %164, %167 : vector<16x2048xf32>
    %cst_71 = arith.constant 0.000000e+00 : f32
    %169 = vector.broadcast %cst_71 : f32 to vector<16x2048xf32>
    %170 = arith.maximumf %168, %169 : vector<16x2048xf32>
    %c0_72 = arith.constant 0 : index
    %c0_73 = arith.constant 0 : index
    %c0_74 = arith.constant 0 : index
    %171 = vector.load %arg14[%c0_72, %c0_73, %c0_74] : memref<2x2048x32xf32, #tpu.memory_space<vmem>>, vector<1x2048x32xf32>
    %172 = vector.shape_cast %171 : vector<1x2048x32xf32> to vector<2048x32xf32>
    %cst_75 = arith.constant dense<0.000000e+00> : vector<16x32xf32>
    %173 = tpu.matmul %170, %172, %cst_75 {dimension_numbers = #tpu.dot_dimension_numbers<[1], [0], [0], [1], [0, 0, 1, 1], [], []>} : vector<16x2048xf32>, vector<2048x32xf32>, vector<16x32xf32> -> vector<16x32xf32>
    %c0_76 = arith.constant 0 : index
    %c0_77 = arith.constant 0 : index
    %c0_78 = arith.constant 0 : index
    %174 = vector.load %arg15[%c0_76, %c0_77, %c0_78] : memref<2x1x32xf32, #tpu.memory_space<vmem>>, vector<1x1x32xf32>
    %175 = vector.shape_cast %174 : vector<1x1x32xf32> to vector<1x32xf32>
    %176 = vector.broadcast %175 : vector<1x32xf32> to vector<16x32xf32>
    %177 = arith.addf %173, %176 : vector<16x32xf32>
    %178 = arith.addf %161, %177 : vector<16x32xf32>
    %cst_79 = arith.constant dense<0.000000e+00> : vector<16xf32>
    %179 = vector.multi_reduction <add>, %178, %cst_79 [1] : vector<16x32xf32> to vector<16xf32>
    %180 = vector.shape_cast %179 : vector<16xf32> to vector<16x1xf32>
    %cst_80 = arith.constant 3.200000e+01 : f32
    %181 = vector.broadcast %cst_80 : f32 to vector<16x1xf32>
    %182 = arith.divf %180, %181 : vector<16x1xf32>
    %183 = vector.broadcast %182 : vector<16x1xf32> to vector<16x32xf32>
    %184 = arith.subf %178, %183 : vector<16x32xf32>
    %185 = arith.mulf %184, %184 : vector<16x32xf32>
    %cst_81 = arith.constant dense<0.000000e+00> : vector<16xf32>
    %186 = vector.multi_reduction <add>, %185, %cst_81 [1] : vector<16x32xf32> to vector<16xf32>
    %187 = vector.shape_cast %186 : vector<16xf32> to vector<16x1xf32>
    %cst_82 = arith.constant 3.200000e+01 : f32
    %188 = vector.broadcast %cst_82 : f32 to vector<16x1xf32>
    %189 = arith.divf %187, %188 : vector<16x1xf32>
    %190 = vector.broadcast %182 : vector<16x1xf32> to vector<16x32xf32>
    %191 = arith.subf %178, %190 : vector<16x32xf32>
    %cst_83 = arith.constant 9.99999974E-6 : f32
    %192 = vector.broadcast %cst_83 : f32 to vector<16x1xf32>
    %193 = arith.addf %189, %192 : vector<16x1xf32>
    %194 = math.rsqrt %193 : vector<16x1xf32>
    %195 = vector.broadcast %194 : vector<16x1xf32> to vector<16x32xf32>
    %196 = arith.mulf %191, %195 : vector<16x32xf32>
    %c0_84 = arith.constant 0 : index
    %c0_85 = arith.constant 0 : index
    %c0_86 = arith.constant 0 : index
    %197 = vector.load %arg18[%c0_84, %c0_85, %c0_86] : memref<2x1x32xf32, #tpu.memory_space<vmem>>, vector<1x1x32xf32>
    %198 = vector.shape_cast %197 : vector<1x1x32xf32> to vector<1x32xf32>
    %199 = vector.broadcast %198 : vector<1x32xf32> to vector<16x32xf32>
    %200 = arith.mulf %196, %199 : vector<16x32xf32>
    %c0_87 = arith.constant 0 : index
    %c0_88 = arith.constant 0 : index
    %c0_89 = arith.constant 0 : index
    %201 = vector.load %arg19[%c0_87, %c0_88, %c0_89] : memref<2x1x32xf32, #tpu.memory_space<vmem>>, vector<1x1x32xf32>
    %202 = vector.shape_cast %201 : vector<1x1x32xf32> to vector<1x32xf32>
    %203 = vector.broadcast %202 : vector<1x32xf32> to vector<16x32xf32>
    %204 = arith.addf %200, %203 : vector<16x32xf32>
    %c1 = arith.constant 1 : index
    %c0_90 = arith.constant 0 : index
    %c0_91 = arith.constant 0 : index
    %205 = vector.load %arg8[%c1, %c0_90, %c0_91] : memref<2x32x96xf32, #tpu.memory_space<vmem>>, vector<1x32x96xf32>
    %206 = vector.shape_cast %205 : vector<1x32x96xf32> to vector<32x96xf32>
    %cst_92 = arith.constant dense<0.000000e+00> : vector<16x96xf32>
    %207 = tpu.matmul %204, %206, %cst_92 {dimension_numbers = #tpu.dot_dimension_numbers<[1], [0], [0], [1], [0, 0, 1, 1], [], []>} : vector<16x32xf32>, vector<32x96xf32>, vector<16x96xf32> -> vector<16x96xf32>
    %c1_93 = arith.constant 1 : index
    %c0_94 = arith.constant 0 : index
    %c0_95 = arith.constant 0 : index
    %208 = vector.load %arg9[%c1_93, %c0_94, %c0_95] : memref<2x1x96xf32, #tpu.memory_space<vmem>>, vector<1x1x96xf32>
    %209 = vector.shape_cast %208 : vector<1x1x96xf32> to vector<1x96xf32>
    %210 = vector.broadcast %209 : vector<1x96xf32> to vector<16x96xf32>
    %211 = arith.addf %207, %210 : vector<16x96xf32>
    %212 = vector.shape_cast %211 : vector<16x96xf32> to vector<1x16x96xf32>
    %213 = vector.extract_strided_slice %212 {offsets = [0, 0, 0], sizes = [1, 16, 8], strides = [1, 1, 1]} : vector<1x16x96xf32> to vector<1x16x8xf32>
    %214 = vector.extract_strided_slice %212 {offsets = [0, 0, 32], sizes = [1, 16, 8], strides = [1, 1, 1]} : vector<1x16x96xf32> to vector<1x16x8xf32>
    %215 = vector.extract_strided_slice %212 {offsets = [0, 0, 64], sizes = [1, 16, 8], strides = [1, 1, 1]} : vector<1x16x96xf32> to vector<1x16x8xf32>
    %cst_96 = arith.constant 0.353553385 : f32
    %216 = vector.broadcast %cst_96 : f32 to vector<1x16x8xf32>
    %217 = arith.mulf %213, %216 : vector<1x16x8xf32>
    "tpu.trace_start"() <{level = 10 : i32, message = "bqd,bkd->bqk"}> : () -> ()
    %cst_97 = arith.constant dense<0.000000e+00> : vector<1x16x16xf32>
    %218 = tpu.matmul %217, %214, %cst_97 {dimension_numbers = #tpu.dot_dimension_numbers<[2], [2], [1], [1], [0, 0, 0, 1, 1, 1], [0], [0]>} : vector<1x16x8xf32>, vector<1x16x8xf32>, vector<1x16x16xf32> -> vector<1x16x16xf32>
    "tpu.trace_stop"() : () -> ()
    %219 = vector.broadcast %41 : vector<1x1x16xf32> to vector<1x16x16xf32>
    %220 = arith.addf %218, %219 : vector<1x16x16xf32>
    %cst_98 = arith.constant dense<0xFF800000> : vector<1x16xf32>
    %221 = vector.multi_reduction <maximumf>, %220, %cst_98 [2] : vector<1x16x16xf32> to vector<1x16xf32>
    %222 = vector.shape_cast %221 : vector<1x16xf32> to vector<1x16x1xf32>
    %223 = vector.broadcast %222 : vector<1x16x1xf32> to vector<1x16x16xf32>
    %224 = arith.subf %220, %223 : vector<1x16x16xf32>
    %225 = math.exp %224 : vector<1x16x16xf32>
    %cst_99 = arith.constant dense<0.000000e+00> : vector<1x16xf32>
    %226 = vector.multi_reduction <add>, %225, %cst_99 [2] : vector<1x16x16xf32> to vector<1x16xf32>
    %227 = vector.shape_cast %226 : vector<1x16xf32> to vector<1x16x1xf32>
    %228 = tpu.reciprocal %227 {approx = true} : vector<1x16x1xf32> -> vector<1x16x1xf32>
    %229 = vector.broadcast %228 : vector<1x16x1xf32> to vector<1x16x16xf32>
    %230 = arith.mulf %225, %229 : vector<1x16x16xf32>
    "tpu.trace_start"() <{level = 10 : i32, message = "bqk,bkd->bqd"}> : () -> ()
    %cst_100 = arith.constant dense<0.000000e+00> : vector<1x16x8xf32>
    %231 = tpu.matmul %230, %215, %cst_100 {dimension_numbers = #tpu.dot_dimension_numbers<[2], [1], [1], [2], [0, 0, 0, 1, 1, 2], [0], [0]>} : vector<1x16x16xf32>, vector<1x16x8xf32>, vector<1x16x8xf32> -> vector<1x16x8xf32>
    "tpu.trace_stop"() : () -> ()
    %232 = vector.extract_strided_slice %212 {offsets = [0, 0, 8], sizes = [1, 16, 8], strides = [1, 1, 1]} : vector<1x16x96xf32> to vector<1x16x8xf32>
    %233 = vector.extract_strided_slice %212 {offsets = [0, 0, 40], sizes = [1, 16, 8], strides = [1, 1, 1]} : vector<1x16x96xf32> to vector<1x16x8xf32>
    %234 = vector.extract_strided_slice %212 {offsets = [0, 0, 72], sizes = [1, 16, 8], strides = [1, 1, 1]} : vector<1x16x96xf32> to vector<1x16x8xf32>
    %cst_101 = arith.constant 0.353553385 : f32
    %235 = vector.broadcast %cst_101 : f32 to vector<1x16x8xf32>
    %236 = arith.mulf %232, %235 : vector<1x16x8xf32>
    "tpu.trace_start"() <{level = 10 : i32, message = "bqd,bkd->bqk"}> : () -> ()
    %cst_102 = arith.constant dense<0.000000e+00> : vector<1x16x16xf32>
    %237 = tpu.matmul %236, %233, %cst_102 {dimension_numbers = #tpu.dot_dimension_numbers<[2], [2], [1], [1], [0, 0, 0, 1, 1, 1], [0], [0]>} : vector<1x16x8xf32>, vector<1x16x8xf32>, vector<1x16x16xf32> -> vector<1x16x16xf32>
    "tpu.trace_stop"() : () -> ()
    %238 = vector.broadcast %41 : vector<1x1x16xf32> to vector<1x16x16xf32>
    %239 = arith.addf %237, %238 : vector<1x16x16xf32>
    %cst_103 = arith.constant dense<0xFF800000> : vector<1x16xf32>
    %240 = vector.multi_reduction <maximumf>, %239, %cst_103 [2] : vector<1x16x16xf32> to vector<1x16xf32>
    %241 = vector.shape_cast %240 : vector<1x16xf32> to vector<1x16x1xf32>
    %242 = vector.broadcast %241 : vector<1x16x1xf32> to vector<1x16x16xf32>
    %243 = arith.subf %239, %242 : vector<1x16x16xf32>
    %244 = math.exp %243 : vector<1x16x16xf32>
    %cst_104 = arith.constant dense<0.000000e+00> : vector<1x16xf32>
    %245 = vector.multi_reduction <add>, %244, %cst_104 [2] : vector<1x16x16xf32> to vector<1x16xf32>
    %246 = vector.shape_cast %245 : vector<1x16xf32> to vector<1x16x1xf32>
    %247 = tpu.reciprocal %246 {approx = true} : vector<1x16x1xf32> -> vector<1x16x1xf32>
    %248 = vector.broadcast %247 : vector<1x16x1xf32> to vector<1x16x16xf32>
    %249 = arith.mulf %244, %248 : vector<1x16x16xf32>
    "tpu.trace_start"() <{level = 10 : i32, message = "bqk,bkd->bqd"}> : () -> ()
    %cst_105 = arith.constant dense<0.000000e+00> : vector<1x16x8xf32>
    %250 = tpu.matmul %249, %234, %cst_105 {dimension_numbers = #tpu.dot_dimension_numbers<[2], [1], [1], [2], [0, 0, 0, 1, 1, 2], [0], [0]>} : vector<1x16x16xf32>, vector<1x16x8xf32>, vector<1x16x8xf32> -> vector<1x16x8xf32>
    "tpu.trace_stop"() : () -> ()
    %251 = vector.extract_strided_slice %212 {offsets = [0, 0, 16], sizes = [1, 16, 8], strides = [1, 1, 1]} : vector<1x16x96xf32> to vector<1x16x8xf32>
    %252 = vector.extract_strided_slice %212 {offsets = [0, 0, 48], sizes = [1, 16, 8], strides = [1, 1, 1]} : vector<1x16x96xf32> to vector<1x16x8xf32>
    %253 = vector.extract_strided_slice %212 {offsets = [0, 0, 80], sizes = [1, 16, 8], strides = [1, 1, 1]} : vector<1x16x96xf32> to vector<1x16x8xf32>
    %cst_106 = arith.constant 0.353553385 : f32
    %254 = vector.broadcast %cst_106 : f32 to vector<1x16x8xf32>
    %255 = arith.mulf %251, %254 : vector<1x16x8xf32>
    "tpu.trace_start"() <{level = 10 : i32, message = "bqd,bkd->bqk"}> : () -> ()
    %cst_107 = arith.constant dense<0.000000e+00> : vector<1x16x16xf32>
    %256 = tpu.matmul %255, %252, %cst_107 {dimension_numbers = #tpu.dot_dimension_numbers<[2], [2], [1], [1], [0, 0, 0, 1, 1, 1], [0], [0]>} : vector<1x16x8xf32>, vector<1x16x8xf32>, vector<1x16x16xf32> -> vector<1x16x16xf32>
    "tpu.trace_stop"() : () -> ()
    %257 = vector.broadcast %41 : vector<1x1x16xf32> to vector<1x16x16xf32>
    %258 = arith.addf %256, %257 : vector<1x16x16xf32>
    %cst_108 = arith.constant dense<0xFF800000> : vector<1x16xf32>
    %259 = vector.multi_reduction <maximumf>, %258, %cst_108 [2] : vector<1x16x16xf32> to vector<1x16xf32>
    %260 = vector.shape_cast %259 : vector<1x16xf32> to vector<1x16x1xf32>
    %261 = vector.broadcast %260 : vector<1x16x1xf32> to vector<1x16x16xf32>
    %262 = arith.subf %258, %261 : vector<1x16x16xf32>
    %263 = math.exp %262 : vector<1x16x16xf32>
    %cst_109 = arith.constant dense<0.000000e+00> : vector<1x16xf32>
    %264 = vector.multi_reduction <add>, %263, %cst_109 [2] : vector<1x16x16xf32> to vector<1x16xf32>
    %265 = vector.shape_cast %264 : vector<1x16xf32> to vector<1x16x1xf32>
    %266 = tpu.reciprocal %265 {approx = true} : vector<1x16x1xf32> -> vector<1x16x1xf32>
    %267 = vector.broadcast %266 : vector<1x16x1xf32> to vector<1x16x16xf32>
    %268 = arith.mulf %263, %267 : vector<1x16x16xf32>
    "tpu.trace_start"() <{level = 10 : i32, message = "bqk,bkd->bqd"}> : () -> ()
    %cst_110 = arith.constant dense<0.000000e+00> : vector<1x16x8xf32>
    %269 = tpu.matmul %268, %253, %cst_110 {dimension_numbers = #tpu.dot_dimension_numbers<[2], [1], [1], [2], [0, 0, 0, 1, 1, 2], [0], [0]>} : vector<1x16x16xf32>, vector<1x16x8xf32>, vector<1x16x8xf32> -> vector<1x16x8xf32>
    "tpu.trace_stop"() : () -> ()
    %270 = vector.extract_strided_slice %212 {offsets = [0, 0, 24], sizes = [1, 16, 8], strides = [1, 1, 1]} : vector<1x16x96xf32> to vector<1x16x8xf32>
    %271 = vector.extract_strided_slice %212 {offsets = [0, 0, 56], sizes = [1, 16, 8], strides = [1, 1, 1]} : vector<1x16x96xf32> to vector<1x16x8xf32>
    %272 = vector.extract_strided_slice %212 {offsets = [0, 0, 88], sizes = [1, 16, 8], strides = [1, 1, 1]} : vector<1x16x96xf32> to vector<1x16x8xf32>
    %cst_111 = arith.constant 0.353553385 : f32
    %273 = vector.broadcast %cst_111 : f32 to vector<1x16x8xf32>
    %274 = arith.mulf %270, %273 : vector<1x16x8xf32>
    "tpu.trace_start"() <{level = 10 : i32, message = "bqd,bkd->bqk"}> : () -> ()
    %cst_112 = arith.constant dense<0.000000e+00> : vector<1x16x16xf32>
    %275 = tpu.matmul %274, %271, %cst_112 {dimension_numbers = #tpu.dot_dimension_numbers<[2], [2], [1], [1], [0, 0, 0, 1, 1, 1], [0], [0]>} : vector<1x16x8xf32>, vector<1x16x8xf32>, vector<1x16x16xf32> -> vector<1x16x16xf32>
    "tpu.trace_stop"() : () -> ()
    %276 = vector.broadcast %41 : vector<1x1x16xf32> to vector<1x16x16xf32>
    %277 = arith.addf %275, %276 : vector<1x16x16xf32>
    %cst_113 = arith.constant dense<0xFF800000> : vector<1x16xf32>
    %278 = vector.multi_reduction <maximumf>, %277, %cst_113 [2] : vector<1x16x16xf32> to vector<1x16xf32>
    %279 = vector.shape_cast %278 : vector<1x16xf32> to vector<1x16x1xf32>
    %280 = vector.broadcast %279 : vector<1x16x1xf32> to vector<1x16x16xf32>
    %281 = arith.subf %277, %280 : vector<1x16x16xf32>
    %282 = math.exp %281 : vector<1x16x16xf32>
    %cst_114 = arith.constant dense<0.000000e+00> : vector<1x16xf32>
    %283 = vector.multi_reduction <add>, %282, %cst_114 [2] : vector<1x16x16xf32> to vector<1x16xf32>
    %284 = vector.shape_cast %283 : vector<1x16xf32> to vector<1x16x1xf32>
    %285 = tpu.reciprocal %284 {approx = true} : vector<1x16x1xf32> -> vector<1x16x1xf32>
    %286 = vector.broadcast %285 : vector<1x16x1xf32> to vector<1x16x16xf32>
    %287 = arith.mulf %282, %286 : vector<1x16x16xf32>
    "tpu.trace_start"() <{level = 10 : i32, message = "bqk,bkd->bqd"}> : () -> ()
    %cst_115 = arith.constant dense<0.000000e+00> : vector<1x16x8xf32>
    %288 = tpu.matmul %287, %272, %cst_115 {dimension_numbers = #tpu.dot_dimension_numbers<[2], [1], [1], [2], [0, 0, 0, 1, 1, 2], [0], [0]>} : vector<1x16x16xf32>, vector<1x16x8xf32>, vector<1x16x8xf32> -> vector<1x16x8xf32>
    "tpu.trace_stop"() : () -> ()
    %289 = tpu.concatenate %231, %250, %269, %288 in 2 : vector<1x16x8xf32>, vector<1x16x8xf32>, vector<1x16x8xf32>, vector<1x16x8xf32> -> vector<1x16x32xf32>
    %290 = vector.shape_cast %289 : vector<1x16x32xf32> to vector<16x32xf32>
    %c1_116 = arith.constant 1 : index
    %c0_117 = arith.constant 0 : index
    %c0_118 = arith.constant 0 : index
    %291 = vector.load %arg10[%c1_116, %c0_117, %c0_118] : memref<2x32x32xf32, #tpu.memory_space<vmem>>, vector<1x32x32xf32>
    %292 = vector.shape_cast %291 : vector<1x32x32xf32> to vector<32x32xf32>
    %cst_119 = arith.constant dense<0.000000e+00> : vector<16x32xf32>
    %293 = tpu.matmul %290, %292, %cst_119 {dimension_numbers = #tpu.dot_dimension_numbers<[1], [0], [0], [1], [0, 0, 1, 1], [], []>} : vector<16x32xf32>, vector<32x32xf32>, vector<16x32xf32> -> vector<16x32xf32>
    %c1_120 = arith.constant 1 : index
    %c0_121 = arith.constant 0 : index
    %c0_122 = arith.constant 0 : index
    %294 = vector.load %arg11[%c1_120, %c0_121, %c0_122] : memref<2x1x32xf32, #tpu.memory_space<vmem>>, vector<1x1x32xf32>
    %295 = vector.shape_cast %294 : vector<1x1x32xf32> to vector<1x32xf32>
    %296 = vector.broadcast %295 : vector<1x32xf32> to vector<16x32xf32>
    %297 = arith.addf %293, %296 : vector<16x32xf32>
    %298 = arith.addf %204, %297 : vector<16x32xf32>
    %cst_123 = arith.constant dense<0.000000e+00> : vector<16xf32>
    %299 = vector.multi_reduction <add>, %298, %cst_123 [1] : vector<16x32xf32> to vector<16xf32>
    %300 = vector.shape_cast %299 : vector<16xf32> to vector<16x1xf32>
    %cst_124 = arith.constant 3.200000e+01 : f32
    %301 = vector.broadcast %cst_124 : f32 to vector<16x1xf32>
    %302 = arith.divf %300, %301 : vector<16x1xf32>
    %303 = vector.broadcast %302 : vector<16x1xf32> to vector<16x32xf32>
    %304 = arith.subf %298, %303 : vector<16x32xf32>
    %305 = arith.mulf %304, %304 : vector<16x32xf32>
    %cst_125 = arith.constant dense<0.000000e+00> : vector<16xf32>
    %306 = vector.multi_reduction <add>, %305, %cst_125 [1] : vector<16x32xf32> to vector<16xf32>
    %307 = vector.shape_cast %306 : vector<16xf32> to vector<16x1xf32>
    %cst_126 = arith.constant 3.200000e+01 : f32
    %308 = vector.broadcast %cst_126 : f32 to vector<16x1xf32>
    %309 = arith.divf %307, %308 : vector<16x1xf32>
    %310 = vector.broadcast %302 : vector<16x1xf32> to vector<16x32xf32>
    %311 = arith.subf %298, %310 : vector<16x32xf32>
    %cst_127 = arith.constant 9.99999974E-6 : f32
    %312 = vector.broadcast %cst_127 : f32 to vector<16x1xf32>
    %313 = arith.addf %309, %312 : vector<16x1xf32>
    %314 = math.rsqrt %313 : vector<16x1xf32>
    %315 = vector.broadcast %314 : vector<16x1xf32> to vector<16x32xf32>
    %316 = arith.mulf %311, %315 : vector<16x32xf32>
    %c1_128 = arith.constant 1 : index
    %c0_129 = arith.constant 0 : index
    %c0_130 = arith.constant 0 : index
    %317 = vector.load %arg16[%c1_128, %c0_129, %c0_130] : memref<2x1x32xf32, #tpu.memory_space<vmem>>, vector<1x1x32xf32>
    %318 = vector.shape_cast %317 : vector<1x1x32xf32> to vector<1x32xf32>
    %319 = vector.broadcast %318 : vector<1x32xf32> to vector<16x32xf32>
    %320 = arith.mulf %316, %319 : vector<16x32xf32>
    %c1_131 = arith.constant 1 : index
    %c0_132 = arith.constant 0 : index
    %c0_133 = arith.constant 0 : index
    %321 = vector.load %arg17[%c1_131, %c0_132, %c0_133] : memref<2x1x32xf32, #tpu.memory_space<vmem>>, vector<1x1x32xf32>
    %322 = vector.shape_cast %321 : vector<1x1x32xf32> to vector<1x32xf32>
    %323 = vector.broadcast %322 : vector<1x32xf32> to vector<16x32xf32>
    %324 = arith.addf %320, %323 : vector<16x32xf32>
    %c1_134 = arith.constant 1 : index
    %c0_135 = arith.constant 0 : index
    %c0_136 = arith.constant 0 : index
    %325 = vector.load %arg12[%c1_134, %c0_135, %c0_136] : memref<2x32x2048xf32, #tpu.memory_space<vmem>>, vector<1x32x2048xf32>
    %326 = vector.shape_cast %325 : vector<1x32x2048xf32> to vector<32x2048xf32>
    %cst_137 = arith.constant dense<0.000000e+00> : vector<16x2048xf32>
    %327 = tpu.matmul %324, %326, %cst_137 {dimension_numbers = #tpu.dot_dimension_numbers<[1], [0], [0], [1], [0, 0, 1, 1], [], []>} : vector<16x32xf32>, vector<32x2048xf32>, vector<16x2048xf32> -> vector<16x2048xf32>
    %c1_138 = arith.constant 1 : index
    %c0_139 = arith.constant 0 : index
    %c0_140 = arith.constant 0 : index
    %328 = vector.load %arg13[%c1_138, %c0_139, %c0_140] : memref<2x1x2048xf32, #tpu.memory_space<vmem>>, vector<1x1x2048xf32>
    %329 = vector.shape_cast %328 : vector<1x1x2048xf32> to vector<1x2048xf32>
    %330 = vector.broadcast %329 : vector<1x2048xf32> to vector<16x2048xf32>
    %331 = arith.addf %327, %330 : vector<16x2048xf32>
    %cst_141 = arith.constant 0.000000e+00 : f32
    %332 = vector.broadcast %cst_141 : f32 to vector<16x2048xf32>
    %333 = arith.maximumf %331, %332 : vector<16x2048xf32>
    %c1_142 = arith.constant 1 : index
    %c0_143 = arith.constant 0 : index
    %c0_144 = arith.constant 0 : index
    %334 = vector.load %arg14[%c1_142, %c0_143, %c0_144] : memref<2x2048x32xf32, #tpu.memory_space<vmem>>, vector<1x2048x32xf32>
    %335 = vector.shape_cast %334 : vector<1x2048x32xf32> to vector<2048x32xf32>
    %cst_145 = arith.constant dense<0.000000e+00> : vector<16x32xf32>
    %336 = tpu.matmul %333, %335, %cst_145 {dimension_numbers = #tpu.dot_dimension_numbers<[1], [0], [0], [1], [0, 0, 1, 1], [], []>} : vector<16x2048xf32>, vector<2048x32xf32>, vector<16x32xf32> -> vector<16x32xf32>
    %c1_146 = arith.constant 1 : index
    %c0_147 = arith.constant 0 : index
    %c0_148 = arith.constant 0 : index
    %337 = vector.load %arg15[%c1_146, %c0_147, %c0_148] : memref<2x1x32xf32, #tpu.memory_space<vmem>>, vector<1x1x32xf32>
    %338 = vector.shape_cast %337 : vector<1x1x32xf32> to vector<1x32xf32>
    %339 = vector.broadcast %338 : vector<1x32xf32> to vector<16x32xf32>
    %340 = arith.addf %336, %339 : vector<16x32xf32>
    %341 = arith.addf %324, %340 : vector<16x32xf32>
    %cst_149 = arith.constant dense<0.000000e+00> : vector<16xf32>
    %342 = vector.multi_reduction <add>, %341, %cst_149 [1] : vector<16x32xf32> to vector<16xf32>
    %343 = vector.shape_cast %342 : vector<16xf32> to vector<16x1xf32>
    %cst_150 = arith.constant 3.200000e+01 : f32
    %344 = vector.broadcast %cst_150 : f32 to vector<16x1xf32>
    %345 = arith.divf %343, %344 : vector<16x1xf32>
    %346 = vector.broadcast %345 : vector<16x1xf32> to vector<16x32xf32>
    %347 = arith.subf %341, %346 : vector<16x32xf32>
    %348 = arith.mulf %347, %347 : vector<16x32xf32>
    %cst_151 = arith.constant dense<0.000000e+00> : vector<16xf32>
    %349 = vector.multi_reduction <add>, %348, %cst_151 [1] : vector<16x32xf32> to vector<16xf32>
    %350 = vector.shape_cast %349 : vector<16xf32> to vector<16x1xf32>
    %cst_152 = arith.constant 3.200000e+01 : f32
    %351 = vector.broadcast %cst_152 : f32 to vector<16x1xf32>
    %352 = arith.divf %350, %351 : vector<16x1xf32>
    %353 = vector.broadcast %345 : vector<16x1xf32> to vector<16x32xf32>
    %354 = arith.subf %341, %353 : vector<16x32xf32>
    %cst_153 = arith.constant 9.99999974E-6 : f32
    %355 = vector.broadcast %cst_153 : f32 to vector<16x1xf32>
    %356 = arith.addf %352, %355 : vector<16x1xf32>
    %357 = math.rsqrt %356 : vector<16x1xf32>
    %358 = vector.broadcast %357 : vector<16x1xf32> to vector<16x32xf32>
    %359 = arith.mulf %354, %358 : vector<16x32xf32>
    %c1_154 = arith.constant 1 : index
    %c0_155 = arith.constant 0 : index
    %c0_156 = arith.constant 0 : index
    %360 = vector.load %arg18[%c1_154, %c0_155, %c0_156] : memref<2x1x32xf32, #tpu.memory_space<vmem>>, vector<1x1x32xf32>
    %361 = vector.shape_cast %360 : vector<1x1x32xf32> to vector<1x32xf32>
    %362 = vector.broadcast %361 : vector<1x32xf32> to vector<16x32xf32>
    %363 = arith.mulf %359, %362 : vector<16x32xf32>
    %c1_157 = arith.constant 1 : index
    %c0_158 = arith.constant 0 : index
    %c0_159 = arith.constant 0 : index
    %364 = vector.load %arg19[%c1_157, %c0_158, %c0_159] : memref<2x1x32xf32, #tpu.memory_space<vmem>>, vector<1x1x32xf32>
    %365 = vector.shape_cast %364 : vector<1x1x32xf32> to vector<1x32xf32>
    %366 = vector.broadcast %365 : vector<1x32xf32> to vector<16x32xf32>
    %367 = arith.addf %363, %366 : vector<16x32xf32>
    %368 = vector.shape_cast %367 : vector<16x32xf32> to vector<1x16x32xf32>
    %369 = vector.extract_strided_slice %368 {offsets = [0, 0, 0], sizes = [1, 1, 32], strides = [1, 1, 1]} : vector<1x16x32xf32> to vector<1x1x32xf32>
    %370 = vector.shape_cast %369 : vector<1x1x32xf32> to vector<1x32xf32>
    %c0_160 = arith.constant 0 : index
    %c0_161 = arith.constant 0 : index
    %371 = vector.load %arg20[%c0_160, %c0_161] : memref<1x32xf32, #tpu.memory_space<vmem>>, vector<1x32xf32>
    %372 = arith.mulf %370, %371 : vector<1x32xf32>
    %cst_162 = arith.constant dense<0.000000e+00> : vector<1xf32>
    %373 = vector.multi_reduction <add>, %372, %cst_162 [1] : vector<1x32xf32> to vector<1xf32>
    %374 = vector.shape_cast %373 : vector<1xf32> to vector<1x1xf32>
    %c0_163 = arith.constant 0 : index
    %c0_164 = arith.constant 0 : index
    %375 = vector.load %arg21[%c0_163, %c0_164] : memref<1x1xf32, #tpu.memory_space<vmem>>, vector<1x1xf32>
    %376 = arith.addf %374, %375 : vector<1x1xf32>
    %377 = vector.shape_cast %376 : vector<1x1xf32> to vector<1x1x1xf32>
    %c0_165 = arith.constant 0 : index
    %c0_166 = arith.constant 0 : index
    %c0_167 = arith.constant 0 : index
    %378 = vector.load %arg22[%c0_165, %c0_166, %c0_167] : memref<1x1x1xf32, #tpu.memory_space<vmem>>, vector<1x1x1xf32>
    tpu.vector_store %arg22[%c0_165, %c0_166, %c0_167], %377 {strides = array<i32>} : memref<1x1x1xf32, #tpu.memory_space<vmem>>, vector<1x1x1xf32>,
    return
  }
  func.func @transform_0(%arg0: i32) -> (i32, i32, i32) {
    %c0_i32 = arith.constant 0 : i32
    %c0_i32_0 = arith.constant 0 : i32
    %c0_i32_1 = arith.constant 0 : i32
    return %arg0, %c0_i32, %c0_i32_0 : i32, i32, i32
  }
  func.func @transform_1(%arg0: i32) -> (i32, i32, i32) {
    %c0_i32 = arith.constant 0 : i32
    %c0_i32_0 = arith.constant 0 : i32
    %c0_i32_1 = arith.constant 0 : i32
    return %arg0, %c0_i32, %c0_i32_0 : i32, i32, i32
  }
  func.func @transform_2(%arg0: i32) -> (i32, i32, i32) {
    %c0_i32 = arith.constant 0 : i32
    %c0_i32_0 = arith.constant 0 : i32
    %c0_i32_1 = arith.constant 0 : i32
    return %arg0, %c0_i32, %c0_i32_0 : i32, i32, i32
  }
  func.func @transform_3(%arg0: i32) -> (i32, i32) {
    %c0_i32 = arith.constant 0 : i32
    %c0_i32_0 = arith.constant 0 : i32
    %c0_i32_1 = arith.constant 0 : i32
    return %c0_i32, %c0_i32_0 : i32, i32
  }
  func.func @transform_4(%arg0: i32) -> (i32, i32) {
    %c0_i32 = arith.constant 0 : i32
    %c0_i32_0 = arith.constant 0 : i32
    %c0_i32_1 = arith.constant 0 : i32
    return %c0_i32, %c0_i32_0 : i32, i32
  }
  func.func @transform_5(%arg0: i32) -> (i32, i32) {
    %c0_i32 = arith.constant 0 : i32
    %c0_i32_0 = arith.constant 0 : i32
    %c0_i32_1 = arith.constant 0 : i32
    return %c0_i32, %c0_i32_0 : i32, i32
  }
  func.func @transform_6(%arg0: i32) -> (i32, i32) {
    %c0_i32 = arith.constant 0 : i32
    %c0_i32_0 = arith.constant 0 : i32
    %c0_i32_1 = arith.constant 0 : i32
    return %c0_i32, %c0_i32_0 : i32, i32
  }
  func.func @transform_7(%arg0: i32) -> (i32, i32, i32) {
    %c0_i32 = arith.constant 0 : i32
    %c0_i32_0 = arith.constant 0 : i32
    %c0_i32_1 = arith.constant 0 : i32
    %c0_i32_2 = arith.constant 0 : i32
    return %c0_i32, %c0_i32_0, %c0_i32_1 : i32, i32, i32
  }
  func.func @transform_8(%arg0: i32) -> (i32, i32, i32) {
    %c0_i32 = arith.constant 0 : i32
    %c0_i32_0 = arith.constant 0 : i32
    %c0_i32_1 = arith.constant 0 : i32
    %c0_i32_2 = arith.constant 0 : i32
    return %c0_i32, %c0_i32_0, %c0_i32_1 : i32, i32, i32
  }
  func.func @transform_9(%arg0: i32) -> (i32, i32, i32) {
    %c0_i32 = arith.constant 0 : i32
    %c0_i32_0 = arith.constant 0 : i32
    %c0_i32_1 = arith.constant 0 : i32
    %c0_i32_2 = arith.constant 0 : i32
    return %c0_i32, %c0_i32_0, %c0_i32_1 : i32, i32, i32
  }
  func.func @transform_10(%arg0: i32) -> (i32, i32, i32) {
    %c0_i32 = arith.constant 0 : i32
    %c0_i32_0 = arith.constant 0 : i32
    %c0_i32_1 = arith.constant 0 : i32
    %c0_i32_2 = arith.constant 0 : i32
    return %c0_i32, %c0_i32_0, %c0_i32_1 : i32, i32, i32
  }
  func.func @transform_11(%arg0: i32) -> (i32, i32, i32) {
    %c0_i32 = arith.constant 0 : i32
    %c0_i32_0 = arith.constant 0 : i32
    %c0_i32_1 = arith.constant 0 : i32
    %c0_i32_2 = arith.constant 0 : i32
    return %c0_i32, %c0_i32_0, %c0_i32_1 : i32, i32, i32
  }
  func.func @transform_12(%arg0: i32) -> (i32, i32, i32) {
    %c0_i32 = arith.constant 0 : i32
    %c0_i32_0 = arith.constant 0 : i32
    %c0_i32_1 = arith.constant 0 : i32
    %c0_i32_2 = arith.constant 0 : i32
    return %c0_i32, %c0_i32_0, %c0_i32_1 : i32, i32, i32
  }
  func.func @transform_13(%arg0: i32) -> (i32, i32, i32) {
    %c0_i32 = arith.constant 0 : i32
    %c0_i32_0 = arith.constant 0 : i32
    %c0_i32_1 = arith.constant 0 : i32
    %c0_i32_2 = arith.constant 0 : i32
    return %c0_i32, %c0_i32_0, %c0_i32_1 : i32, i32, i32
  }
  func.func @transform_14(%arg0: i32) -> (i32, i32, i32) {
    %c0_i32 = arith.constant 0 : i32
    %c0_i32_0 = arith.constant 0 : i32
    %c0_i32_1 = arith.constant 0 : i32
    %c0_i32_2 = arith.constant 0 : i32
    return %c0_i32, %c0_i32_0, %c0_i32_1 : i32, i32, i32
  }
  func.func @transform_15(%arg0: i32) -> (i32, i32, i32) {
    %c0_i32 = arith.constant 0 : i32
    %c0_i32_0 = arith.constant 0 : i32
    %c0_i32_1 = arith.constant 0 : i32
    %c0_i32_2 = arith.constant 0 : i32
    return %c0_i32, %c0_i32_0, %c0_i32_1 : i32, i32, i32
  }
  func.func @transform_16(%arg0: i32) -> (i32, i32, i32) {
    %c0_i32 = arith.constant 0 : i32
    %c0_i32_0 = arith.constant 0 : i32
    %c0_i32_1 = arith.constant 0 : i32
    %c0_i32_2 = arith.constant 0 : i32
    return %c0_i32, %c0_i32_0, %c0_i32_1 : i32, i32, i32
  }
  func.func @transform_17(%arg0: i32) -> (i32, i32, i32) {
    %c0_i32 = arith.constant 0 : i32
    %c0_i32_0 = arith.constant 0 : i32
    %c0_i32_1 = arith.constant 0 : i32
    %c0_i32_2 = arith.constant 0 : i32
    return %c0_i32, %c0_i32_0, %c0_i32_1 : i32, i32, i32
  }
  func.func @transform_18(%arg0: i32) -> (i32, i32, i32) {
    %c0_i32 = arith.constant 0 : i32
    %c0_i32_0 = arith.constant 0 : i32
    %c0_i32_1 = arith.constant 0 : i32
    %c0_i32_2 = arith.constant 0 : i32
    return %c0_i32, %c0_i32_0, %c0_i32_1 : i32, i32, i32
  }
  func.func @transform_19(%arg0: i32) -> (i32, i32) {
    %c0_i32 = arith.constant 0 : i32
    %c0_i32_0 = arith.constant 0 : i32
    %c0_i32_1 = arith.constant 0 : i32
    return %c0_i32, %c0_i32_0 : i32, i32
  }
  func.func @transform_20(%arg0: i32) -> (i32, i32) {
    %c0_i32 = arith.constant 0 : i32
    %c0_i32_0 = arith.constant 0 : i32
    %c0_i32_1 = arith.constant 0 : i32
    return %c0_i32, %c0_i32_0 : i32, i32
  }
  func.func @transform_21(%arg0: i32) -> (i32, i32, i32) {
    %c0_i32 = arith.constant 0 : i32
    %c0_i32_0 = arith.constant 0 : i32
    %c0_i32_1 = arith.constant 0 : i32
    return %arg0, %c0_i32, %c0_i32_0 : i32, i32, i32
  }
}

</mosaic_0001>

<llo_original>
// kernel: model_forward_pallas.1
$region0: #{model_forward_pallas.1}
  #allocation0 [shape = 'u32[]', space=smem, size = 0x4, offset = 0x4, fixed_abs, tag = 'smem constant byte address 0x4 - core index']
  #allocation1 [shape = 'u32[72,128]{1,0:T(1,128)}', space=vmem, size = 0x9000, scoped, tag = 'internal scratch']
  #allocation2 [shape = 'f32[1,1]{1,0:T(1,128)S(1)}', space=vmem, size = 0x200, scoped, tag = 'scoped memory for model_forward_pallas.1']
  %s0 = inlined_call_operand.vmem [shape: s32[2,16,1], index: 0, kind: input, shape index: {}]
  %s1 = inlined_call_operand.vmem [shape: s32[2,16,1], index: 1, kind: input, shape index: {}]
  %s2 = inlined_call_operand.vmem [shape: s32[2,1,1], index: 2, kind: input, shape index: {}]
  %s3 = inlined_call_operand.vmem [shape: f32[30,32], index: 3, kind: input, shape index: {}]
  %s4 = inlined_call_operand.vmem [shape: f32[5,32], index: 4, kind: input, shape index: {}]
  %s5 = inlined_call_operand.vmem [shape: f32[1,32], index: 5, kind: input, shape index: {}]
  %s6 = inlined_call_operand.vmem [shape: f32[16,32], index: 6, kind: input, shape index: {}]
  %s7 = inlined_call_operand.vmem [shape: f32[2,32,96], index: 7, kind: input, shape index: {}]
  %s8 = inlined_call_operand.vmem [shape: f32[2,1,96], index: 8, kind: input, shape index: {}]
  %s9 = inlined_call_operand.vmem [shape: f32[2,32,32], index: 9, kind: input, shape index: {}]
  %s10 = inlined_call_operand.vmem [shape: f32[2,1,32], index: 10, kind: input, shape index: {}]
  %s11 = inlined_call_operand.vmem [shape: f32[2,32,2048], index: 11, kind: input, shape index: {}]
  %s12 = inlined_call_operand.vmem [shape: f32[2,1,2048], index: 12, kind: input, shape index: {}]
  %s13 = inlined_call_operand.vmem [shape: f32[2,2048,32], index: 13, kind: input, shape index: {}]
  %s14 = inlined_call_operand.vmem [shape: f32[2,1,32], index: 14, kind: input, shape index: {}]
  %s15 = inlined_call_operand.vmem [shape: f32[2,1,32], index: 15, kind: input, shape index: {}]
  %s16 = inlined_call_operand.vmem [shape: f32[2,1,32], index: 16, kind: input, shape index: {}]
  %s17 = inlined_call_operand.vmem [shape: f32[2,1,32], index: 17, kind: input, shape index: {}]
  %s18 = inlined_call_operand.vmem [shape: f32[2,1,32], index: 18, kind: input, shape index: {}]
  %s19 = inlined_call_operand.vmem [shape: f32[1,32], index: 19, kind: input, shape index: {}]
  %s20 = inlined_call_operand.<no memory space> [shape: f32[1,1], index: 20, kind: input, shape index: {}]
  %s21 = inlined_call_operand.vmem [shape: f32[2,1,1], index: 21, kind: output, shape index: {}]
  %s22 = sld [smem:[#allocation0]]
  $region117: #{model_forward_pallas.1} parent=0
    _
  %s24 = ssub.s32 1, %s22
  %s25 = scalar_select 0, %s24, %s22
  %v26 = vstv %s20
  %27 = vst [vmem:[#allocation2] sm:$0x1] %v26
  loop: start=0, step=1, limit=4
  $region2: #{model_forward_pallas.1} parent=0 // loop_pre_header
    _
  $region3: #{model_forward_pallas.1} parent=0 // loop_header
    %s29 = sphi 0, %s33
    %p30 = scmp.ge.s32.totalorder %s29, 4
    %s39 = sphi 0, %s41
    %s42 = sphi 0, %s39
    %s43 = sphi 0, %s42
    %s59 = sphi 0, %s43
    %s65 = sphi 0, %s67
    %s68 = sphi 0, %s65
    %s69 = sphi 0, %s68
    %s85 = sphi 0, %s69
    %s91 = sphi 0, %s93
    %s94 = sphi 0, %s91
    %s95 = sphi 0, %s94
    %s111 = sphi 0, %s95
    %s115 = sphi 0, %s115
    %s117 = sphi 0, %s115
    %s118 = sphi 0, %s117
    %s132 = sphi 0, %s118
    %s136 = sphi 0, %s136
    %s138 = sphi 0, %s136
    %s139 = sphi 0, %s138
    %s153 = sphi 0, %s139
    %s157 = sphi 0, %s157
    %s159 = sphi 0, %s157
    %s160 = sphi 0, %s159
    %s174 = sphi 0, %s160
    %s178 = sphi 0, %s178
    %s180 = sphi 0, %s178
    %s181 = sphi 0, %s180
    %s195 = sphi 0, %s181
    %s199 = sphi 0, %s199
    %s201 = sphi 0, %s199
    %s202 = sphi 0, %s201
    %s216 = sphi 0, %s202
    %s220 = sphi 0, %s220
    %s222 = sphi 0, %s220
    %s223 = sphi 0, %s222
    %s237 = sphi 0, %s223
    %s241 = sphi 0, %s241
    %s243 = sphi 0, %s241
    %s244 = sphi 0, %s243
    %s258 = sphi 0, %s244
    %s262 = sphi 0, %s262
    %s264 = sphi 0, %s262
    %s265 = sphi 0, %s264
    %s279 = sphi 0, %s265
    %s283 = sphi 0, %s283
    %s285 = sphi 0, %s283
    %s286 = sphi 0, %s285
    %s300 = sphi 0, %s286
    %s304 = sphi 0, %s304
    %s306 = sphi 0, %s304
    %s307 = sphi 0, %s306
    %s321 = sphi 0, %s307
    %s325 = sphi 0, %s325
    %s327 = sphi 0, %s325
    %s328 = sphi 0, %s327
    %s342 = sphi 0, %s328
    %s346 = sphi 0, %s346
    %s348 = sphi 0, %s346
    %s349 = sphi 0, %s348
    %s363 = sphi 0, %s349
    %s367 = sphi 0, %s367
    %s369 = sphi 0, %s367
    %s370 = sphi 0, %s369
    %s384 = sphi 0, %s370
    %s388 = sphi 0, %s388
    %s390 = sphi 0, %s388
    %s391 = sphi 0, %s390
    %s405 = sphi 0, %s391
    %s409 = sphi 0, %s409
    %s411 = sphi 0, %s409
    %s412 = sphi 0, %s411
    %s426 = sphi 0, %s412
    %s430 = sphi 0, %s430
    %s432 = sphi 0, %s430
    %s433 = sphi 0, %s432
    %s447 = sphi 0, %s433
    %s451 = sphi 0, %s451
    %s453 = sphi 0, %s451
    %s454 = sphi 0, %s453
    %s468 = sphi 0, %s454
    %s472 = sphi 0, %s472
    %s474 = sphi 0, %s472
    %s475 = sphi 0, %s474
    %s489 = sphi 0, %s475
    %s495 = sphi 0, %s497
    %s498 = sphi 0, %s495
    %s499 = sphi 0, %s498
    %s515 = sphi 0, %s499
  $region4: #{model_forward_pallas.1} parent=0 // loop_header_branch
    %32 = sbr.rel (%p30) target = $region8
  $region5: #{model_forward_pallas.1} parent=0 // loop_body
    %s34 = ssub.s32 %s29, 1
    %s35 = ssub.s32 %s29, 2
    %s36 = sadd.s32 %s29, 1
    %s37 = ssub.s32 %s29, %s36
    %p38 = scmp.eq.s32.totalorder %s37, 0
    %s40 = sadd.s32 %s39, 1
    %s41 = scalar_select %p38, %s39, %s40
    %p44 = pneg %p38
    %p45 = scmp.eq.s32.totalorder %s29, 1
    %p46 = por %p44, %p45
    %p47 = scmp.ne.s32.totalorder %s39, %s42
    %p48 = scmp.eq.s32.totalorder %s29, 0
    %p49 = por %p47, %p48
    %p50 = scmp.ne.s32.totalorder %s39, %s42
    %p51 = scmp.eq.s32.totalorder %s34, 1
    %p52 = por %p50, %p51
    %p53 = scmp.ne.s32.totalorder %s42, %s43
    %p54 = scmp.eq.s32.totalorder %s34, 0
    %p55 = por %p53, %p54
    %p56 = scmp.ne.s32.totalorder %s42, %s43
    %p57 = scmp.eq.s32.totalorder %s35, 1
    %p58 = por %p56, %p57
    %p60 = scmp.ne.s32.totalorder %s43, %s59
    %p61 = scmp.eq.s32.totalorder %s35, 0
    %p62 = por %p60, %p61
    %s63 = ssub.s32 %s29, %s36
    %p64 = scmp.eq.s32.totalorder %s63, 0
    %s66 = sadd.s32 %s65, 1
    %s67 = scalar_select %p64, %s65, %s66
    %p70 = pneg %p64
    %p71 = scmp.eq.s32.totalorder %s29, 1
    %p72 = por %p70, %p71
    %p73 = scmp.ne.s32.totalorder %s65, %s68
    %p74 = scmp.eq.s32.totalorder %s29, 0
    %p75 = por %p73, %p74
    %p76 = scmp.ne.s32.totalorder %s65, %s68
    %p77 = scmp.eq.s32.totalorder %s34, 1
    %p78 = por %p76, %p77
    %p79 = scmp.ne.s32.totalorder %s68, %s69
    %p80 = scmp.eq.s32.totalorder %s34, 0
    %p81 = por %p79, %p80
    %p82 = scmp.ne.s32.totalorder %s68, %s69
    %p83 = scmp.eq.s32.totalorder %s35, 1
    %p84 = por %p82, %p83
    %p86 = scmp.ne.s32.totalorder %s69, %s85
    %p87 = scmp.eq.s32.totalorder %s35, 0
    %p88 = por %p86, %p87
    %s89 = ssub.s32 %s29, %s36
    %p90 = scmp.eq.s32.totalorder %s89, 0
    %s92 = sadd.s32 %s91, 1
    %s93 = scalar_select %p90, %s91, %s92
    %p96 = pneg %p90
    %p97 = scmp.eq.s32.totalorder %s29, 1
    %p98 = por %p96, %p97
    %p99 = scmp.ne.s32.totalorder %s91, %s94
    %p100 = scmp.eq.s32.totalorder %s29, 0
    %p101 = por %p99, %p100
    %p102 = scmp.ne.s32.totalorder %s91, %s94
    %p103 = scmp.eq.s32.totalorder %s34, 1
    %p104 = por %p102, %p103
    %p105 = scmp.ne.s32.totalorder %s94, %s95
    %p106 = scmp.eq.s32.totalorder %s34, 0
    %p107 = por %p105, %p106
    %p108 = scmp.ne.s32.totalorder %s94, %s95
    %p109 = scmp.eq.s32.totalorder %s35, 1
    %p110 = por %p108, %p109
    %p112 = scmp.ne.s32.totalorder %s95, %s111
    %p113 = scmp.eq.s32.totalorder %s35, 0
    %p114 = por %p112, %p113
    %s116 = sadd.s32 %s115, 1
    %p119 = scmp.eq.s32.totalorder %s29, 1
    %p120 = scmp.ne.s32.totalorder %s115, %s117
    %p121 = scmp.eq.s32.totalorder %s29, 0
    %p122 = por %p120, %p121
    %p123 = scmp.ne.s32.totalorder %s115, %s117
    %p124 = scmp.eq.s32.totalorder %s34, 1
    %p125 = por %p123, %p124
    %p126 = scmp.ne.s32.totalorder %s117, %s118
    %p127 = scmp.eq.s32.totalorder %s34, 0
    %p128 = por %p126, %p127
    %p129 = scmp.ne.s32.totalorder %s117, %s118
    %p130 = scmp.eq.s32.totalorder %s35, 1
    %p131 = por %p129, %p130
    %p133 = scmp.ne.s32.totalorder %s118, %s132
    %p134 = scmp.eq.s32.totalorder %s35, 0
    %p135 = por %p133, %p134
    %s137 = sadd.s32 %s136, 1
    %p140 = scmp.eq.s32.totalorder %s29, 1
    %p141 = scmp.ne.s32.totalorder %s136, %s138
    %p142 = scmp.eq.s32.totalorder %s29, 0
    %p143 = por %p141, %p142
    %p144 = scmp.ne.s32.totalorder %s136, %s138
    %p145 = scmp.eq.s32.totalorder %s34, 1
    %p146 = por %p144, %p145
    %p147 = scmp.ne.s32.totalorder %s138, %s139
    %p148 = scmp.eq.s32.totalorder %s34, 0
    %p149 = por %p147, %p148
    %p150 = scmp.ne.s32.totalorder %s138, %s139
    %p151 = scmp.eq.s32.totalorder %s35, 1
    %p152 = por %p150, %p151
    %p154 = scmp.ne.s32.totalorder %s139, %s153
    %p155 = scmp.eq.s32.totalorder %s35, 0
    %p156 = por %p154, %p155
    %s158 = sadd.s32 %s157, 1
    %p161 = scmp.eq.s32.totalorder %s29, 1
    %p162 = scmp.ne.s32.totalorder %s157, %s159
    %p163 = scmp.eq.s32.totalorder %s29, 0
    %p164 = por %p162, %p163
    %p165 = scmp.ne.s32.totalorder %s157, %s159
    %p166 = scmp.eq.s32.totalorder %s34, 1
    %p167 = por %p165, %p166
    %p168 = scmp.ne.s32.totalorder %s159, %s160
    %p169 = scmp.eq.s32.totalorder %s34, 0
    %p170 = por %p168, %p169
    %p171 = scmp.ne.s32.totalorder %s159, %s160
    %p172 = scmp.eq.s32.totalorder %s35, 1
    %p173 = por %p171, %p172
    %p175 = scmp.ne.s32.totalorder %s160, %s174
    %p176 = scmp.eq.s32.totalorder %s35, 0
    %p177 = por %p175, %p176
    %s179 = sadd.s32 %s178, 1
    %p182 = scmp.eq.s32.totalorder %s29, 1
    %p183 = scmp.ne.s32.totalorder %s178, %s180
    %p184 = scmp.eq.s32.totalorder %s29, 0
    %p185 = por %p183, %p184
    %p186 = scmp.ne.s32.totalorder %s178, %s180
    %p187 = scmp.eq.s32.totalorder %s34, 1
    %p188 = por %p186, %p187
    %p189 = scmp.ne.s32.totalorder %s180, %s181
    %p190 = scmp.eq.s32.totalorder %s34, 0
    %p191 = por %p189, %p190
    %p192 = scmp.ne.s32.totalorder %s180, %s181
    %p193 = scmp.eq.s32.totalorder %s35, 1
    %p194 = por %p192, %p193
    %p196 = scmp.ne.s32.totalorder %s181, %s195
    %p197 = scmp.eq.s32.totalorder %s35, 0
    %p198 = por %p196, %p197
    %s200 = sadd.s32 %s199, 1
    %p203 = scmp.eq.s32.totalorder %s29, 1
    %p204 = scmp.ne.s32.totalorder %s199, %s201
    %p205 = scmp.eq.s32.totalorder %s29, 0
    %p206 = por %p204, %p205
    %p207 = scmp.ne.s32.totalorder %s199, %s201
    %p208 = scmp.eq.s32.totalorder %s34, 1
    %p209 = por %p207, %p208
    %p210 = scmp.ne.s32.totalorder %s201, %s202
    %p211 = scmp.eq.s32.totalorder %s34, 0
    %p212 = por %p210, %p211
    %p213 = scmp.ne.s32.totalorder %s201, %s202
    %p214 = scmp.eq.s32.totalorder %s35, 1
    %p215 = por %p213, %p214
    %p217 = scmp.ne.s32.totalorder %s202, %s216
    %p218 = scmp.eq.s32.totalorder %s35, 0
    %p219 = por %p217, %p218
    %s221 = sadd.s32 %s220, 1
    %p224 = scmp.eq.s32.totalorder %s29, 1
    %p225 = scmp.ne.s32.totalorder %s220, %s222
    %p226 = scmp.eq.s32.totalorder %s29, 0
    %p227 = por %p225, %p226
    %p228 = scmp.ne.s32.totalorder %s220, %s222
    %p229 = scmp.eq.s32.totalorder %s34, 1
    %p230 = por %p228, %p229
    %p231 = scmp.ne.s32.totalorder %s222, %s223
    %p232 = scmp.eq.s32.totalorder %s34, 0
    %p233 = por %p231, %p232
    %p234 = scmp.ne.s32.totalorder %s222, %s223
    %p235 = scmp.eq.s32.totalorder %s35, 1
    %p236 = por %p234, %p235
    %p238 = scmp.ne.s32.totalorder %s223, %s237
    %p239 = scmp.eq.s32.totalorder %s35, 0
    %p240 = por %p238, %p239
    %s242 = sadd.s32 %s241, 1
    %p245 = scmp.eq.s32.totalorder %s29, 1
    %p246 = scmp.ne.s32.totalorder %s241, %s243
    %p247 = scmp.eq.s32.totalorder %s29, 0
    %p248 = por %p246, %p247
    %p249 = scmp.ne.s32.totalorder %s241, %s243
    %p250 = scmp.eq.s32.totalorder %s34, 1
    %p251 = por %p249, %p250
    %p252 = scmp.ne.s32.totalorder %s243, %s244
    %p253 = scmp.eq.s32.totalorder %s34, 0
    %p254 = por %p252, %p253
    %p255 = scmp.ne.s32.totalorder %s243, %s244
    %p256 = scmp.eq.s32.totalorder %s35, 1
    %p257 = por %p255, %p256
    %p259 = scmp.ne.s32.totalorder %s244, %s258
    %p260 = scmp.eq.s32.totalorder %s35, 0
    %p261 = por %p259, %p260
    %s263 = sadd.s32 %s262, 1
    %p266 = scmp.eq.s32.totalorder %s29, 1
    %p267 = scmp.ne.s32.totalorder %s262, %s264
    %p268 = scmp.eq.s32.totalorder %s29, 0
    %p269 = por %p267, %p268
    %p270 = scmp.ne.s32.totalorder %s262, %s264
    %p271 = scmp.eq.s32.totalorder %s34, 1
    %p272 = por %p270, %p271
    %p273 = scmp.ne.s32.totalorder %s264, %s265
    %p274 = scmp.eq.s32.totalorder %s34, 0
    %p275 = por %p273, %p274
    %p276 = scmp.ne.s32.totalorder %s264, %s265
    %p277 = scmp.eq.s32.totalorder %s35, 1
    %p278 = por %p276, %p277
    %p280 = scmp.ne.s32.totalorder %s265, %s279
    %p281 = scmp.eq.s32.totalorder %s35, 0
    %p282 = por %p280, %p281
    %s284 = sadd.s32 %s283, 1
    %p287 = scmp.eq.s32.totalorder %s29, 1
    %p288 = scmp.ne.s32.totalorder %s283, %s285
    %p289 = scmp.eq.s32.totalorder %s29, 0
    %p290 = por %p288, %p289
    %p291 = scmp.ne.s32.totalorder %s283, %s285
    %p292 = scmp.eq.s32.totalorder %s34, 1
    %p293 = por %p291, %p292
    %p294 = scmp.ne.s32.totalorder %s285, %s286
    %p295 = scmp.eq.s32.totalorder %s34, 0
    %p296 = por %p294, %p295
    %p297 = scmp.ne.s32.totalorder %s285, %s286
    %p298 = scmp.eq.s32.totalorder %s35, 1
    %p299 = por %p297, %p298
    %p301 = scmp.ne.s32.totalorder %s286, %s300
    %p302 = scmp.eq.s32.totalorder %s35, 0
    %p303 = por %p301, %p302
    %s305 = sadd.s32 %s304, 1
    %p308 = scmp.eq.s32.totalorder %s29, 1
    %p309 = scmp.ne.s32.totalorder %s304, %s306
    %p310 = scmp.eq.s32.totalorder %s29, 0
    %p311 = por %p309, %p310
    %p312 = scmp.ne.s32.totalorder %s304, %s306
    %p313 = scmp.eq.s32.totalorder %s34, 1
    %p314 = por %p312, %p313
    %p315 = scmp.ne.s32.totalorder %s306, %s307
    %p316 = scmp.eq.s32.totalorder %s34, 0
    %p317 = por %p315, %p316
    %p318 = scmp.ne.s32.totalorder %s306, %s307
    %p319 = scmp.eq.s32.totalorder %s35, 1
    %p320 = por %p318, %p319
    %p322 = scmp.ne.s32.totalorder %s307, %s321
    %p323 = scmp.eq.s32.totalorder %s35, 0
    %p324 = por %p322, %p323
    %s326 = sadd.s32 %s325, 1
    %p329 = scmp.eq.s32.totalorder %s29, 1
    %p330 = scmp.ne.s32.totalorder %s325, %s327
    %p331 = scmp.eq.s32.totalorder %s29, 0
    %p332 = por %p330, %p331
    %p333 = scmp.ne.s32.totalorder %s325, %s327
    %p334 = scmp.eq.s32.totalorder %s34, 1
    %p335 = por %p333, %p334
    %p336 = scmp.ne.s32.totalorder %s327, %s328
    %p337 = scmp.eq.s32.totalorder %s34, 0
    %p338 = por %p336, %p337
    %p339 = scmp.ne.s32.totalorder %s327, %s328
    %p340 = scmp.eq.s32.totalorder %s35, 1
    %p341 = por %p339, %p340
    %p343 = scmp.ne.s32.totalorder %s328, %s342
    %p344 = scmp.eq.s32.totalorder %s35, 0
    %p345 = por %p343, %p344
    %s347 = sadd.s32 %s346, 1
    %p350 = scmp.eq.s32.totalorder %s29, 1
    %p351 = scmp.ne.s32.totalorder %s346, %s348
    %p352 = scmp.eq.s32.totalorder %s29, 0
    %p353 = por %p351, %p352
    %p354 = scmp.ne.s32.totalorder %s346, %s348
    %p355 = scmp.eq.s32.totalorder %s34, 1
    %p356 = por %p354, %p355
    %p357 = scmp.ne.s32.totalorder %s348, %s349
    %p358 = scmp.eq.s32.totalorder %s34, 0
    %p359 = por %p357, %p358
    %p360 = scmp.ne.s32.totalorder %s348, %s349
    %p361 = scmp.eq.s32.totalorder %s35, 1
    %p362 = por %p360, %p361
    %p364 = scmp.ne.s32.totalorder %s349, %s363
    %p365 = scmp.eq.s32.totalorder %s35, 0
    %p366 = por %p364, %p365
    %s368 = sadd.s32 %s367, 1
    %p371 = scmp.eq.s32.totalorder %s29, 1
    %p372 = scmp.ne.s32.totalorder %s367, %s369
    %p373 = scmp.eq.s32.totalorder %s29, 0
    %p374 = por %p372, %p373
    %p375 = scmp.ne.s32.totalorder %s367, %s369
    %p376 = scmp.eq.s32.totalorder %s34, 1
    %p377 = por %p375, %p376
    %p378 = scmp.ne.s32.totalorder %s369, %s370
    %p379 = scmp.eq.s32.totalorder %s34, 0
    %p380 = por %p378, %p379
    %p381 = scmp.ne.s32.totalorder %s369, %s370
    %p382 = scmp.eq.s32.totalorder %s35, 1
    %p383 = por %p381, %p382
    %p385 = scmp.ne.s32.totalorder %s370, %s384
    %p386 = scmp.eq.s32.totalorder %s35, 0
    %p387 = por %p385, %p386
    %s389 = sadd.s32 %s388, 1
    %p392 = scmp.eq.s32.totalorder %s29, 1
    %p393 = scmp.ne.s32.totalorder %s388, %s390
    %p394 = scmp.eq.s32.totalorder %s29, 0
    %p395 = por %p393, %p394
    %p396 = scmp.ne.s32.totalorder %s388, %s390
    %p397 = scmp.eq.s32.totalorder %s34, 1
    %p398 = por %p396, %p397
    %p399 = scmp.ne.s32.totalorder %s390, %s391
    %p400 = scmp.eq.s32.totalorder %s34, 0
    %p401 = por %p399, %p400
    %p402 = scmp.ne.s32.totalorder %s390, %s391
    %p403 = scmp.eq.s32.totalorder %s35, 1
    %p404 = por %p402, %p403
    %p406 = scmp.ne.s32.totalorder %s391, %s405
    %p407 = scmp.eq.s32.totalorder %s35, 0
    %p408 = por %p406, %p407
    %s410 = sadd.s32 %s409, 1
    %p413 = scmp.eq.s32.totalorder %s29, 1
    %p414 = scmp.ne.s32.totalorder %s409, %s411
    %p415 = scmp.eq.s32.totalorder %s29, 0
    %p416 = por %p414, %p415
    %p417 = scmp.ne.s32.totalorder %s409, %s411
    %p418 = scmp.eq.s32.totalorder %s34, 1
    %p419 = por %p417, %p418
    %p420 = scmp.ne.s32.totalorder %s411, %s412
    %p421 = scmp.eq.s32.totalorder %s34, 0
    %p422 = por %p420, %p421
    %p423 = scmp.ne.s32.totalorder %s411, %s412
    %p424 = scmp.eq.s32.totalorder %s35, 1
    %p425 = por %p423, %p424
    %p427 = scmp.ne.s32.totalorder %s412, %s426
    %p428 = scmp.eq.s32.totalorder %s35, 0
    %p429 = por %p427, %p428
    %s431 = sadd.s32 %s430, 1
    %p434 = scmp.eq.s32.totalorder %s29, 1
    %p435 = scmp.ne.s32.totalorder %s430, %s432
    %p436 = scmp.eq.s32.totalorder %s29, 0
    %p437 = por %p435, %p436
    %p438 = scmp.ne.s32.totalorder %s430, %s432
    %p439 = scmp.eq.s32.totalorder %s34, 1
    %p440 = por %p438, %p439
    %p441 = scmp.ne.s32.totalorder %s432, %s433
    %p442 = scmp.eq.s32.totalorder %s34, 0
    %p443 = por %p441, %p442
    %p444 = scmp.ne.s32.totalorder %s432, %s433
    %p445 = scmp.eq.s32.totalorder %s35, 1
    %p446 = por %p444, %p445
    %p448 = scmp.ne.s32.totalorder %s433, %s447
    %p449 = scmp.eq.s32.totalorder %s35, 0
    %p450 = por %p448, %p449
    %s452 = sadd.s32 %s451, 1
    %p455 = scmp.eq.s32.totalorder %s29, 1
    %p456 = scmp.ne.s32.totalorder %s451, %s453
    %p457 = scmp.eq.s32.totalorder %s29, 0
    %p458 = por %p456, %p457
    %p459 = scmp.ne.s32.totalorder %s451, %s453
    %p460 = scmp.eq.s32.totalorder %s34, 1
    %p461 = por %p459, %p460
    %p462 = scmp.ne.s32.totalorder %s453, %s454
    %p463 = scmp.eq.s32.totalorder %s34, 0
    %p464 = por %p462, %p463
    %p465 = scmp.ne.s32.totalorder %s453, %s454
    %p466 = scmp.eq.s32.totalorder %s35, 1
    %p467 = por %p465, %p466
    %p469 = scmp.ne.s32.totalorder %s454, %s468
    %p470 = scmp.eq.s32.totalorder %s35, 0
    %p471 = por %p469, %p470
    %s473 = sadd.s32 %s472, 1
    %p476 = scmp.eq.s32.totalorder %s29, 1
    %p477 = scmp.ne.s32.totalorder %s472, %s474
    %p478 = scmp.eq.s32.totalorder %s29, 0
    %p479 = por %p477, %p478
    %p480 = scmp.ne.s32.totalorder %s472, %s474
    %p481 = scmp.eq.s32.totalorder %s34, 1
    %p482 = por %p480, %p481
    %p483 = scmp.ne.s32.totalorder %s474, %s475
    %p484 = scmp.eq.s32.totalorder %s34, 0
    %p485 = por %p483, %p484
    %p486 = scmp.ne.s32.totalorder %s474, %s475
    %p487 = scmp.eq.s32.totalorder %s35, 1
    %p488 = por %p486, %p487
    %p490 = scmp.ne.s32.totalorder %s475, %s489
    %p491 = scmp.eq.s32.totalorder %s35, 0
    %p492 = por %p490, %p491
    %s493 = ssub.s32 %s29, %s36
    %p494 = scmp.eq.s32.totalorder %s493, 0
    %s496 = sadd.s32 %s495, 1
    %s497 = scalar_select %p494, %s495, %s496
    %p500 = pneg %p494
    %p501 = scmp.eq.s32.totalorder %s29, 1
    %p502 = por %p500, %p501
    %p503 = scmp.ne.s32.totalorder %s495, %s498
    %p504 = scmp.eq.s32.totalorder %s29, 0
    %p505 = por %p503, %p504
    %p506 = scmp.ne.s32.totalorder %s495, %s498
    %p507 = scmp.eq.s32.totalorder %s34, 1
    %p508 = por %p506, %p507
    %p509 = scmp.ne.s32.totalorder %s498, %s499
    %p510 = scmp.eq.s32.totalorder %s34, 0
    %p511 = por %p509, %p510
    %p512 = scmp.ne.s32.totalorder %s498, %s499
    %p513 = scmp.eq.s32.totalorder %s35, 1
    %p514 = por %p512, %p513
    %p516 = scmp.ne.s32.totalorder %s499, %s515
    %p517 = scmp.eq.s32.totalorder %s35, 0
    %p518 = por %p516, %p517
    %p519 = scmp.le.s32.totalorder 1, %s29
    %p520 = scmp.lt.s32.totalorder %s29, 3
    %p521 = pnand %p519, %p520
    %p522 = pneg %p521
    // Predicated region
    $region9: #{model_forward_pallas.1} parent=5 // pred_check
      _
    $region10: #{model_forward_pallas.1} parent=5 // pred_check_branch
      %524 = sbr.rel (%p521) target = $region12
    $region11: #{model_forward_pallas.1} parent=5 // pred_region
      %s525 = ssub.s32 %s29, 1
      // Predicated region
      $region13: #{model_forward_pallas.1} parent=11 // pred_check
        %p526 = pneg %p128
      $region14: #{model_forward_pallas.1} parent=11 // pred_check_branch
        %528 = sbr.rel (%p526) target = $region16
      $region15: #{model_forward_pallas.1} parent=11 // pred_region
        _
      $region16: #{model_forward_pallas.1} parent=11 // pred_fallthru
        _
      // Predicated region
      $region17: #{model_forward_pallas.1} parent=11 // pred_check
        %p529 = pneg %p149
      $region18: #{model_forward_pallas.1} parent=11 // pred_check_branch
        %531 = sbr.rel (%p529) target = $region20
      $region19: #{model_forward_pallas.1} parent=11 // pred_region
        _
      $region20: #{model_forward_pallas.1} parent=11 // pred_fallthru
        _
      // Predicated region
      $region21: #{model_forward_pallas.1} parent=11 // pred_check
        %p532 = pneg %p170
      $region22: #{model_forward_pallas.1} parent=11 // pred_check_branch
        %534 = sbr.rel (%p532) target = $region24
      $region23: #{model_forward_pallas.1} parent=11 // pred_region
        _
      $region24: #{model_forward_pallas.1} parent=11 // pred_fallthru
        _
      // Predicated region
      $region25: #{model_forward_pallas.1} parent=11 // pred_check
        %p535 = pneg %p191
      $region26: #{model_forward_pallas.1} parent=11 // pred_check_branch
        %537 = sbr.rel (%p535) target = $region28
      $region27: #{model_forward_pallas.1} parent=11 // pred_region
        _
      $region28: #{model_forward_pallas.1} parent=11 // pred_fallthru
        _
      // Predicated region
      $region29: #{model_forward_pallas.1} parent=11 // pred_check
        %p538 = pneg %p212
      $region30: #{model_forward_pallas.1} parent=11 // pred_check_branch
        %540 = sbr.rel (%p538) target = $region32
      $region31: #{model_forward_pallas.1} parent=11 // pred_region
        _
      $region32: #{model_forward_pallas.1} parent=11 // pred_fallthru
        _
      // Predicated region
      $region33: #{model_forward_pallas.1} parent=11 // pred_check
        %p541 = pneg %p233
      $region34: #{model_forward_pallas.1} parent=11 // pred_check_branch
        %543 = sbr.rel (%p541) target = $region36
      $region35: #{model_forward_pallas.1} parent=11 // pred_region
        _
      $region36: #{model_forward_pallas.1} parent=11 // pred_fallthru
        _
      // Predicated region
      $region37: #{model_forward_pallas.1} parent=11 // pred_check
        %p544 = pneg %p254
      $region38: #{model_forward_pallas.1} parent=11 // pred_check_branch
        %546 = sbr.rel (%p544) target = $region40
      $region39: #{model_forward_pallas.1} parent=11 // pred_region
        _
      $region40: #{model_forward_pallas.1} parent=11 // pred_fallthru
        _
      // Predicated region
      $region41: #{model_forward_pallas.1} parent=11 // pred_check
        %p547 = pneg %p275
      $region42: #{model_forward_pallas.1} parent=11 // pred_check_branch
        %549 = sbr.rel (%p547) target = $region44
      $region43: #{model_forward_pallas.1} parent=11 // pred_region
        _
      $region44: #{model_forward_pallas.1} parent=11 // pred_fallthru
        _
      // Predicated region
      $region45: #{model_forward_pallas.1} parent=11 // pred_check
        %p550 = pneg %p296
      $region46: #{model_forward_pallas.1} parent=11 // pred_check_branch
        %552 = sbr.rel (%p550) target = $region48
      $region47: #{model_forward_pallas.1} parent=11 // pred_region
        _
      $region48: #{model_forward_pallas.1} parent=11 // pred_fallthru
        _
      // Predicated region
      $region49: #{model_forward_pallas.1} parent=11 // pred_check
        %p553 = pneg %p317
      $region50: #{model_forward_pallas.1} parent=11 // pred_check_branch
        %555 = sbr.rel (%p553) target = $region52
      $region51: #{model_forward_pallas.1} parent=11 // pred_region
        _
      $region52: #{model_forward_pallas.1} parent=11 // pred_fallthru
        _
      // Predicated region
      $region53: #{model_forward_pallas.1} parent=11 // pred_check
        %p556 = pneg %p338
      $region54: #{model_forward_pallas.1} parent=11 // pred_check_branch
        %558 = sbr.rel (%p556) target = $region56
      $region55: #{model_forward_pallas.1} parent=11 // pred_region
        _
      $region56: #{model_forward_pallas.1} parent=11 // pred_fallthru
        _
      // Predicated region
      $region57: #{model_forward_pallas.1} parent=11 // pred_check
        %p559 = pneg %p359
      $region58: #{model_forward_pallas.1} parent=11 // pred_check_branch
        %561 = sbr.rel (%p559) target = $region60
      $region59: #{model_forward_pallas.1} parent=11 // pred_region
        _
      $region60: #{model_forward_pallas.1} parent=11 // pred_fallthru
        _
      // Predicated region
      $region61: #{model_forward_pallas.1} parent=11 // pred_check
        %p562 = pneg %p380
      $region62: #{model_forward_pallas.1} parent=11 // pred_check_branch
        %564 = sbr.rel (%p562) target = $region64
      $region63: #{model_forward_pallas.1} parent=11 // pred_region
        _
      $region64: #{model_forward_pallas.1} parent=11 // pred_fallthru
        _
      // Predicated region
      $region65: #{model_forward_pallas.1} parent=11 // pred_check
        %p565 = pneg %p401
      $region66: #{model_forward_pallas.1} parent=11 // pred_check_branch
        %567 = sbr.rel (%p565) target = $region68
      $region67: #{model_forward_pallas.1} parent=11 // pred_region
        _
      $region68: #{model_forward_pallas.1} parent=11 // pred_fallthru
        _
      // Predicated region
      $region69: #{model_forward_pallas.1} parent=11 // pred_check
        %p568 = pneg %p422
      $region70: #{model_forward_pallas.1} parent=11 // pred_check_branch
        %570 = sbr.rel (%p568) target = $region72
      $region71: #{model_forward_pallas.1} parent=11 // pred_region
        _
      $region72: #{model_forward_pallas.1} parent=11 // pred_fallthru
        _
      // Predicated region
      $region73: #{model_forward_pallas.1} parent=11 // pred_check
        %p571 = pneg %p443
      $region74: #{model_forward_pallas.1} parent=11 // pred_check_branch
        %573 = sbr.rel (%p571) target = $region76
      $region75: #{model_forward_pallas.1} parent=11 // pred_region
        _
      $region76: #{model_forward_pallas.1} parent=11 // pred_fallthru
        _
      // Predicated region
      $region77: #{model_forward_pallas.1} parent=11 // pred_check
        %p574 = pneg %p464
      $region78: #{model_forward_pallas.1} parent=11 // pred_check_branch
        %576 = sbr.rel (%p574) target = $region80
      $region79: #{model_forward_pallas.1} parent=11 // pred_region
        _
      $region80: #{model_forward_pallas.1} parent=11 // pred_fallthru
        _
      // Predicated region
      $region81: #{model_forward_pallas.1} parent=11 // pred_check
        %p577 = pneg %p485
      $region82: #{model_forward_pallas.1} parent=11 // pred_check_branch
        %579 = sbr.rel (%p577) target = $region84
      $region83: #{model_forward_pallas.1} parent=11 // pred_region
        _
      $region84: #{model_forward_pallas.1} parent=11 // pred_fallthru
        _
    $region12: #{model_forward_pallas.1} parent=5 // pred_fallthru
      _
    %p580 = scmp.lt.s32.totalorder %s29, 2
    // Predicated region
    $region85: #{model_forward_pallas.1} parent=5 // pred_check
      %p581 = pneg %p580
    $region86: #{model_forward_pallas.1} parent=5 // pred_check_branch
      %583 = sbr.rel (%p581) target = $region88
    $region87: #{model_forward_pallas.1} parent=5 // pred_region
      // Predicated region
      $region89: #{model_forward_pallas.1} parent=87 // pred_check
        %p584 = pneg %p49
      $region90: #{model_forward_pallas.1} parent=87 // pred_check_branch
        %586 = sbr.rel (%p584) target = $region92
      $region91: #{model_forward_pallas.1} parent=87 // pred_region
        %p587 = scmp.lt.s32.totalorder %s29, 1
        %s588 = scalar_select %p587, %s29, 1
        %s589 = smul.addr %s588, 2
        %s590 = smul.addr %s589, 8
        %s591 = scalar_lea.vmem %s0, %s590
      $region92: #{model_forward_pallas.1} parent=87 // pred_fallthru
        _
      // Predicated region
      $region93: #{model_forward_pallas.1} parent=87 // pred_check
        %p592 = pneg %p75
      $region94: #{model_forward_pallas.1} parent=87 // pred_check_branch
        %594 = sbr.rel (%p592) target = $region96
      $region95: #{model_forward_pallas.1} parent=87 // pred_region
        %p595 = scmp.lt.s32.totalorder %s29, 1
        %s596 = scalar_select %p595, %s29, 1
        %s597 = smul.addr %s596, 2
        %s598 = smul.addr %s597, 8
        %s599 = scalar_lea.vmem %s1, %s598
      $region96: #{model_forward_pallas.1} parent=87 // pred_fallthru
        _
      // Predicated region
      $region97: #{model_forward_pallas.1} parent=87 // pred_check
        %p600 = pneg %p101
      $region98: #{model_forward_pallas.1} parent=87 // pred_check_branch
        %602 = sbr.rel (%p600) target = $region100
      $region99: #{model_forward_pallas.1} parent=87 // pred_region
        %p603 = scmp.lt.s32.totalorder %s29, 1
        %s604 = scalar_select %p603, %s29, 1
        %s605 = scalar_lea.vmem %s2, %s604
      $region100: #{model_forward_pallas.1} parent=87 // pred_fallthru
        _
    $region88: #{model_forward_pallas.1} parent=5 // pred_fallthru
      _
    %p606 = scmp.le.s32.totalorder 1, %s29
    %p607 = scmp.lt.s32.totalorder %s29, 3
    %p608 = pnand %p606, %p607
    %p609 = pneg %p608
    // Predicated region
    $region101: #{model_forward_pallas.1} parent=5 // pred_check
      _
    $region102: #{model_forward_pallas.1} parent=5 // pred_check_branch
      %611 = sbr.rel (%p608) target = $region104
    $region103: #{model_forward_pallas.1} parent=5 // pred_region
      %s612 = ssub.s32 %s29, 1
      %p613 = scmp.lt.s32.totalorder %s34, 1
      %s614 = scalar_select %p613, %s34, 1
      %s615 = smul.addr %s614, 2
      %s616 = smul.addr %s615, 8
      %s617 = scalar_lea.vmem %s0, %s616
      %p618 = pneg %p55
      %p619 = pneg %p52
      %p620 = scmp.lt.s32.totalorder %s34, 1
      %s621 = scalar_select %p620, %s34, 1
      %s622 = smul.addr %s621, 2
      %s623 = smul.addr %s622, 8
      %s624 = scalar_lea.vmem %s1, %s623
      %p625 = pneg %p81
      %p626 = pneg %p78
      %p627 = scmp.lt.s32.totalorder %s34, 1
      %s628 = scalar_select %p627, %s34, 1
      %s629 = scalar_lea.vmem %s2, %s628
      %p630 = pneg %p107
      %p631 = pneg %p104
      %p632 = pneg %p128
      %p633 = pneg %p125
      %p634 = pneg %p149
      %p635 = pneg %p146
      %p636 = pneg %p170
      %p637 = pneg %p167
      %p638 = pneg %p191
      %p639 = pneg %p188
      %p640 = pneg %p212
      %p641 = pneg %p209
      %p642 = pneg %p233
      %p643 = pneg %p230
      %p644 = pneg %p254
      %p645 = pneg %p251
      %p646 = pneg %p275
      %p647 = pneg %p272
      %p648 = pneg %p296
      %p649 = pneg %p293
      %p650 = pneg %p317
      %p651 = pneg %p314
      %p652 = pneg %p338
      %p653 = pneg %p335
      %p654 = pneg %p359
      %p655 = pneg %p356
      %p656 = pneg %p380
      %p657 = pneg %p377
      %p658 = pneg %p401
      %p659 = pneg %p398
      %p660 = pneg %p422
      %p661 = pneg %p419
      %p662 = pneg %p443
      %p663 = pneg %p440
      %p664 = pneg %p464
      %p665 = pneg %p461
      %p666 = pneg %p485
      %p667 = pneg %p482
      %p668 = pneg %p511
      %p669 = pneg %p508
      %p670 = scmp.lt.s32.totalorder %s34, 1
      %s671 = scalar_select %p670, %s34, 1
      %s672 = scalar_lea.vmem %s21, %s671
      %p673 = scmp.lt.s32.totalorder %s34, 1
      %s674 = scalar_select %p673, %s34, 1
      %s675 = smul.addr %s674, 2
      %s676 = smul.addr %s675, 8
      %s677 = scalar_lea.vmem %s0, %s676
      %p678 = scmp.lt.s32.totalorder %s34, 1
      %s679 = scalar_select %p678, %s34, 1
      %s680 = smul.addr %s679, 2
      %s681 = smul.addr %s680, 8
      %s682 = scalar_lea.vmem %s1, %s681
      %p683 = scmp.lt.s32.totalorder %s34, 1
      %s684 = scalar_select %p683, %s34, 1
      %s685 = scalar_lea.vmem %s2, %s684
      %p686 = scmp.lt.s32.totalorder %s34, 1
      %s687 = scalar_select %p686, %s34, 1
      %s688 = scalar_lea.vmem %s21, %s687
      %v689 = vld [vmem:[%s677] sm:$0xff]
      %v690 = vld [vmem:[%s677 + $0x8] sm:$0xff]
      %v691 = vld [vmem:[%s682] sm:$0xff]
      %v692 = vld [vmem:[%s682 + $0x8] sm:$0xff]
      %v693 = vlaneseq
      %v694 = vand.u32 %v693, 127
      %695 = vset.pattern.permute.xlu0 0
      %696 = vperm.xlu0 %695, %v689
      %v697 = vpop.permute.xlu0 %696
      %698 = vset.pattern.permute.xlu0 0
      %699 = vperm.xlu0 %698, %v690
      %v700 = vpop.permute.xlu0 %699
      %vm701 = vcmp.eq.s32.totalorder %v697, %v694
      %vm702 = vcmp.eq.s32.totalorder %v700, %v694
      %v703 = vsel %vm701, 1, 0
      %v704 = vsel %vm702, 1, 0
      %v705 = vcvt.s32.f32 %v703
      %v706 = vcvt.s32.f32 %v704
      %707 = vset.pattern.permute.xlu0 0
      %708 = vperm.xlu0 %707, %v691
      %v709 = vpop.permute.xlu0 %708
      %710 = vset.pattern.permute.xlu0 0
      %711 = vperm.xlu0 %710, %v692
      %v712 = vpop.permute.xlu0 %711
      %vm713 = vcmp.eq.s32.totalorder %v709, %v694
      %vm714 = vcmp.eq.s32.totalorder %v712, %v694
      %v715 = vsel %vm713, 1, 0
      %v716 = vsel %vm714, 1, 0
      %v717 = vcvt.s32.f32 %v715
      %v718 = vcvt.s32.f32 %v716
      %v719 = vld [vmem:[%s3] sm:$0xff]
      %v720 = vld [vmem:[%s3 + $0x8] sm:$0xff]
      %v721 = vld [vmem:[%s3 + $0x10] sm:$0xff]
      %v722 = vld [vmem:[%s3 + $0x18] sm:$0x3f]
      %v723 = vld [vmem:[%s4] sm:$0x1f]
      %vm724 = vcmask 39936
      %v726 = vsel %vm724, %v717, 0
      %v729 = vsel %vm724, %v718, 0
      %vm731 = vcmask 1044480
      %v733 = vsel %vm731, %v723, 0
      %735 = vmatpush.msra.mxu0 0.0
      %736 = vmatpush.msra.mxu0 0.0
      %737 = vmatpush.msra.mxu0 0.0
      %738 = vmatpush.msra.mxu0 0.0
      %739 = vmatpush.msra.mxu0 0.0
      %740 = vmatpush.msra.mxu0 0.0
      %741 = vmatpush.msra.mxu0 0.0
      %742 = vmatpush.msra.mxu0 0.0
      %743 = vmatpush.msra.mxu0 0.0
      %744 = vmatpush.msra.mxu0 0.0
      %745 = vmatpush.msra.mxu0 0.0
      %746 = vmatpush.msra.mxu0 0.0
      %747 = vmatpush.msra.mxu0 0.0
      %748 = vmatpush.msra.mxu0 0.0
      %749 = vmatpush.msra.mxu0 0.0
      %v750 = vand.u32 %v733, 4294901760
      %751 = vmatpush.msra.mxu0 %v750
      %v752 = vand.u32 %v726, 4294901760
      %v753 = vsub.f32 %v726, %v752
      %v754 = vand.u32 %v753, 4294901760
      %v755 = vsub.f32 %v753, %v754
      %v756 = vand.u32 %v755, 4294901760
      %757 = vmatmul.f32.gmra.mxu0 %v756
      %v758 = vpop.f32.mrf.mxu0
      %v759 = vadd.f32 0.0, %v758
      %v760 = vand.u32 %v729, 4294901760
      %v761 = vsub.f32 %v729, %v760
      %v762 = vand.u32 %v761, 4294901760
      %v763 = vsub.f32 %v761, %v762
      %v764 = vand.u32 %v763, 4294901760
      %765 = vmatmul.f32.gmra.mxu0 %v764
      %v766 = vpop.f32.mrf.mxu0
      %v767 = vadd.f32 0.0, %v766
      %768 = vdwg.mxu0
      %769 = vmatpush.msra.mxu0 0.0
      %770 = vmatpush.msra.mxu0 0.0
      %771 = vmatpush.msra.mxu0 0.0
      %772 = vmatpush.msra.mxu0 0.0
      %773 = vmatpush.msra.mxu0 0.0
      %774 = vmatpush.msra.mxu0 0.0
      %775 = vmatpush.msra.mxu0 0.0
      %776 = vmatpush.msra.mxu0 0.0
      %777 = vmatpush.msra.mxu0 0.0
      %778 = vmatpush.msra.mxu0 0.0
      %779 = vmatpush.msra.mxu0 0.0
      %780 = vmatpush.msra.mxu0 0.0
      %781 = vmatpush.msra.mxu0 0.0
      %782 = vmatpush.msra.mxu0 0.0
      %783 = vmatpush.msra.mxu0 0.0
      %v784 = vand.u32 %v733, 4294901760
      %v785 = vsub.f32 %v733, %v784
      %v786 = vand.u32 %v785, 4294901760
      %v787 = vsub.f32 %v785, %v786
      %v788 = vand.u32 %v787, 4294901760
      %789 = vmatpush.msra.mxu0 %v788
      %v790 = vand.u32 %v726, 4294901760
      %791 = vmatmul.f32.gmra.mxu0 %v790
      %v792 = vpop.f32.mrf.mxu0
      %v793 = vadd.f32 %v759, %v792
      %v794 = vand.u32 %v729, 4294901760
      %795 = vmatmul.f32.gmra.mxu0 %v794
      %v796 = vpop.f32.mrf.mxu0
      %v797 = vadd.f32 %v767, %v796
      %798 = vdwg.mxu0
      %799 = vmatpush.msra.mxu0 0.0
      %800 = vmatpush.msra.mxu0 0.0
      %801 = vmatpush.msra.mxu0 0.0
      %802 = vmatpush.msra.mxu0 0.0
      %803 = vmatpush.msra.mxu0 0.0
      %804 = vmatpush.msra.mxu0 0.0
      %805 = vmatpush.msra.mxu0 0.0
      %806 = vmatpush.msra.mxu0 0.0
      %807 = vmatpush.msra.mxu0 0.0
      %808 = vmatpush.msra.mxu0 0.0
      %809 = vmatpush.msra.mxu0 0.0
      %810 = vmatpush.msra.mxu0 0.0
      %811 = vmatpush.msra.mxu0 0.0
      %812 = vmatpush.msra.mxu0 0.0
      %813 = vmatpush.msra.mxu0 0.0
      %v814 = vand.u32 %v733, 4294901760
      %v815 = vsub.f32 %v733, %v814
      %816 = vmatpush.msra.mxu0 %v815
      %v817 = vand.u32 %v726, 4294901760
      %v818 = vsub.f32 %v726, %v817
      %819 = vmatmul.f32.gmra.mxu0 %v818
      %v820 = vpop.f32.mrf.mxu0
      %v821 = vadd.f32 %v793, %v820
      %v822 = vand.u32 %v729, 4294901760
      %v823 = vsub.f32 %v729, %v822
      %824 = vmatmul.f32.gmra.mxu0 %v823
      %v825 = vpop.f32.mrf.mxu0
      %v826 = vadd.f32 %v797, %v825
      %827 = vdwg.mxu0
      %828 = vmatpush.msra.mxu0 0.0
      %829 = vmatpush.msra.mxu0 0.0
      %830 = vmatpush.msra.mxu0 0.0
      %831 = vmatpush.msra.mxu0 0.0
      %832 = vmatpush.msra.mxu0 0.0
      %833 = vmatpush.msra.mxu0 0.0
      %834 = vmatpush.msra.mxu0 0.0
      %835 = vmatpush.msra.mxu0 0.0
      %836 = vmatpush.msra.mxu0 0.0
      %837 = vmatpush.msra.mxu0 0.0
      %838 = vmatpush.msra.mxu0 0.0
      %839 = vmatpush.msra.mxu0 0.0
      %840 = vmatpush.msra.mxu0 0.0
      %841 = vmatpush.msra.mxu0 0.0
      %842 = vmatpush.msra.mxu0 0.0
      %v843 = vand.u32 %v733, 4294901760
      %844 = vmatpush.msra.mxu0 %v843
      %v845 = vand.u32 %v726, 4294901760
      %v846 = vsub.f32 %v726, %v845
      %v847 = vand.u32 %v846, 4294901760
      %848 = vmatmul.f32.gmra.mxu0 %v847
      %v849 = vpop.f32.mrf.mxu0
      %v850 = vadd.f32 %v821, %v849
      %v851 = vand.u32 %v729, 4294901760
      %v852 = vsub.f32 %v729, %v851
      %v853 = vand.u32 %v852, 4294901760
      %854 = vmatmul.f32.gmra.mxu0 %v853
      %v855 = vpop.f32.mrf.mxu0
      %v856 = vadd.f32 %v826, %v855
      %857 = vdwg.mxu0
      %858 = vmatpush.msra.mxu0 0.0
      %859 = vmatpush.msra.mxu0 0.0
      %860 = vmatpush.msra.mxu0 0.0
      %861 = vmatpush.msra.mxu0 0.0
      %862 = vmatpush.msra.mxu0 0.0
      %863 = vmatpush.msra.mxu0 0.0
      %864 = vmatpush.msra.mxu0 0.0
      %865 = vmatpush.msra.mxu0 0.0
      %866 = vmatpush.msra.mxu0 0.0
      %867 = vmatpush.msra.mxu0 0.0
      %868 = vmatpush.msra.mxu0 0.0
      %869 = vmatpush.msra.mxu0 0.0
      %870 = vmatpush.msra.mxu0 0.0
      %871 = vmatpush.msra.mxu0 0.0
      %872 = vmatpush.msra.mxu0 0.0
      %v873 = vand.u32 %v733, 4294901760
      %v874 = vsub.f32 %v733, %v873
      %v875 = vand.u32 %v874, 4294901760
      %876 = vmatpush.msra.mxu0 %v875
      %v877 = vand.u32 %v726, 4294901760
      %878 = vmatmul.f32.gmra.mxu0 %v877
      %v879 = vpop.f32.mrf.mxu0
      %v880 = vadd.f32 %v850, %v879
      %v881 = vand.u32 %v729, 4294901760
      %882 = vmatmul.f32.gmra.mxu0 %v881
      %v883 = vpop.f32.mrf.mxu0
      %v884 = vadd.f32 %v856, %v883
      %885 = vdwg.mxu0
      %886 = vmatpush.msra.mxu0 0.0
      %887 = vmatpush.msra.mxu0 0.0
      %888 = vmatpush.msra.mxu0 0.0
      %889 = vmatpush.msra.mxu0 0.0
      %890 = vmatpush.msra.mxu0 0.0
      %891 = vmatpush.msra.mxu0 0.0
      %892 = vmatpush.msra.mxu0 0.0
      %893 = vmatpush.msra.mxu0 0.0
      %894 = vmatpush.msra.mxu0 0.0
      %895 = vmatpush.msra.mxu0 0.0
      %896 = vmatpush.msra.mxu0 0.0
      %897 = vmatpush.msra.mxu0 0.0
      %898 = vmatpush.msra.mxu0 0.0
      %899 = vmatpush.msra.mxu0 0.0
      %900 = vmatpush.msra.mxu0 0.0
      %v901 = vand.u32 %v733, 4294901760
      %902 = vmatpush.msra.mxu0 %v901
      %v903 = vand.u32 %v726, 4294901760
      %904 = vmatmul.f32.gmra.mxu0 %v903
      %v905 = vpop.f32.mrf.mxu0
      %v906 = vadd.f32 %v880, %v905
      %v907 = vand.u32 %v729, 4294901760
      %908 = vmatmul.f32.gmra.mxu0 %v907
      %v909 = vpop.f32.mrf.mxu0
      %v910 = vadd.f32 %v884, %v909
      %911 = vdwg.mxu0
      %vm912 = vcmask 244736
      %v914 = vsel %vm912, %v705, 0
      %v917 = vsel %vm912, %v706, 0
      %vm919 = vcmask 1045504
      %v921 = vsel %vm919, %v722, 0
      %923 = vmatpush.msra.mxu0 0.0
      %924 = vmatpush.msra.mxu0 0.0
      %925 = vmatpush.msra.mxu0 0.0
      %926 = vmatpush.msra.mxu0 0.0
      %927 = vmatpush.msra.mxu0 0.0
      %928 = vmatpush.msra.mxu0 0.0
      %929 = vmatpush.msra.mxu0 0.0
      %930 = vmatpush.msra.mxu0 0.0
      %931 = vmatpush.msra.mxu0 0.0
      %932 = vmatpush.msra.mxu0 0.0
      %933 = vmatpush.msra.mxu0 0.0
      %934 = vmatpush.msra.mxu0 0.0
      %v935 = vand.u32 %v921, 4294901760
      %936 = vmatpush.msra.mxu0 %v935
      %v937 = vand.u32 %v721, 4294901760
      %938 = vmatpush.msra.mxu0 %v937
      %v939 = vand.u32 %v720, 4294901760
      %940 = vmatpush.msra.mxu0 %v939
      %v941 = vand.u32 %v719, 4294901760
      %942 = vmatpush.msra.mxu0 %v941
      %v943 = vand.u32 %v914, 4294901760
      %v944 = vsub.f32 %v914, %v943
      %v945 = vand.u32 %v944, 4294901760
      %v946 = vsub.f32 %v944, %v945
      %v947 = vand.u32 %v946, 4294901760
      %948 = vmatmul.f32.gmra.mxu0 %v947
      %v949 = vpop.f32.mrf.mxu0
      %v950 = vadd.f32 %v906, %v949
      %v951 = vand.u32 %v917, 4294901760
      %v952 = vsub.f32 %v917, %v951
      %v953 = vand.u32 %v952, 4294901760
      %v954 = vsub.f32 %v952, %v953
      %v955 = vand.u32 %v954, 4294901760
      %956 = vmatmul.f32.gmra.mxu0 %v955
      %v957 = vpop.f32.mrf.mxu0
      %v958 = vadd.f32 %v910, %v957
      %959 = vdwg.mxu0
      %960 = vmatpush.msra.mxu0 0.0
      %961 = vmatpush.msra.mxu0 0.0
      %962 = vmatpush.msra.mxu0 0.0
      %963 = vmatpush.msra.mxu0 0.0
      %964 = vmatpush.msra.mxu0 0.0
      %965 = vmatpush.msra.mxu0 0.0
      %966 = vmatpush.msra.mxu0 0.0
      %967 = vmatpush.msra.mxu0 0.0
      %968 = vmatpush.msra.mxu0 0.0
      %969 = vmatpush.msra.mxu0 0.0
      %970 = vmatpush.msra.mxu0 0.0
      %971 = vmatpush.msra.mxu0 0.0
      %v972 = vand.u32 %v921, 4294901760
      %v973 = vsub.f32 %v921, %v972
      %v974 = vand.u32 %v973, 4294901760
      %v975 = vsub.f32 %v973, %v974
      %v976 = vand.u32 %v975, 4294901760
      %977 = vmatpush.msra.mxu0 %v976
      %v978 = vand.u32 %v721, 4294901760
      %v979 = vsub.f32 %v721, %v978
      %v980 = vand.u32 %v979, 4294901760
      %v981 = vsub.f32 %v979, %v980
      %v982 = vand.u32 %v981, 4294901760
      %983 = vmatpush.msra.mxu0 %v982
      %v984 = vand.u32 %v720, 4294901760
      %v985 = vsub.f32 %v720, %v984
      %v986 = vand.u32 %v985, 4294901760
      %v987 = vsub.f32 %v985, %v986
      %v988 = vand.u32 %v987, 4294901760
      %989 = vmatpush.msra.mxu0 %v988
      %v990 = vand.u32 %v719, 4294901760
      %v991 = vsub.f32 %v719, %v990
      %v992 = vand.u32 %v991, 4294901760
      %v993 = vsub.f32 %v991, %v992
      %v994 = vand.u32 %v993, 4294901760
      %995 = vmatpush.msra.mxu0 %v994
      %v996 = vand.u32 %v914, 4294901760
      %997 = vmatmul.f32.gmra.mxu0 %v996
      %v998 = vpop.f32.mrf.mxu0
      %v999 = vadd.f32 %v950, %v998
      %v1000 = vand.u32 %v917, 4294901760
      %1001 = vmatmul.f32.gmra.mxu0 %v1000
      %v1002 = vpop.f32.mrf.mxu0
      %v1003 = vadd.f32 %v958, %v1002
      %1004 = vdwg.mxu0
      %1005 = vmatpush.msra.mxu0 0.0
      %1006 = vmatpush.msra.mxu0 0.0
      %1007 = vmatpush.msra.mxu0 0.0
      %1008 = vmatpush.msra.mxu0 0.0
      %1009 = vmatpush.msra.mxu0 0.0
      %1010 = vmatpush.msra.mxu0 0.0
      %1011 = vmatpush.msra.mxu0 0.0
      %1012 = vmatpush.msra.mxu0 0.0
      %1013 = vmatpush.msra.mxu0 0.0
      %1014 = vmatpush.msra.mxu0 0.0
      %1015 = vmatpush.msra.mxu0 0.0
      %1016 = vmatpush.msra.mxu0 0.0
      %v1017 = vand.u32 %v921, 4294901760
      %v1018 = vsub.f32 %v921, %v1017
      %1019 = vmatpush.msra.mxu0 %v1018
      %v1020 = vand.u32 %v721, 4294901760
      %v1021 = vsub.f32 %v721, %v1020
      %1022 = vmatpush.msra.mxu0 %v1021
      %v1023 = vand.u32 %v720, 4294901760
      %v1024 = vsub.f32 %v720, %v1023
      %1025 = vmatpush.msra.mxu0 %v1024
      %v1026 = vand.u32 %v719, 4294901760
      %v1027 = vsub.f32 %v719, %v1026
      %1028 = vmatpush.msra.mxu0 %v1027
      %v1029 = vand.u32 %v914, 4294901760
      %v1030 = vsub.f32 %v914, %v1029
      %1031 = vmatmul.f32.gmra.mxu0 %v1030
      %v1032 = vpop.f32.mrf.mxu0
      %v1033 = vadd.f32 %v999, %v1032
      %v1034 = vand.u32 %v917, 4294901760
      %v1035 = vsub.f32 %v917, %v1034
      %1036 = vmatmul.f32.gmra.mxu0 %v1035
      %v1037 = vpop.f32.mrf.mxu0
      %v1038 = vadd.f32 %v1003, %v1037
      %1039 = vdwg.mxu0
      %1040 = vmatpush.msra.mxu0 0.0
      %1041 = vmatpush.msra.mxu0 0.0
      %1042 = vmatpush.msra.mxu0 0.0
      %1043 = vmatpush.msra.mxu0 0.0
      %1044 = vmatpush.msra.mxu0 0.0
      %1045 = vmatpush.msra.mxu0 0.0
      %1046 = vmatpush.msra.mxu0 0.0
      %1047 = vmatpush.msra.mxu0 0.0
      %1048 = vmatpush.msra.mxu0 0.0
      %1049 = vmatpush.msra.mxu0 0.0
      %1050 = vmatpush.msra.mxu0 0.0
      %1051 = vmatpush.msra.mxu0 0.0
      %v1052 = vand.u32 %v921, 4294901760
      %1053 = vmatpush.msra.mxu0 %v1052
      %v1054 = vand.u32 %v721, 4294901760
      %1055 = vmatpush.msra.mxu0 %v1054
      %v1056 = vand.u32 %v720, 4294901760
      %1057 = vmatpush.msra.mxu0 %v1056
      %v1058 = vand.u32 %v719, 4294901760
      %1059 = vmatpush.msra.mxu0 %v1058
      %v1060 = vand.u32 %v914, 4294901760
      %v1061 = vsub.f32 %v914, %v1060
      %v1062 = vand.u32 %v1061, 4294901760
      %1063 = vmatmul.f32.gmra.mxu0 %v1062
      %v1064 = vpop.f32.mrf.mxu0
      %v1065 = vadd.f32 %v1033, %v1064
      %v1066 = vand.u32 %v917, 4294901760
      %v1067 = vsub.f32 %v917, %v1066
      %v1068 = vand.u32 %v1067, 4294901760
      %1069 = vmatmul.f32.gmra.mxu0 %v1068
      %v1070 = vpop.f32.mrf.mxu0
      %v1071 = vadd.f32 %v1038, %v1070
      %1072 = vdwg.mxu0
      %1073 = vmatpush.msra.mxu0 0.0
      %1074 = vmatpush.msra.mxu0 0.0
      %1075 = vmatpush.msra.mxu0 0.0
      %1076 = vmatpush.msra.mxu0 0.0
      %1077 = vmatpush.msra.mxu0 0.0
      %1078 = vmatpush.msra.mxu0 0.0
      %1079 = vmatpush.msra.mxu0 0.0
      %1080 = vmatpush.msra.mxu0 0.0
      %1081 = vmatpush.msra.mxu0 0.0
      %1082 = vmatpush.msra.mxu0 0.0
      %1083 = vmatpush.msra.mxu0 0.0
      %1084 = vmatpush.msra.mxu0 0.0
      %v1085 = vand.u32 %v921, 4294901760
      %v1086 = vsub.f32 %v921, %v1085
      %v1087 = vand.u32 %v1086, 4294901760
      %1088 = vmatpush.msra.mxu0 %v1087
      %v1089 = vand.u32 %v721, 4294901760
      %v1090 = vsub.f32 %v721, %v1089
      %v1091 = vand.u32 %v1090, 4294901760
      %1092 = vmatpush.msra.mxu0 %v1091
      %v1093 = vand.u32 %v720, 4294901760
      %v1094 = vsub.f32 %v720, %v1093
      %v1095 = vand.u32 %v1094, 4294901760
      %1096 = vmatpush.msra.mxu0 %v1095
      %v1097 = vand.u32 %v719, 4294901760
      %v1098 = vsub.f32 %v719, %v1097
      %v1099 = vand.u32 %v1098, 4294901760
      %1100 = vmatpush.msra.mxu0 %v1099
      %v1101 = vand.u32 %v914, 4294901760
      %1102 = vmatmul.f32.gmra.mxu0 %v1101
      %v1103 = vpop.f32.mrf.mxu0
      %v1104 = vadd.f32 %v1065, %v1103
      %v1105 = vand.u32 %v917, 4294901760
      %1106 = vmatmul.f32.gmra.mxu0 %v1105
      %v1107 = vpop.f32.mrf.mxu0
      %v1108 = vadd.f32 %v1071, %v1107
      %1109 = vdwg.mxu0
      %1110 = vmatpush.msra.mxu0 0.0
      %1111 = vmatpush.msra.mxu0 0.0
      %1112 = vmatpush.msra.mxu0 0.0
      %1113 = vmatpush.msra.mxu0 0.0
      %1114 = vmatpush.msra.mxu0 0.0
      %1115 = vmatpush.msra.mxu0 0.0
      %1116 = vmatpush.msra.mxu0 0.0
      %1117 = vmatpush.msra.mxu0 0.0
      %1118 = vmatpush.msra.mxu0 0.0
      %1119 = vmatpush.msra.mxu0 0.0
      %1120 = vmatpush.msra.mxu0 0.0
      %1121 = vmatpush.msra.mxu0 0.0
      %v1122 = vand.u32 %v921, 4294901760
      %1123 = vmatpush.msra.mxu0 %v1122
      %v1124 = vand.u32 %v721, 4294901760
      %1125 = vmatpush.msra.mxu0 %v1124
      %v1126 = vand.u32 %v720, 4294901760
      %1127 = vmatpush.msra.mxu0 %v1126
      %v1128 = vand.u32 %v719, 4294901760
      %1129 = vmatpush.msra.mxu0 %v1128
      %v1130 = vand.u32 %v914, 4294901760
      %1131 = vmatmul.f32.gmra.mxu0 %v1130
      %v1132 = vpop.f32.mrf.mxu0
      %v1133 = vadd.f32 %v1104, %v1132
      %v1134 = vand.u32 %v917, 4294901760
      %1135 = vmatmul.f32.gmra.mxu0 %v1134
      %v1136 = vpop.f32.mrf.mxu0
      %v1137 = vadd.f32 %v1108, %v1136
      %1138 = vdwg.mxu0
      %v1139 = vlaneseq
      %v1140 = vshrl.u32 %v1139, 7
      %v1141 = vadd.s32 %v1140, 8
      %vm1142 = vcmp.eq.s32.totalorder %v1140, 0
      %vm1143 = vcmp.eq.s32.totalorder %v1141, 0
      %v1144 = vsel %vm1142, 1, 0
      %v1145 = vsel %vm1143, 1, 0
      %v1146 = vcvt.s32.f32 %v1144
      %v1147 = vcvt.s32.f32 %v1145
      %v1148 = vld [vmem:[%s5] sm:$0x1]
      %v1150 = vperm.slane %v1148, 0
      %v1152 = vmul.f32 %v1146, %v1150
      %v1153 = vmul.f32 %v1147, %v1150
      %v1154 = vadd.f32 %v1133, %v1152
      %v1155 = vadd.f32 %v1137, %v1153
      %v1156 = vld [vmem:[%s6] sm:$0xff]
      %v1157 = vld [vmem:[%s6 + $0x8] sm:$0xff]
      %v1158 = vadd.f32 %v1154, %v1156
      %v1159 = vadd.f32 %v1155, %v1157
      %v1160 = vld [vmem:[%s685] sm:$0x1]
      %1161 = vset.pattern.permute.xlu0 0
      %1162 = vperm.xlu0 %1161, %v1160
      %v1163 = vpop.permute.xlu0 %1162
      %v1164 = vperm.slane %v1163, 0
      %vm1165 = vcmp.ge.s32.totalorder %v694, %v1164
      %v1166 = vsel %vm1165, -1e+30, 0.0
      %v1167 = vld [vmem:[%s7] sm:$0xff]
      %v1168 = vld [vmem:[%s7 + $0x8] sm:$0xff]
      %v1169 = vld [vmem:[%s7 + $0x10] sm:$0xff]
      %v1170 = vld [vmem:[%s7 + $0x18] sm:$0xff]
      %v1171 = vld [vmem:[%s8] sm:$0x1]
      %v1173 = vperm.slane %v1171, 0
      %vm1175 = vcmask 261120
      %v1177 = vsel %vm1175, %v1158, 0
      %v1180 = vsel %vm1175, %v1159, 0
      %1182 = vmatpush.msra.mxu0 0.0
      %1183 = vmatpush.msra.mxu0 0.0
      %1184 = vmatpush.msra.mxu0 0.0
      %1185 = vmatpush.msra.mxu0 0.0
      %1186 = vmatpush.msra.mxu0 0.0
      %1187 = vmatpush.msra.mxu0 0.0
      %1188 = vmatpush.msra.mxu0 0.0
      %1189 = vmatpush.msra.mxu0 0.0
      %1190 = vmatpush.msra.mxu0 0.0
      %1191 = vmatpush.msra.mxu0 0.0
      %1192 = vmatpush.msra.mxu0 0.0
      %1193 = vmatpush.msra.mxu0 0.0
      %1194 = vmatpush.msra.mxu0 %v1170
      %1195 = vmatpush.msra.mxu0 %v1169
      %1196 = vmatpush.msra.mxu0 %v1168
      %1197 = vmatpush.msra.mxu0 %v1167
      %1198 = vmatmul.f32.gmra.mxu0 %v1177
      %v1199 = vpop.f32.mrf.mxu0
      %v1200 = vadd.f32 %v1173, %v1199
      %1201 = vmatmul.f32.gmra.mxu0 %v1180
      %v1202 = vpop.f32.mrf.mxu0
      %v1203 = vadd.f32 %v1173, %v1202
      %1204 = vdwg.mxu0
      %v1205 = vmul.f32 %v1200, 0.35355338
      %v1206 = vmul.f32 %v1203, 0.35355338
      %1209 = vrot.lane.b32.xlu0 %v1200, 96
      %v1210 = vpop.permute.xlu0 %1209
      %1211 = vrot.lane.b32.xlu0 %v1203, 96
      %v1212 = vpop.permute.xlu0 %1211
      %vm1213 = vcmask 64512
      %v1215 = vsel %vm1213, %v1205, 0
      %v1218 = vsel %vm1213, %v1206, 0
      %v1220 = vsel %vm1213, %v1210, 0
      %v1222 = vsel %vm1213, %v1212, 0
      %1224 = vmatpush.xpose.msra.mxu0 0.0
      %1225 = vmatpush.xpose.msra.mxu0 0.0
      %1226 = vmatpush.xpose.msra.mxu0 0.0
      %1227 = vmatpush.xpose.msra.mxu0 0.0
      %1228 = vmatpush.xpose.msra.mxu0 0.0
      %1229 = vmatpush.xpose.msra.mxu0 0.0
      %1230 = vmatpush.xpose.msra.mxu0 0.0
      %1231 = vmatpush.xpose.msra.mxu0 0.0
      %1232 = vmatpush.xpose.msra.mxu0 0.0
      %1233 = vmatpush.xpose.msra.mxu0 0.0
      %1234 = vmatpush.xpose.msra.mxu0 0.0
      %1235 = vmatpush.xpose.msra.mxu0 0.0
      %1236 = vmatpush.xpose.msra.mxu0 0.0
      %1237 = vmatpush.xpose.msra.mxu0 0.0
      %1238 = vmatpush.xpose.msra.mxu0 %v1222
      %1239 = vmatpush.xpose.msra.mxu0 %v1220
      %1240 = vmatmul.f32.gmra.mxu0 %v1215
      %v1241 = vpop.f32.mrf.mxu0
      %v1242 = vadd.f32 %v1166, %v1241
      %1243 = vmatmul.f32.gmra.mxu0 %v1218
      %v1244 = vpop.f32.mrf.mxu0
      %v1245 = vadd.f32 %v1166, %v1244
      %1246 = vdwg.mxu0
      %vm1247 = vcmask 130048
      %v1248 = vsel %vm1247, %v1242, -inf
      %1249 = vmax.xlane.f32.xlu0 %v1248
      %v1250 = vpop.xlane.xlu0 %1249
      %v1251 = vsel %vm1247, %v1245, -inf
      %1252 = vmax.xlane.f32.xlu0 %v1251
      %v1253 = vpop.xlane.xlu0 %1252
      %v1254 = vsub.f32 %v1242, %v1250
      %v1255 = vsub.f32 %v1245, %v1253
      %v1256 = vmul.f32 %v1254, 1.442695
      %v1257 = vpow.pop %v1256
      %v1258 = vmul.f32 %v1255, 1.442695
      %v1259 = vpow.pop %v1258
      %v1260 = vsel %vm1247, %v1257, 0.0
      %1261 = vadd.xlane.f32.xlu0 %v1260
      %v1262 = vpop.xlane.xlu0 %1261
      %v1263 = vsel %vm1247, %v1259, 0.0
      %1264 = vadd.xlane.f32.xlu0 %v1263
      %v1265 = vpop.xlane.xlu0 %1264
      %v1266 = vrcp.pop %v1262
      %v1267 = vrcp.pop %v1265
      %v1268 = vmul.f32 %v1257, %v1266
      %v1269 = vmul.f32 %v1259, %v1267
      %1270 = vrot.lane.b32.xlu0 %v1200, 64
      %v1271 = vpop.permute.xlu0 %1270
      %1272 = vrot.lane.b32.xlu0 %v1203, 64
      %v1273 = vpop.permute.xlu0 %1272
      %v1277 = vsel %vm1247, %v1268, 0
      %v1280 = vsel %vm1247, %v1269, 0
      %1282 = vmatpush.msra.mxu0 0.0
      %1283 = vmatpush.msra.mxu0 0.0
      %1284 = vmatpush.msra.mxu0 0.0
      %1285 = vmatpush.msra.mxu0 0.0
      %1286 = vmatpush.msra.mxu0 0.0
      %1287 = vmatpush.msra.mxu0 0.0
      %1288 = vmatpush.msra.mxu0 0.0
      %1289 = vmatpush.msra.mxu0 0.0
      %1290 = vmatpush.msra.mxu0 0.0
      %1291 = vmatpush.msra.mxu0 0.0
      %1292 = vmatpush.msra.mxu0 0.0
      %1293 = vmatpush.msra.mxu0 0.0
      %1294 = vmatpush.msra.mxu0 0.0
      %1295 = vmatpush.msra.mxu0 0.0
      %1296 = vmatpush.msra.mxu0 %v1273
      %1297 = vmatpush.msra.mxu0 %v1271
      %1298 = vmatmul.f32.gmra.mxu0 %v1277
      %v1299 = vpop.f32.mrf.mxu0
      %v1300 = vadd.f32 0.0, %v1299
      %1301 = vmatmul.f32.gmra.mxu0 %v1280
      %v1302 = vpop.f32.mrf.mxu0
      %v1303 = vadd.f32 0.0, %v1302
      %1304 = vdwg.mxu0
      %1305 = vrot.lane.b32.xlu0 %v1205, 120
      %v1306 = vpop.permute.xlu0 %1305
      %1307 = vrot.lane.b32.xlu0 %v1206, 120
      %v1308 = vpop.permute.xlu0 %1307
      %1309 = vrot.lane.b32.xlu0 %v1200, 88
      %v1310 = vpop.permute.xlu0 %1309
      %1311 = vrot.lane.b32.xlu0 %v1203, 88
      %v1312 = vpop.permute.xlu0 %1311
      %v1313 = vsel %vm1213, %v1306, 0
      %v1315 = vsel %vm1213, %v1308, 0
      %v1317 = vsel %vm1213, %v1310, 0
      %v1319 = vsel %vm1213, %v1312, 0
      %1321 = vmatpush.xpose.msra.mxu0 0.0
      %1322 = vmatpush.xpose.msra.mxu0 0.0
      %1323 = vmatpush.xpose.msra.mxu0 0.0
      %1324 = vmatpush.xpose.msra.mxu0 0.0
      %1325 = vmatpush.xpose.msra.mxu0 0.0
      %1326 = vmatpush.xpose.msra.mxu0 0.0
      %1327 = vmatpush.xpose.msra.mxu0 0.0
      %1328 = vmatpush.xpose.msra.mxu0 0.0
      %1329 = vmatpush.xpose.msra.mxu0 0.0
      %1330 = vmatpush.xpose.msra.mxu0 0.0
      %1331 = vmatpush.xpose.msra.mxu0 0.0
      %1332 = vmatpush.xpose.msra.mxu0 0.0
      %1333 = vmatpush.xpose.msra.mxu0 0.0
      %1334 = vmatpush.xpose.msra.mxu0 0.0
      %1335 = vmatpush.xpose.msra.mxu0 %v1319
      %1336 = vmatpush.xpose.msra.mxu0 %v1317
      %1337 = vmatmul.f32.gmra.mxu0 %v1313
      %v1338 = vpop.f32.mrf.mxu0
      %v1339 = vadd.f32 %v1166, %v1338
      %1340 = vmatmul.f32.gmra.mxu0 %v1315
      %v1341 = vpop.f32.mrf.mxu0
      %v1342 = vadd.f32 %v1166, %v1341
      %1343 = vdwg.mxu0
      %v1344 = vsel %vm1247, %v1339, -inf
      %1345 = vmax.xlane.f32.xlu0 %v1344
      %v1346 = vpop.xlane.xlu0 %1345
      %v1347 = vsel %vm1247, %v1342, -inf
      %1348 = vmax.xlane.f32.xlu0 %v1347
      %v1349 = vpop.xlane.xlu0 %1348
      %v1350 = vsub.f32 %v1339, %v1346
      %v1351 = vsub.f32 %v1342, %v1349
      %v1352 = vmul.f32 %v1350, 1.442695
      %v1353 = vpow.pop %v1352
      %v1354 = vmul.f32 %v1351, 1.442695
      %v1355 = vpow.pop %v1354
      %v1356 = vsel %vm1247, %v1353, 0.0
      %1357 = vadd.xlane.f32.xlu0 %v1356
      %v1358 = vpop.xlane.xlu0 %1357
      %v1359 = vsel %vm1247, %v1355, 0.0
      %1360 = vadd.xlane.f32.xlu0 %v1359
      %v1361 = vpop.xlane.xlu0 %1360
      %v1362 = vrcp.pop %v1358
      %v1363 = vrcp.pop %v1361
      %v1364 = vmul.f32 %v1353, %v1362
      %v1365 = vmul.f32 %v1355, %v1363
      %1366 = vrot.lane.b32.xlu0 %v1200, 56
      %v1367 = vpop.permute.xlu0 %1366
      %1368 = vrot.lane.b32.xlu0 %v1203, 56
      %v1369 = vpop.permute.xlu0 %1368
      %v1373 = vsel %vm1247, %v1364, 0
      %v1376 = vsel %vm1247, %v1365, 0
      %1378 = vmatpush.msra.mxu0 0.0
      %1379 = vmatpush.msra.mxu0 0.0
      %1380 = vmatpush.msra.mxu0 0.0
      %1381 = vmatpush.msra.mxu0 0.0
      %1382 = vmatpush.msra.mxu0 0.0
      %1383 = vmatpush.msra.mxu0 0.0
      %1384 = vmatpush.msra.mxu0 0.0
      %1385 = vmatpush.msra.mxu0 0.0
      %1386 = vmatpush.msra.mxu0 0.0
      %1387 = vmatpush.msra.mxu0 0.0
      %1388 = vmatpush.msra.mxu0 0.0
      %1389 = vmatpush.msra.mxu0 0.0
      %1390 = vmatpush.msra.mxu0 0.0
      %1391 = vmatpush.msra.mxu0 0.0
      %1392 = vmatpush.msra.mxu0 %v1369
      %1393 = vmatpush.msra.mxu0 %v1367
      %1394 = vmatmul.f32.gmra.mxu0 %v1373
      %v1395 = vpop.f32.mrf.mxu0
      %v1396 = vadd.f32 0.0, %v1395
      %1397 = vmatmul.f32.gmra.mxu0 %v1376
      %v1398 = vpop.f32.mrf.mxu0
      %v1399 = vadd.f32 0.0, %v1398
      %1400 = vdwg.mxu0
      %1401 = vrot.lane.b32.xlu0 %v1205, 112
      %v1402 = vpop.permute.xlu0 %1401
      %1403 = vrot.lane.b32.xlu0 %v1206, 112
      %v1404 = vpop.permute.xlu0 %1403
      %1405 = vrot.lane.b32.xlu0 %v1200, 80
      %v1406 = vpop.permute.xlu0 %1405
      %1407 = vrot.lane.b32.xlu0 %v1203, 80
      %v1408 = vpop.permute.xlu0 %1407
      %v1409 = vsel %vm1213, %v1402, 0
      %v1411 = vsel %vm1213, %v1404, 0
      %v1413 = vsel %vm1213, %v1406, 0
      %v1415 = vsel %vm1213, %v1408, 0
      %1417 = vmatpush.xpose.msra.mxu0 0.0
      %1418 = vmatpush.xpose.msra.mxu0 0.0
      %1419 = vmatpush.xpose.msra.mxu0 0.0
      %1420 = vmatpush.xpose.msra.mxu0 0.0
      %1421 = vmatpush.xpose.msra.mxu0 0.0
      %1422 = vmatpush.xpose.msra.mxu0 0.0
      %1423 = vmatpush.xpose.msra.mxu0 0.0
      %1424 = vmatpush.xpose.msra.mxu0 0.0
      %1425 = vmatpush.xpose.msra.mxu0 0.0
      %1426 = vmatpush.xpose.msra.mxu0 0.0
      %1427 = vmatpush.xpose.msra.mxu0 0.0
      %1428 = vmatpush.xpose.msra.mxu0 0.0
      %1429 = vmatpush.xpose.msra.mxu0 0.0
      %1430 = vmatpush.xpose.msra.mxu0 0.0
      %1431 = vmatpush.xpose.msra.mxu0 %v1415
      %1432 = vmatpush.xpose.msra.mxu0 %v1413
      %1433 = vmatmul.f32.gmra.mxu0 %v1409
      %v1434 = vpop.f32.mrf.mxu0
      %v1435 = vadd.f32 %v1166, %v1434
      %1436 = vmatmul.f32.gmra.mxu0 %v1411
      %v1437 = vpop.f32.mrf.mxu0
      %v1438 = vadd.f32 %v1166, %v1437
      %1439 = vdwg.mxu0
      %v1440 = vsel %vm1247, %v1435, -inf
      %1441 = vmax.xlane.f32.xlu0 %v1440
      %v1442 = vpop.xlane.xlu0 %1441
      %v1443 = vsel %vm1247, %v1438, -inf
      %1444 = vmax.xlane.f32.xlu0 %v1443
      %v1445 = vpop.xlane.xlu0 %1444
      %v1446 = vsub.f32 %v1435, %v1442
      %v1447 = vsub.f32 %v1438, %v1445
      %v1448 = vmul.f32 %v1446, 1.442695
      %v1449 = vpow.pop %v1448
      %v1450 = vmul.f32 %v1447, 1.442695
      %v1451 = vpow.pop %v1450
      %v1452 = vsel %vm1247, %v1449, 0.0
      %1453 = vadd.xlane.f32.xlu0 %v1452
      %v1454 = vpop.xlane.xlu0 %1453
      %v1455 = vsel %vm1247, %v1451, 0.0
      %1456 = vadd.xlane.f32.xlu0 %v1455
      %v1457 = vpop.xlane.xlu0 %1456
      %v1458 = vrcp.pop %v1454
      %v1459 = vrcp.pop %v1457
      %v1460 = vmul.f32 %v1449, %v1458
      %v1461 = vmul.f32 %v1451, %v1459
      %1462 = vrot.lane.b32.xlu0 %v1200, 48
      %v1463 = vpop.permute.xlu0 %1462
      %1464 = vrot.lane.b32.xlu0 %v1203, 48
      %v1465 = vpop.permute.xlu0 %1464
      %v1469 = vsel %vm1247, %v1460, 0
      %v1472 = vsel %vm1247, %v1461, 0
      %1474 = vmatpush.msra.mxu0 0.0
      %1475 = vmatpush.msra.mxu0 0.0
      %1476 = vmatpush.msra.mxu0 0.0
      %1477 = vmatpush.msra.mxu0 0.0
      %1478 = vmatpush.msra.mxu0 0.0
      %1479 = vmatpush.msra.mxu0 0.0
      %1480 = vmatpush.msra.mxu0 0.0
      %1481 = vmatpush.msra.mxu0 0.0
      %1482 = vmatpush.msra.mxu0 0.0
      %1483 = vmatpush.msra.mxu0 0.0
      %1484 = vmatpush.msra.mxu0 0.0
      %1485 = vmatpush.msra.mxu0 0.0
      %1486 = vmatpush.msra.mxu0 0.0
      %1487 = vmatpush.msra.mxu0 0.0
      %1488 = vmatpush.msra.mxu0 %v1465
      %1489 = vmatpush.msra.mxu0 %v1463
      %1490 = vmatmul.f32.gmra.mxu0 %v1469
      %v1491 = vpop.f32.mrf.mxu0
      %v1492 = vadd.f32 0.0, %v1491
      %1493 = vmatmul.f32.gmra.mxu0 %v1472
      %v1494 = vpop.f32.mrf.mxu0
      %v1495 = vadd.f32 0.0, %v1494
      %1496 = vdwg.mxu0
      %1497 = vrot.lane.b32.xlu0 %v1205, 104
      %v1498 = vpop.permute.xlu0 %1497
      %1499 = vrot.lane.b32.xlu0 %v1206, 104
      %v1500 = vpop.permute.xlu0 %1499
      %1501 = vrot.lane.b32.xlu0 %v1200, 72
      %v1502 = vpop.permute.xlu0 %1501
      %1503 = vrot.lane.b32.xlu0 %v1203, 72
      %v1504 = vpop.permute.xlu0 %1503
      %v1505 = vsel %vm1213, %v1498, 0
      %v1507 = vsel %vm1213, %v1500, 0
      %v1509 = vsel %vm1213, %v1502, 0
      %v1511 = vsel %vm1213, %v1504, 0
      %1513 = vmatpush.xpose.msra.mxu0 0.0
      %1514 = vmatpush.xpose.msra.mxu0 0.0
      %1515 = vmatpush.xpose.msra.mxu0 0.0
      %1516 = vmatpush.xpose.msra.mxu0 0.0
      %1517 = vmatpush.xpose.msra.mxu0 0.0
      %1518 = vmatpush.xpose.msra.mxu0 0.0
      %1519 = vmatpush.xpose.msra.mxu0 0.0
      %1520 = vmatpush.xpose.msra.mxu0 0.0
      %1521 = vmatpush.xpose.msra.mxu0 0.0
      %1522 = vmatpush.xpose.msra.mxu0 0.0
      %1523 = vmatpush.xpose.msra.mxu0 0.0
      %1524 = vmatpush.xpose.msra.mxu0 0.0
      %1525 = vmatpush.xpose.msra.mxu0 0.0
      %1526 = vmatpush.xpose.msra.mxu0 0.0
      %1527 = vmatpush.xpose.msra.mxu0 %v1511
      %1528 = vmatpush.xpose.msra.mxu0 %v1509
      %1529 = vmatmul.f32.gmra.mxu0 %v1505
      %v1530 = vpop.f32.mrf.mxu0
      %v1531 = vadd.f32 %v1166, %v1530
      %1532 = vmatmul.f32.gmra.mxu0 %v1507
      %v1533 = vpop.f32.mrf.mxu0
      %v1534 = vadd.f32 %v1166, %v1533
      %1535 = vdwg.mxu0
      %v1536 = vsel %vm1247, %v1531, -inf
      %1537 = vmax.xlane.f32.xlu0 %v1536
      %v1538 = vpop.xlane.xlu0 %1537
      %v1539 = vsel %vm1247, %v1534, -inf
      %1540 = vmax.xlane.f32.xlu0 %v1539
      %v1541 = vpop.xlane.xlu0 %1540
      %v1542 = vsub.f32 %v1531, %v1538
      %v1543 = vsub.f32 %v1534, %v1541
      %v1544 = vmul.f32 %v1542, 1.442695
      %v1545 = vpow.pop %v1544
      %v1546 = vmul.f32 %v1543, 1.442695
      %v1547 = vpow.pop %v1546
      %v1548 = vsel %vm1247, %v1545, 0.0
      %1549 = vadd.xlane.f32.xlu0 %v1548
      %v1550 = vpop.xlane.xlu0 %1549
      %v1551 = vsel %vm1247, %v1547, 0.0
      %1552 = vadd.xlane.f32.xlu0 %v1551
      %v1553 = vpop.xlane.xlu0 %1552
      %v1554 = vrcp.pop %v1550
      %v1555 = vrcp.pop %v1553
      %v1556 = vmul.f32 %v1545, %v1554
      %v1557 = vmul.f32 %v1547, %v1555
      %1558 = vrot.lane.b32.xlu0 %v1200, 40
      %v1559 = vpop.permute.xlu0 %1558
      %1560 = vrot.lane.b32.xlu0 %v1203, 40
      %v1561 = vpop.permute.xlu0 %1560
      %v1565 = vsel %vm1247, %v1556, 0
      %v1568 = vsel %vm1247, %v1557, 0
      %1570 = vmatpush.msra.mxu0 0.0
      %1571 = vmatpush.msra.mxu0 0.0
      %1572 = vmatpush.msra.mxu0 0.0
      %1573 = vmatpush.msra.mxu0 0.0
      %1574 = vmatpush.msra.mxu0 0.0
      %1575 = vmatpush.msra.mxu0 0.0
      %1576 = vmatpush.msra.mxu0 0.0
      %1577 = vmatpush.msra.mxu0 0.0
      %1578 = vmatpush.msra.mxu0 0.0
      %1579 = vmatpush.msra.mxu0 0.0
      %1580 = vmatpush.msra.mxu0 0.0
      %1581 = vmatpush.msra.mxu0 0.0
      %1582 = vmatpush.msra.mxu0 0.0
      %1583 = vmatpush.msra.mxu0 0.0
      %1584 = vmatpush.msra.mxu0 %v1561
      %1585 = vmatpush.msra.mxu0 %v1559
      %1586 = vmatmul.f32.gmra.mxu0 %v1565
      %v1587 = vpop.f32.mrf.mxu0
      %v1588 = vadd.f32 0.0, %v1587
      %1589 = vmatmul.f32.gmra.mxu0 %v1568
      %v1590 = vpop.f32.mrf.mxu0
      %v1591 = vadd.f32 0.0, %v1590
      %1592 = vdwg.mxu0
      %1595 = vrot.lane.b32.xlu0 %v1396, 8
      %v1596 = vpop.permute.xlu0 %1595
      %1597 = vrot.lane.b32.xlu0 %v1399, 8
      %v1598 = vpop.permute.xlu0 %1597
      %1603 = vrot.lane.b32.xlu0 %v1492, 16
      %v1604 = vpop.permute.xlu0 %1603
      %1605 = vrot.lane.b32.xlu0 %v1495, 16
      %v1606 = vpop.permute.xlu0 %1605
      %1611 = vrot.lane.b32.xlu0 %v1588, 24
      %v1612 = vpop.permute.xlu0 %1611
      %1613 = vrot.lane.b32.xlu0 %v1591, 24
      %v1614 = vpop.permute.xlu0 %1613
      %v1617 = vsel %vm1213, %v1300, %v1596
      %v1618 = vsel %vm1213, %v1303, %v1598
      %v1619 = vsel %vm1247, %v1617, %v1604
      %v1620 = vsel %vm1247, %v1618, %v1606
      %vm1621 = vcmask 195584
      %v1622 = vsel %vm1621, %v1619, %v1612
      %v1623 = vsel %vm1621, %v1620, %v1614
      %v1624 = vld [vmem:[%s9] sm:$0xff]
      %v1625 = vld [vmem:[%s9 + $0x8] sm:$0xff]
      %v1626 = vld [vmem:[%s9 + $0x10] sm:$0xff]
      %v1627 = vld [vmem:[%s9 + $0x18] sm:$0xff]
      %v1628 = vld [vmem:[%s10] sm:$0x1]
      %v1630 = vperm.slane %v1628, 0
      %v1633 = vsel %vm1175, %v1622, 0
      %v1636 = vsel %vm1175, %v1623, 0
      %1638 = vmatpush.msra.mxu0 0.0
      %1639 = vmatpush.msra.mxu0 0.0
      %1640 = vmatpush.msra.mxu0 0.0
      %1641 = vmatpush.msra.mxu0 0.0
      %1642 = vmatpush.msra.mxu0 0.0
      %1643 = vmatpush.msra.mxu0 0.0
      %1644 = vmatpush.msra.mxu0 0.0
      %1645 = vmatpush.msra.mxu0 0.0
      %1646 = vmatpush.msra.mxu0 0.0
      %1647 = vmatpush.msra.mxu0 0.0
      %1648 = vmatpush.msra.mxu0 0.0
      %1649 = vmatpush.msra.mxu0 0.0
      %1650 = vmatpush.msra.mxu0 %v1627
      %1651 = vmatpush.msra.mxu0 %v1626
      %1652 = vmatpush.msra.mxu0 %v1625
      %1653 = vmatpush.msra.mxu0 %v1624
      %1654 = vmatmul.f32.gmra.mxu0 %v1633
      %v1655 = vpop.f32.mrf.mxu0
      %v1656 = vadd.f32 %v1630, %v1655
      %1657 = vmatmul.f32.gmra.mxu0 %v1636
      %v1658 = vpop.f32.mrf.mxu0
      %v1659 = vadd.f32 %v1630, %v1658
      %1660 = vdwg.mxu0
      %v1661 = vadd.f32 %v1158, %v1656
      %v1662 = vadd.f32 %v1159, %v1659
      %v1663 = vsel %vm1175, %v1661, 0.0
      %1664 = vadd.xlane.f32.xlu0 %v1663
      %v1665 = vpop.xlane.xlu0 %1664
      %v1666 = vsel %vm1175, %v1662, 0.0
      %1667 = vadd.xlane.f32.xlu0 %v1666
      %v1668 = vpop.xlane.xlu0 %1667
      %v1669 = vrcp.pop 32.0
      %v1670 = vmul.f32 32.0, %v1669
      %v1671 = vsub.f32 1.0, %v1670
      %v1672 = vmul.f32 %v1669, %v1671
      %v1673 = vadd.f32 %v1669, %v1672
      %vm1674 = vweird.f32 %v1669
      %v1675 = vsel %vm1674, %v1669, %v1673
      %v1676 = vmul.f32 %v1665, %v1675
      %v1677 = vmul.f32 %v1668, %v1675
      %v1678 = vsub.f32 %v1661, %v1676
      %v1679 = vsub.f32 %v1662, %v1677
      %v1680 = vmul.f32 %v1678, %v1678
      %v1681 = vmul.f32 %v1679, %v1679
      %v1682 = vsel %vm1175, %v1680, 0.0
      %1683 = vadd.xlane.f32.xlu0 %v1682
      %v1684 = vpop.xlane.xlu0 %1683
      %v1685 = vsel %vm1175, %v1681, 0.0
      %1686 = vadd.xlane.f32.xlu0 %v1685
      %v1687 = vpop.xlane.xlu0 %1686
      %v1688 = vmul.f32 %v1684, %v1675
      %v1689 = vmul.f32 %v1687, %v1675
      %v1690 = vadd.f32 %v1688, 1e-05
      %v1691 = vadd.f32 %v1689, 1e-05
      %v1692 = vrsqrt.pop %v1690
      %v1693 = vmul.f32 %v1692, %v1690
      %v1694 = vmul.f32 %v1693, %v1692
      %v1695 = vmul.f32 0.5, %v1694
      %v1696 = vsub.f32 1.5, %v1695
      %v1697 = vmul.f32 %v1692, %v1696
      %vm1698 = vweird.f32 %v1690
      %vm1699 = vweird.f32 %v1692
      %vm1700 = vmor %vm1698, %vm1699
      %v1701 = vsel %vm1700, %v1692, %v1697
      %v1702 = vrsqrt.pop %v1691
      %v1703 = vmul.f32 %v1702, %v1691
      %v1704 = vmul.f32 %v1703, %v1702
      %v1705 = vmul.f32 0.5, %v1704
      %v1706 = vsub.f32 1.5, %v1705
      %v1707 = vmul.f32 %v1702, %v1706
      %vm1708 = vweird.f32 %v1691
      %vm1709 = vweird.f32 %v1702
      %vm1710 = vmor %vm1708, %vm1709
      %v1711 = vsel %vm1710, %v1702, %v1707
      %v1712 = vmul.f32 %v1678, %v1701
      %v1713 = vmul.f32 %v1679, %v1711
      %v1714 = vld [vmem:[%s15] sm:$0x1]
      %v1716 = vperm.slane %v1714, 0
      %v1718 = vmul.f32 %v1712, %v1716
      %v1719 = vmul.f32 %v1713, %v1716
      %v1720 = vld [vmem:[%s16] sm:$0x1]
      %v1722 = vperm.slane %v1720, 0
      %v1724 = vadd.f32 %v1718, %v1722
      %v1725 = vadd.f32 %v1719, %v1722
      %v1726 = vld [vmem:[%s11] sm:$0xff]
      %v1727 = vld [vmem:[%s11 + $0x8] sm:$0xff]
      %v1728 = vld [vmem:[%s11 + $0x10] sm:$0xff]
      %v1729 = vld [vmem:[%s11 + $0x18] sm:$0xff]
      %v1730 = vld [vmem:[%s11 + $0x20] sm:$0xff]
      %v1731 = vld [vmem:[%s11 + $0x28] sm:$0xff]
      %v1732 = vld [vmem:[%s11 + $0x30] sm:$0xff]
      %v1733 = vld [vmem:[%s11 + $0x38] sm:$0xff]
      %v1734 = vld [vmem:[%s11 + $0x40] sm:$0xff]
      %v1735 = vld [vmem:[%s11 + $0x48] sm:$0xff]
      %v1736 = vld [vmem:[%s11 + $0x50] sm:$0xff]
      %v1737 = vld [vmem:[%s11 + $0x58] sm:$0xff]
      %v1738 = vld [vmem:[%s11 + $0x60] sm:$0xff]
      %v1739 = vld [vmem:[%s11 + $0x68] sm:$0xff]
      %v1740 = vld [vmem:[%s11 + $0x70] sm:$0xff]
      %v1741 = vld [vmem:[%s11 + $0x78] sm:$0xff]
      %v1742 = vld [vmem:[%s11 + $0x80] sm:$0xff]
      %v1743 = vld [vmem:[%s11 + $0x88] sm:$0xff]
      %v1744 = vld [vmem:[%s11 + $0x90] sm:$0xff]
      %v1745 = vld [vmem:[%s11 + $0x98] sm:$0xff]
      %v1746 = vld [vmem:[%s11 + $0xa0] sm:$0xff]
      %v1747 = vld [vmem:[%s11 + $0xa8] sm:$0xff]
      %v1748 = vld [vmem:[%s11 + $0xb0] sm:$0xff]
      %v1749 = vld [vmem:[%s11 + $0xb8] sm:$0xff]
      %v1750 = vld [vmem:[%s11 + $0xc0] sm:$0xff]
      %v1751 = vld [vmem:[%s11 + $0xc8] sm:$0xff]
      %v1752 = vld [vmem:[%s11 + $0xd0] sm:$0xff]
      %v1753 = vld [vmem:[%s11 + $0xd8] sm:$0xff]
      %v1754 = vld [vmem:[%s11 + $0xe0] sm:$0xff]
      %v1755 = vld [vmem:[%s11 + $0xe8] sm:$0xff]
      %v1756 = vld [vmem:[%s11 + $0xf0] sm:$0xff]
      %v1757 = vld [vmem:[%s11 + $0xf8] sm:$0xff]
      %v1758 = vld [vmem:[%s11 + $0x100] sm:$0xff]
      %v1759 = vld [vmem:[%s11 + $0x108] sm:$0xff]
      %v1760 = vld [vmem:[%s11 + $0x110] sm:$0xff]
      %v1761 = vld [vmem:[%s11 + $0x118] sm:$0xff]
      %v1762 = vld [vmem:[%s11 + $0x120] sm:$0xff]
      %v1763 = vld [vmem:[%s11 + $0x128] sm:$0xff]
      %v1764 = vld [vmem:[%s11 + $0x130] sm:$0xff]
      %v1765 = vld [vmem:[%s11 + $0x138] sm:$0xff]
      %v1766 = vld [vmem:[%s11 + $0x140] sm:$0xff]
      %v1767 = vld [vmem:[%s11 + $0x148] sm:$0xff]
      %v1768 = vld [vmem:[%s11 + $0x150] sm:$0xff]
      %v1769 = vld [vmem:[%s11 + $0x158] sm:$0xff]
      %v1770 = vld [vmem:[%s11 + $0x160] sm:$0xff]
      %v1771 = vld [vmem:[%s11 + $0x168] sm:$0xff]
      %v1772 = vld [vmem:[%s11 + $0x170] sm:$0xff]
      %v1773 = vld [vmem:[%s11 + $0x178] sm:$0xff]
      %v1774 = vld [vmem:[%s11 + $0x180] sm:$0xff]
      %v1775 = vld [vmem:[%s11 + $0x188] sm:$0xff]
      %v1776 = vld [vmem:[%s11 + $0x190] sm:$0xff]
      %v1777 = vld [vmem:[%s11 + $0x198] sm:$0xff]
      %v1778 = vld [vmem:[%s11 + $0x1a0] sm:$0xff]
      %v1779 = vld [vmem:[%s11 + $0x1a8] sm:$0xff]
      %v1780 = vld [vmem:[%s11 + $0x1b0] sm:$0xff]
      %v1781 = vld [vmem:[%s11 + $0x1b8] sm:$0xff]
      %v1782 = vld [vmem:[%s11 + $0x1c0] sm:$0xff]
      %v1783 = vld [vmem:[%s11 + $0x1c8] sm:$0xff]
      %v1784 = vld [vmem:[%s11 + $0x1d0] sm:$0xff]
      %v1785 = vld [vmem:[%s11 + $0x1d8] sm:$0xff]
      %v1786 = vld [vmem:[%s11 + $0x1e0] sm:$0xff]
      %v1787 = vld [vmem:[%s11 + $0x1e8] sm:$0xff]
      %v1788 = vld [vmem:[%s11 + $0x1f0] sm:$0xff]
      %v1789 = vld [vmem:[%s11 + $0x1f8] sm:$0xff]
      %v1790 = vld [vmem:[%s12] sm:$0xff]
      %v1791 = vld [vmem:[%s12 + $0x8] sm:$0xff]
      %v1794 = vperm.slane %v1790, 0
      %v1795 = vperm.slane %v1790, 1
      %v1796 = vperm.slane %v1790, 2
      %v1797 = vperm.slane %v1790, 3
      %v1798 = vperm.slane %v1790, 4
      %v1799 = vperm.slane %v1790, 5
      %v1800 = vperm.slane %v1790, 6
      %v1801 = vperm.slane %v1790, 7
      %v1802 = vperm.slane %v1791, 0
      %v1803 = vperm.slane %v1791, 1
      %v1804 = vperm.slane %v1791, 2
      %v1805 = vperm.slane %v1791, 3
      %v1806 = vperm.slane %v1791, 4
      %v1807 = vperm.slane %v1791, 5
      %v1808 = vperm.slane %v1791, 6
      %v1809 = vperm.slane %v1791, 7
      %v1827 = vsel %vm1175, %v1724, 0
      %v1830 = vsel %vm1175, %v1725, 0
      %1832 = vmatpush.msra.mxu0 0.0
      %1833 = vmatpush.msra.mxu0 0.0
      %1834 = vmatpush.msra.mxu0 0.0
      %1835 = vmatpush.msra.mxu0 0.0
      %1836 = vmatpush.msra.mxu0 0.0
      %1837 = vmatpush.msra.mxu0 0.0
      %1838 = vmatpush.msra.mxu0 0.0
      %1839 = vmatpush.msra.mxu0 0.0
      %1840 = vmatpush.msra.mxu0 0.0
      %1841 = vmatpush.msra.mxu0 0.0
      %1842 = vmatpush.msra.mxu0 0.0
      %1843 = vmatpush.msra.mxu0 0.0
      %1844 = vmatpush.msra.mxu0 %v1774
      %1845 = vmatpush.msra.mxu0 %v1758
      %1846 = vmatpush.msra.mxu0 %v1742
      %1847 = vmatpush.msra.mxu0 %v1726
      %1848 = vmatmul.f32.gmra.mxu0 %v1827
      %v1849 = vpop.f32.mrf.mxu0
      %v1850 = vadd.f32 %v1794, %v1849
      %1851 = vmatmul.f32.gmra.mxu0 %v1830
      %v1852 = vpop.f32.mrf.mxu0
      %v1853 = vadd.f32 %v1794, %v1852
      %1854 = vdwg.mxu0
      %1855 = vmatpush.msra.mxu0 0.0
      %1856 = vmatpush.msra.mxu0 0.0
      %1857 = vmatpush.msra.mxu0 0.0
      %1858 = vmatpush.msra.mxu0 0.0
      %1859 = vmatpush.msra.mxu0 0.0
      %1860 = vmatpush.msra.mxu0 0.0
      %1861 = vmatpush.msra.mxu0 0.0
      %1862 = vmatpush.msra.mxu0 0.0
      %1863 = vmatpush.msra.mxu0 0.0
      %1864 = vmatpush.msra.mxu0 0.0
      %1865 = vmatpush.msra.mxu0 0.0
      %1866 = vmatpush.msra.mxu0 0.0
      %1867 = vmatpush.msra.mxu0 %v1775
      %1868 = vmatpush.msra.mxu0 %v1759
      %1869 = vmatpush.msra.mxu0 %v1743
      %1870 = vmatpush.msra.mxu0 %v1727
      %1871 = vmatmul.f32.gmra.mxu0 %v1827
      %v1872 = vpop.f32.mrf.mxu0
      %v1873 = vadd.f32 %v1795, %v1872
      %1874 = vmatmul.f32.gmra.mxu0 %v1830
      %v1875 = vpop.f32.mrf.mxu0
      %v1876 = vadd.f32 %v1795, %v1875
      %1877 = vdwg.mxu0
      %1878 = vmatpush.msra.mxu0 0.0
      %1879 = vmatpush.msra.mxu0 0.0
      %1880 = vmatpush.msra.mxu0 0.0
      %1881 = vmatpush.msra.mxu0 0.0
      %1882 = vmatpush.msra.mxu0 0.0
      %1883 = vmatpush.msra.mxu0 0.0
      %1884 = vmatpush.msra.mxu0 0.0
      %1885 = vmatpush.msra.mxu0 0.0
      %1886 = vmatpush.msra.mxu0 0.0
      %1887 = vmatpush.msra.mxu0 0.0
      %1888 = vmatpush.msra.mxu0 0.0
      %1889 = vmatpush.msra.mxu0 0.0
      %1890 = vmatpush.msra.mxu0 %v1776
      %1891 = vmatpush.msra.mxu0 %v1760
      %1892 = vmatpush.msra.mxu0 %v1744
      %1893 = vmatpush.msra.mxu0 %v1728
      %1894 = vmatmul.f32.gmra.mxu0 %v1827
      %v1895 = vpop.f32.mrf.mxu0
      %v1896 = vadd.f32 %v1796, %v1895
      %1897 = vmatmul.f32.gmra.mxu0 %v1830
      %v1898 = vpop.f32.mrf.mxu0
      %v1899 = vadd.f32 %v1796, %v1898
      %1900 = vdwg.mxu0
      %1901 = vmatpush.msra.mxu0 0.0
      %1902 = vmatpush.msra.mxu0 0.0
      %1903 = vmatpush.msra.mxu0 0.0
      %1904 = vmatpush.msra.mxu0 0.0
      %1905 = vmatpush.msra.mxu0 0.0
      %1906 = vmatpush.msra.mxu0 0.0
      %1907 = vmatpush.msra.mxu0 0.0
      %1908 = vmatpush.msra.mxu0 0.0
      %1909 = vmatpush.msra.mxu0 0.0
      %1910 = vmatpush.msra.mxu0 0.0
      %1911 = vmatpush.msra.mxu0 0.0
      %1912 = vmatpush.msra.mxu0 0.0
      %1913 = vmatpush.msra.mxu0 %v1777
      %1914 = vmatpush.msra.mxu0 %v1761
      %1915 = vmatpush.msra.mxu0 %v1745
      %1916 = vmatpush.msra.mxu0 %v1729
      %1917 = vmatmul.f32.gmra.mxu0 %v1827
      %v1918 = vpop.f32.mrf.mxu0
      %v1919 = vadd.f32 %v1797, %v1918
      %1920 = vmatmul.f32.gmra.mxu0 %v1830
      %v1921 = vpop.f32.mrf.mxu0
      %v1922 = vadd.f32 %v1797, %v1921
      %1923 = vdwg.mxu0
      %1924 = vmatpush.msra.mxu0 0.0
      %1925 = vmatpush.msra.mxu0 0.0
      %1926 = vmatpush.msra.mxu0 0.0
      %1927 = vmatpush.msra.mxu0 0.0
      %1928 = vmatpush.msra.mxu0 0.0
      %1929 = vmatpush.msra.mxu0 0.0
      %1930 = vmatpush.msra.mxu0 0.0
      %1931 = vmatpush.msra.mxu0 0.0
      %1932 = vmatpush.msra.mxu0 0.0
      %1933 = vmatpush.msra.mxu0 0.0
      %1934 = vmatpush.msra.mxu0 0.0
      %1935 = vmatpush.msra.mxu0 0.0
      %1936 = vmatpush.msra.mxu0 %v1778
      %1937 = vmatpush.msra.mxu0 %v1762
      %1938 = vmatpush.msra.mxu0 %v1746
      %1939 = vmatpush.msra.mxu0 %v1730
      %1940 = vmatmul.f32.gmra.mxu0 %v1827
      %v1941 = vpop.f32.mrf.mxu0
      %v1942 = vadd.f32 %v1798, %v1941
      %1943 = vmatmul.f32.gmra.mxu0 %v1830
      %v1944 = vpop.f32.mrf.mxu0
      %v1945 = vadd.f32 %v1798, %v1944
      %1946 = vdwg.mxu0
      %1947 = vmatpush.msra.mxu0 0.0
      %1948 = vmatpush.msra.mxu0 0.0
      %1949 = vmatpush.msra.mxu0 0.0
      %1950 = vmatpush.msra.mxu0 0.0
      %1951 = vmatpush.msra.mxu0 0.0
      %1952 = vmatpush.msra.mxu0 0.0
      %1953 = vmatpush.msra.mxu0 0.0
      %1954 = vmatpush.msra.mxu0 0.0
      %1955 = vmatpush.msra.mxu0 0.0
      %1956 = vmatpush.msra.mxu0 0.0
      %1957 = vmatpush.msra.mxu0 0.0
      %1958 = vmatpush.msra.mxu0 0.0
      %1959 = vmatpush.msra.mxu0 %v1779
      %1960 = vmatpush.msra.mxu0 %v1763
      %1961 = vmatpush.msra.mxu0 %v1747
      %1962 = vmatpush.msra.mxu0 %v1731
      %1963 = vmatmul.f32.gmra.mxu0 %v1827
      %v1964 = vpop.f32.mrf.mxu0
      %v1965 = vadd.f32 %v1799, %v1964
      %1966 = vmatmul.f32.gmra.mxu0 %v1830
      %v1967 = vpop.f32.mrf.mxu0
      %v1968 = vadd.f32 %v1799, %v1967
      %1969 = vdwg.mxu0
      %1970 = vmatpush.msra.mxu0 0.0
      %1971 = vmatpush.msra.mxu0 0.0
      %1972 = vmatpush.msra.mxu0 0.0
      %1973 = vmatpush.msra.mxu0 0.0
      %1974 = vmatpush.msra.mxu0 0.0
      %1975 = vmatpush.msra.mxu0 0.0
      %1976 = vmatpush.msra.mxu0 0.0
      %1977 = vmatpush.msra.mxu0 0.0
      %1978 = vmatpush.msra.mxu0 0.0
      %1979 = vmatpush.msra.mxu0 0.0
      %1980 = vmatpush.msra.mxu0 0.0
      %1981 = vmatpush.msra.mxu0 0.0
      %1982 = vmatpush.msra.mxu0 %v1780
      %1983 = vmatpush.msra.mxu0 %v1764
      %1984 = vmatpush.msra.mxu0 %v1748
      %1985 = vmatpush.msra.mxu0 %v1732
      %1986 = vmatmul.f32.gmra.mxu0 %v1827
      %v1987 = vpop.f32.mrf.mxu0
      %v1988 = vadd.f32 %v1800, %v1987
      %1989 = vmatmul.f32.gmra.mxu0 %v1830
      %v1990 = vpop.f32.mrf.mxu0
      %v1991 = vadd.f32 %v1800, %v1990
      %1992 = vdwg.mxu0
      %1993 = vmatpush.msra.mxu0 0.0
      %1994 = vmatpush.msra.mxu0 0.0
      %1995 = vmatpush.msra.mxu0 0.0
      %1996 = vmatpush.msra.mxu0 0.0
      %1997 = vmatpush.msra.mxu0 0.0
      %1998 = vmatpush.msra.mxu0 0.0
      %1999 = vmatpush.msra.mxu0 0.0
      %2000 = vmatpush.msra.mxu0 0.0
      %2001 = vmatpush.msra.mxu0 0.0
      %2002 = vmatpush.msra.mxu0 0.0
      %2003 = vmatpush.msra.mxu0 0.0
      %2004 = vmatpush.msra.mxu0 0.0
      %2005 = vmatpush.msra.mxu0 %v1781
      %2006 = vmatpush.msra.mxu0 %v1765
      %2007 = vmatpush.msra.mxu0 %v1749
      %2008 = vmatpush.msra.mxu0 %v1733
      %2009 = vmatmul.f32.gmra.mxu0 %v1827
      %v2010 = vpop.f32.mrf.mxu0
      %v2011 = vadd.f32 %v1801, %v2010
      %2012 = vmatmul.f32.gmra.mxu0 %v1830
      %v2013 = vpop.f32.mrf.mxu0
      %v2014 = vadd.f32 %v1801, %v2013
      %2015 = vdwg.mxu0
      %2016 = vmatpush.msra.mxu0 0.0
      %2017 = vmatpush.msra.mxu0 0.0
      %2018 = vmatpush.msra.mxu0 0.0
      %2019 = vmatpush.msra.mxu0 0.0
      %2020 = vmatpush.msra.mxu0 0.0
      %2021 = vmatpush.msra.mxu0 0.0
      %2022 = vmatpush.msra.mxu0 0.0
      %2023 = vmatpush.msra.mxu0 0.0
      %2024 = vmatpush.msra.mxu0 0.0
      %2025 = vmatpush.msra.mxu0 0.0
      %2026 = vmatpush.msra.mxu0 0.0
      %2027 = vmatpush.msra.mxu0 0.0
      %2028 = vmatpush.msra.mxu0 %v1782
      %2029 = vmatpush.msra.mxu0 %v1766
      %2030 = vmatpush.msra.mxu0 %v1750
      %2031 = vmatpush.msra.mxu0 %v1734
      %2032 = vmatmul.f32.gmra.mxu0 %v1827
      %v2033 = vpop.f32.mrf.mxu0
      %v2034 = vadd.f32 %v1802, %v2033
      %2035 = vmatmul.f32.gmra.mxu0 %v1830
      %v2036 = vpop.f32.mrf.mxu0
      %v2037 = vadd.f32 %v1802, %v2036
      %2038 = vdwg.mxu0
      %2039 = vmatpush.msra.mxu0 0.0
      %2040 = vmatpush.msra.mxu0 0.0
      %2041 = vmatpush.msra.mxu0 0.0
      %2042 = vmatpush.msra.mxu0 0.0
      %2043 = vmatpush.msra.mxu0 0.0
      %2044 = vmatpush.msra.mxu0 0.0
      %2045 = vmatpush.msra.mxu0 0.0
      %2046 = vmatpush.msra.mxu0 0.0
      %2047 = vmatpush.msra.mxu0 0.0
      %2048 = vmatpush.msra.mxu0 0.0
      %2049 = vmatpush.msra.mxu0 0.0
      %2050 = vmatpush.msra.mxu0 0.0
      %2051 = vmatpush.msra.mxu0 %v1783
      %2052 = vmatpush.msra.mxu0 %v1767
      %2053 = vmatpush.msra.mxu0 %v1751
      %2054 = vmatpush.msra.mxu0 %v1735
      %2055 = vmatmul.f32.gmra.mxu0 %v1827
      %v2056 = vpop.f32.mrf.mxu0
      %v2057 = vadd.f32 %v1803, %v2056
      %2058 = vmatmul.f32.gmra.mxu0 %v1830
      %v2059 = vpop.f32.mrf.mxu0
      %v2060 = vadd.f32 %v1803, %v2059
      %2061 = vdwg.mxu0
      %2062 = vmatpush.msra.mxu0 0.0
      %2063 = vmatpush.msra.mxu0 0.0
      %2064 = vmatpush.msra.mxu0 0.0
      %2065 = vmatpush.msra.mxu0 0.0
      %2066 = vmatpush.msra.mxu0 0.0
      %2067 = vmatpush.msra.mxu0 0.0
      %2068 = vmatpush.msra.mxu0 0.0
      %2069 = vmatpush.msra.mxu0 0.0
      %2070 = vmatpush.msra.mxu0 0.0
      %2071 = vmatpush.msra.mxu0 0.0
      %2072 = vmatpush.msra.mxu0 0.0
      %2073 = vmatpush.msra.mxu0 0.0
      %2074 = vmatpush.msra.mxu0 %v1784
      %2075 = vmatpush.msra.mxu0 %v1768
      %2076 = vmatpush.msra.mxu0 %v1752
      %2077 = vmatpush.msra.mxu0 %v1736
      %2078 = vmatmul.f32.gmra.mxu0 %v1827
      %v2079 = vpop.f32.mrf.mxu0
      %v2080 = vadd.f32 %v1804, %v2079
      %2081 = vmatmul.f32.gmra.mxu0 %v1830
      %v2082 = vpop.f32.mrf.mxu0
      %v2083 = vadd.f32 %v1804, %v2082
      %2084 = vdwg.mxu0
      %2085 = vmatpush.msra.mxu0 0.0
      %2086 = vmatpush.msra.mxu0 0.0
      %2087 = vmatpush.msra.mxu0 0.0
      %2088 = vmatpush.msra.mxu0 0.0
      %2089 = vmatpush.msra.mxu0 0.0
      %2090 = vmatpush.msra.mxu0 0.0
      %2091 = vmatpush.msra.mxu0 0.0
      %2092 = vmatpush.msra.mxu0 0.0
      %2093 = vmatpush.msra.mxu0 0.0
      %2094 = vmatpush.msra.mxu0 0.0
      %2095 = vmatpush.msra.mxu0 0.0
      %2096 = vmatpush.msra.mxu0 0.0
      %2097 = vmatpush.msra.mxu0 %v1785
      %2098 = vmatpush.msra.mxu0 %v1769
      %2099 = vmatpush.msra.mxu0 %v1753
      %2100 = vmatpush.msra.mxu0 %v1737
      %2101 = vmatmul.f32.gmra.mxu0 %v1827
      %v2102 = vpop.f32.mrf.mxu0
      %v2103 = vadd.f32 %v1805, %v2102
      %2104 = vmatmul.f32.gmra.mxu0 %v1830
      %v2105 = vpop.f32.mrf.mxu0
      %v2106 = vadd.f32 %v1805, %v2105
      %2107 = vdwg.mxu0
      %2108 = vmatpush.msra.mxu0 0.0
      %2109 = vmatpush.msra.mxu0 0.0
      %2110 = vmatpush.msra.mxu0 0.0
      %2111 = vmatpush.msra.mxu0 0.0
      %2112 = vmatpush.msra.mxu0 0.0
      %2113 = vmatpush.msra.mxu0 0.0
      %2114 = vmatpush.msra.mxu0 0.0
      %2115 = vmatpush.msra.mxu0 0.0
      %2116 = vmatpush.msra.mxu0 0.0
      %2117 = vmatpush.msra.mxu0 0.0
      %2118 = vmatpush.msra.mxu0 0.0
      %2119 = vmatpush.msra.mxu0 0.0
      %2120 = vmatpush.msra.mxu0 %v1786
      %2121 = vmatpush.msra.mxu0 %v1770
      %2122 = vmatpush.msra.mxu0 %v1754
      %2123 = vmatpush.msra.mxu0 %v1738
      %2124 = vmatmul.f32.gmra.mxu0 %v1827
      %v2125 = vpop.f32.mrf.mxu0
      %v2126 = vadd.f32 %v1806, %v2125
      %2127 = vmatmul.f32.gmra.mxu0 %v1830
      %v2128 = vpop.f32.mrf.mxu0
      %v2129 = vadd.f32 %v1806, %v2128
      %2130 = vdwg.mxu0
      %2131 = vmatpush.msra.mxu0 0.0
      %2132 = vmatpush.msra.mxu0 0.0
      %2133 = vmatpush.msra.mxu0 0.0
      %2134 = vmatpush.msra.mxu0 0.0
      %2135 = vmatpush.msra.mxu0 0.0
      %2136 = vmatpush.msra.mxu0 0.0
      %2137 = vmatpush.msra.mxu0 0.0
      %2138 = vmatpush.msra.mxu0 0.0
      %2139 = vmatpush.msra.mxu0 0.0
      %2140 = vmatpush.msra.mxu0 0.0
      %2141 = vmatpush.msra.mxu0 0.0
      %2142 = vmatpush.msra.mxu0 0.0
      %2143 = vmatpush.msra.mxu0 %v1787
      %2144 = vmatpush.msra.mxu0 %v1771
      %2145 = vmatpush.msra.mxu0 %v1755
      %2146 = vmatpush.msra.mxu0 %v1739
      %2147 = vmatmul.f32.gmra.mxu0 %v1827
      %v2148 = vpop.f32.mrf.mxu0
      %v2149 = vadd.f32 %v1807, %v2148
      %2150 = vmatmul.f32.gmra.mxu0 %v1830
      %v2151 = vpop.f32.mrf.mxu0
      %v2152 = vadd.f32 %v1807, %v2151
      %2153 = vdwg.mxu0
      %2154 = vmatpush.msra.mxu0 0.0
      %2155 = vmatpush.msra.mxu0 0.0
      %2156 = vmatpush.msra.mxu0 0.0
      %2157 = vmatpush.msra.mxu0 0.0
      %2158 = vmatpush.msra.mxu0 0.0
      %2159 = vmatpush.msra.mxu0 0.0
      %2160 = vmatpush.msra.mxu0 0.0
      %2161 = vmatpush.msra.mxu0 0.0
      %2162 = vmatpush.msra.mxu0 0.0
      %2163 = vmatpush.msra.mxu0 0.0
      %2164 = vmatpush.msra.mxu0 0.0
      %2165 = vmatpush.msra.mxu0 0.0
      %2166 = vmatpush.msra.mxu0 %v1788
      %2167 = vmatpush.msra.mxu0 %v1772
      %2168 = vmatpush.msra.mxu0 %v1756
      %2169 = vmatpush.msra.mxu0 %v1740
      %2170 = vmatmul.f32.gmra.mxu0 %v1827
      %v2171 = vpop.f32.mrf.mxu0
      %v2172 = vadd.f32 %v1808, %v2171
      %2173 = vmatmul.f32.gmra.mxu0 %v1830
      %v2174 = vpop.f32.mrf.mxu0
      %v2175 = vadd.f32 %v1808, %v2174
      %2176 = vdwg.mxu0
      %2177 = vmatpush.msra.mxu0 0.0
      %2178 = vmatpush.msra.mxu0 0.0
      %2179 = vmatpush.msra.mxu0 0.0
      %2180 = vmatpush.msra.mxu0 0.0
      %2181 = vmatpush.msra.mxu0 0.0
      %2182 = vmatpush.msra.mxu0 0.0
      %2183 = vmatpush.msra.mxu0 0.0
      %2184 = vmatpush.msra.mxu0 0.0
      %2185 = vmatpush.msra.mxu0 0.0
      %2186 = vmatpush.msra.mxu0 0.0
      %2187 = vmatpush.msra.mxu0 0.0
      %2188 = vmatpush.msra.mxu0 0.0
      %2189 = vmatpush.msra.mxu0 %v1789
      %2190 = vmatpush.msra.mxu0 %v1773
      %2191 = vmatpush.msra.mxu0 %v1757
      %2192 = vmatpush.msra.mxu0 %v1741
      %2193 = vmatmul.f32.gmra.mxu0 %v1827
      %v2194 = vpop.f32.mrf.mxu0
      %v2195 = vadd.f32 %v1809, %v2194
      %2196 = vmatmul.f32.gmra.mxu0 %v1830
      %v2197 = vpop.f32.mrf.mxu0
      %v2198 = vadd.f32 %v1809, %v2197
      %2199 = vdwg.mxu0
      %v2200 = vmax.f32 %v1850, 0.0
      %v2201 = vmax.f32 %v1873, 0.0
      %v2202 = vmax.f32 %v1896, 0.0
      %v2203 = vmax.f32 %v1919, 0.0
      %v2204 = vmax.f32 %v1942, 0.0
      %v2205 = vmax.f32 %v1965, 0.0
      %v2206 = vmax.f32 %v1988, 0.0
      %v2207 = vmax.f32 %v2011, 0.0
      %v2208 = vmax.f32 %v2034, 0.0
      %v2209 = vmax.f32 %v2057, 0.0
      %v2210 = vmax.f32 %v2080, 0.0
      %v2211 = vmax.f32 %v2103, 0.0
      %v2212 = vmax.f32 %v2126, 0.0
      %v2213 = vmax.f32 %v2149, 0.0
      %v2214 = vmax.f32 %v2172, 0.0
      %v2215 = vmax.f32 %v2195, 0.0
      %v2216 = vmax.f32 %v1853, 0.0
      %v2217 = vmax.f32 %v1876, 0.0
      %v2218 = vmax.f32 %v1899, 0.0
      %v2219 = vmax.f32 %v1922, 0.0
      %v2220 = vmax.f32 %v1945, 0.0
      %v2221 = vmax.f32 %v1968, 0.0
      %v2222 = vmax.f32 %v1991, 0.0
      %v2223 = vmax.f32 %v2014, 0.0
      %v2224 = vmax.f32 %v2037, 0.0
      %v2225 = vmax.f32 %v2060, 0.0
      %v2226 = vmax.f32 %v2083, 0.0
      %v2227 = vmax.f32 %v2106, 0.0
      %v2228 = vmax.f32 %v2129, 0.0
      %v2229 = vmax.f32 %v2152, 0.0
      %v2230 = vmax.f32 %v2175, 0.0
      %v2231 = vmax.f32 %v2198, 0.0
      %v2232 = vld [vmem:[%s13] sm:$0xff]
      %v2233 = vld [vmem:[%s13 + $0x8] sm:$0xff]
      %v2234 = vld [vmem:[%s13 + $0x10] sm:$0xff]
      %v2235 = vld [vmem:[%s13 + $0x18] sm:$0xff]
      %v2236 = vld [vmem:[%s13 + $0x20] sm:$0xff]
      %v2237 = vld [vmem:[%s13 + $0x28] sm:$0xff]
      %v2238 = vld [vmem:[%s13 + $0x30] sm:$0xff]
      %v2239 = vld [vmem:[%s13 + $0x38] sm:$0xff]
      %v2240 = vld [vmem:[%s13 + $0x40] sm:$0xff]
      %v2241 = vld [vmem:[%s13 + $0x48] sm:$0xff]
      %v2242 = vld [vmem:[%s13 + $0x50] sm:$0xff]
      %v2243 = vld [vmem:[%s13 + $0x58] sm:$0xff]
      %v2244 = vld [vmem:[%s13 + $0x60] sm:$0xff]
      %v2245 = vld [vmem:[%s13 + $0x68] sm:$0xff]
      %v2246 = vld [vmem:[%s13 + $0x70] sm:$0xff]
      %v2247 = vld [vmem:[%s13 + $0x78] sm:$0xff]
      %v2248 = vld [vmem:[%s13 + $0x80] sm:$0xff]
      %v2249 = vld [vmem:[%s13 + $0x88] sm:$0xff]
      %v2250 = vld [vmem:[%s13 + $0x90] sm:$0xff]
      %v2251 = vld [vmem:[%s13 + $0x98] sm:$0xff]
      %v2252 = vld [vmem:[%s13 + $0xa0] sm:$0xff]
      %v2253 = vld [vmem:[%s13 + $0xa8] sm:$0xff]
      %v2254 = vld [vmem:[%s13 + $0xb0] sm:$0xff]
      %v2255 = vld [vmem:[%s13 + $0xb8] sm:$0xff]
      %v2256 = vld [vmem:[%s13 + $0xc0] sm:$0xff]
      %v2257 = vld [vmem:[%s13 + $0xc8] sm:$0xff]
      %v2258 = vld [vmem:[%s13 + $0xd0] sm:$0xff]
      %v2259 = vld [vmem:[%s13 + $0xd8] sm:$0xff]
      %v2260 = vld [vmem:[%s13 + $0xe0] sm:$0xff]
      %v2261 = vld [vmem:[%s13 + $0xe8] sm:$0xff]
      %v2262 = vld [vmem:[%s13 + $0xf0] sm:$0xff]
      %v2263 = vld [vmem:[%s13 + $0xf8] sm:$0xff]
      %v2264 = vld [vmem:[%s13 + $0x100] sm:$0xff]
      %v2265 = vld [vmem:[%s13 + $0x108] sm:$0xff]
      %v2266 = vld [vmem:[%s13 + $0x110] sm:$0xff]
      %v2267 = vld [vmem:[%s13 + $0x118] sm:$0xff]
      %v2268 = vld [vmem:[%s13 + $0x120] sm:$0xff]
      %v2269 = vld [vmem:[%s13 + $0x128] sm:$0xff]
      %v2270 = vld [vmem:[%s13 + $0x130] sm:$0xff]
      %v2271 = vld [vmem:[%s13 + $0x138] sm:$0xff]
      %v2272 = vld [vmem:[%s13 + $0x140] sm:$0xff]
      %v2273 = vld [vmem:[%s13 + $0x148] sm:$0xff]
      %v2274 = vld [vmem:[%s13 + $0x150] sm:$0xff]
      %v2275 = vld [vmem:[%s13 + $0x158] sm:$0xff]
      %v2276 = vld [vmem:[%s13 + $0x160] sm:$0xff]
      %v2277 = vld [vmem:[%s13 + $0x168] sm:$0xff]
      %v2278 = vld [vmem:[%s13 + $0x170] sm:$0xff]
      %v2279 = vld [vmem:[%s13 + $0x178] sm:$0xff]
      %v2280 = vld [vmem:[%s13 + $0x180] sm:$0xff]
      %v2281 = vld [vmem:[%s13 + $0x188] sm:$0xff]
      %v2282 = vld [vmem:[%s13 + $0x190] sm:$0xff]
      %v2283 = vld [vmem:[%s13 + $0x198] sm:$0xff]
      %v2284 = vld [vmem:[%s13 + $0x1a0] sm:$0xff]
      %v2285 = vld [vmem:[%s13 + $0x1a8] sm:$0xff]
      %v2286 = vld [vmem:[%s13 + $0x1b0] sm:$0xff]
      %v2287 = vld [vmem:[%s13 + $0x1b8] sm:$0xff]
      %v2288 = vld [vmem:[%s13 + $0x1c0] sm:$0xff]
      %v2289 = vld [vmem:[%s13 + $0x1c8] sm:$0xff]
      %v2290 = vld [vmem:[%s13 + $0x1d0] sm:$0xff]
      %v2291 = vld [vmem:[%s13 + $0x1d8] sm:$0xff]
      %v2292 = vld [vmem:[%s13 + $0x1e0] sm:$0xff]
      %v2293 = vld [vmem:[%s13 + $0x1e8] sm:$0xff]
      %v2294 = vld [vmem:[%s13 + $0x1f0] sm:$0xff]
      %v2295 = vld [vmem:[%s13 + $0x1f8] sm:$0xff]
      %v2296 = vld [vmem:[%s13 + $0x200] sm:$0xff]
      %v2297 = vld [vmem:[%s13 + $0x208] sm:$0xff]
      %v2298 = vld [vmem:[%s13 + $0x210] sm:$0xff]
      %v2299 = vld [vmem:[%s13 + $0x218] sm:$0xff]
      %v2300 = vld [vmem:[%s13 + $0x220] sm:$0xff]
      %v2301 = vld [vmem:[%s13 + $0x228] sm:$0xff]
      %v2302 = vld [vmem:[%s13 + $0x230] sm:$0xff]
      %v2303 = vld [vmem:[%s13 + $0x238] sm:$0xff]
      %v2304 = vld [vmem:[%s13 + $0x240] sm:$0xff]
      %v2305 = vld [vmem:[%s13 + $0x248] sm:$0xff]
      %v2306 = vld [vmem:[%s13 + $0x250] sm:$0xff]
      %v2307 = vld [vmem:[%s13 + $0x258] sm:$0xff]
      %v2308 = vld [vmem:[%s13 + $0x260] sm:$0xff]
      %v2309 = vld [vmem:[%s13 + $0x268] sm:$0xff]
      %v2310 = vld [vmem:[%s13 + $0x270] sm:$0xff]
      %v2311 = vld [vmem:[%s13 + $0x278] sm:$0xff]
      %v2312 = vld [vmem:[%s13 + $0x280] sm:$0xff]
      %v2313 = vld [vmem:[%s13 + $0x288] sm:$0xff]
      %v2314 = vld [vmem:[%s13 + $0x290] sm:$0xff]
      %v2315 = vld [vmem:[%s13 + $0x298] sm:$0xff]
      %v2316 = vld [vmem:[%s13 + $0x2a0] sm:$0xff]
      %v2317 = vld [vmem:[%s13 + $0x2a8] sm:$0xff]
      %v2318 = vld [vmem:[%s13 + $0x2b0] sm:$0xff]
      %v2319 = vld [vmem:[%s13 + $0x2b8] sm:$0xff]
      %v2320 = vld [vmem:[%s13 + $0x2c0] sm:$0xff]
      %v2321 = vld [vmem:[%s13 + $0x2c8] sm:$0xff]
      %v2322 = vld [vmem:[%s13 + $0x2d0] sm:$0xff]
      %v2323 = vld [vmem:[%s13 + $0x2d8] sm:$0xff]
      %v2324 = vld [vmem:[%s13 + $0x2e0] sm:$0xff]
      %v2325 = vld [vmem:[%s13 + $0x2e8] sm:$0xff]
      %v2326 = vld [vmem:[%s13 + $0x2f0] sm:$0xff]
      %v2327 = vld [vmem:[%s13 + $0x2f8] sm:$0xff]
      %v2328 = vld [vmem:[%s13 + $0x300] sm:$0xff]
      %v2329 = vld [vmem:[%s13 + $0x308] sm:$0xff]
      %v2330 = vld [vmem:[%s13 + $0x310] sm:$0xff]
      %v2331 = vld [vmem:[%s13 + $0x318] sm:$0xff]
      %v2332 = vld [vmem:[%s13 + $0x320] sm:$0xff]
      %v2333 = vld [vmem:[%s13 + $0x328] sm:$0xff]
      %v2334 = vld [vmem:[%s13 + $0x330] sm:$0xff]
      %v2335 = vld [vmem:[%s13 + $0x338] sm:$0xff]
      %v2336 = vld [vmem:[%s13 + $0x340] sm:$0xff]
      %v2337 = vld [vmem:[%s13 + $0x348] sm:$0xff]
      %v2338 = vld [vmem:[%s13 + $0x350] sm:$0xff]
      %v2339 = vld [vmem:[%s13 + $0x358] sm:$0xff]
      %v2340 = vld [vmem:[%s13 + $0x360] sm:$0xff]
      %v2341 = vld [vmem:[%s13 + $0x368] sm:$0xff]
      %v2342 = vld [vmem:[%s13 + $0x370] sm:$0xff]
      %v2343 = vld [vmem:[%s13 + $0x378] sm:$0xff]
      %v2344 = vld [vmem:[%s13 + $0x380] sm:$0xff]
      %v2345 = vld [vmem:[%s13 + $0x388] sm:$0xff]
      %v2346 = vld [vmem:[%s13 + $0x390] sm:$0xff]
      %v2347 = vld [vmem:[%s13 + $0x398] sm:$0xff]
      %v2348 = vld [vmem:[%s13 + $0x3a0] sm:$0xff]
      %v2349 = vld [vmem:[%s13 + $0x3a8] sm:$0xff]
      %v2350 = vld [vmem:[%s13 + $0x3b0] sm:$0xff]
      %v2351 = vld [vmem:[%s13 + $0x3b8] sm:$0xff]
      %v2352 = vld [vmem:[%s13 + $0x3c0] sm:$0xff]
      %v2353 = vld [vmem:[%s13 + $0x3c8] sm:$0xff]
      %v2354 = vld [vmem:[%s13 + $0x3d0] sm:$0xff]
      %v2355 = vld [vmem:[%s13 + $0x3d8] sm:$0xff]
      %v2356 = vld [vmem:[%s13 + $0x3e0] sm:$0xff]
      %v2357 = vld [vmem:[%s13 + $0x3e8] sm:$0xff]
      %v2358 = vld [vmem:[%s13 + $0x3f0] sm:$0xff]
      %v2359 = vld [vmem:[%s13 + $0x3f8] sm:$0xff]
      %v2360 = vld [vmem:[%s13 + $0x400] sm:$0xff]
      %v2361 = vld [vmem:[%s13 + $0x408] sm:$0xff]
      %v2362 = vld [vmem:[%s13 + $0x410] sm:$0xff]
      %v2363 = vld [vmem:[%s13 + $0x418] sm:$0xff]
      %v2364 = vld [vmem:[%s13 + $0x420] sm:$0xff]
      %v2365 = vld [vmem:[%s13 + $0x428] sm:$0xff]
      %v2366 = vld [vmem:[%s13 + $0x430] sm:$0xff]
      %v2367 = vld [vmem:[%s13 + $0x438] sm:$0xff]
      %v2368 = vld [vmem:[%s13 + $0x440] sm:$0xff]
      %v2369 = vld [vmem:[%s13 + $0x448] sm:$0xff]
      %v2370 = vld [vmem:[%s13 + $0x450] sm:$0xff]
      %v2371 = vld [vmem:[%s13 + $0x458] sm:$0xff]
      %v2372 = vld [vmem:[%s13 + $0x460] sm:$0xff]
      %v2373 = vld [vmem:[%s13 + $0x468] sm:$0xff]
      %v2374 = vld [vmem:[%s13 + $0x470] sm:$0xff]
      %v2375 = vld [vmem:[%s13 + $0x478] sm:$0xff]
      %v2376 = vld [vmem:[%s13 + $0x480] sm:$0xff]
      %v2377 = vld [vmem:[%s13 + $0x488] sm:$0xff]
      %v2378 = vld [vmem:[%s13 + $0x490] sm:$0xff]
      %v2379 = vld [vmem:[%s13 + $0x498] sm:$0xff]
      %v2380 = vld [vmem:[%s13 + $0x4a0] sm:$0xff]
      %v2381 = vld [vmem:[%s13 + $0x4a8] sm:$0xff]
      %v2382 = vld [vmem:[%s13 + $0x4b0] sm:$0xff]
      %v2383 = vld [vmem:[%s13 + $0x4b8] sm:$0xff]
      %v2384 = vld [vmem:[%s13 + $0x4c0] sm:$0xff]
      %v2385 = vld [vmem:[%s13 + $0x4c8] sm:$0xff]
      %v2386 = vld [vmem:[%s13 + $0x4d0] sm:$0xff]
      %v2387 = vld [vmem:[%s13 + $0x4d8] sm:$0xff]
      %v2388 = vld [vmem:[%s13 + $0x4e0] sm:$0xff]
      %v2389 = vld [vmem:[%s13 + $0x4e8] sm:$0xff]
      %v2390 = vld [vmem:[%s13 + $0x4f0] sm:$0xff]
      %v2391 = vld [vmem:[%s13 + $0x4f8] sm:$0xff]
      %v2392 = vld [vmem:[%s13 + $0x500] sm:$0xff]
      %v2393 = vld [vmem:[%s13 + $0x508] sm:$0xff]
      %v2394 = vld [vmem:[%s13 + $0x510] sm:$0xff]
      %v2395 = vld [vmem:[%s13 + $0x518] sm:$0xff]
      %v2396 = vld [vmem:[%s13 + $0x520] sm:$0xff]
      %v2397 = vld [vmem:[%s13 + $0x528] sm:$0xff]
      %v2398 = vld [vmem:[%s13 + $0x530] sm:$0xff]
      %v2399 = vld [vmem:[%s13 + $0x538] sm:$0xff]
      %v2400 = vld [vmem:[%s13 + $0x540] sm:$0xff]
      %v2401 = vld [vmem:[%s13 + $0x548] sm:$0xff]
      %v2402 = vld [vmem:[%s13 + $0x550] sm:$0xff]
      %v2403 = vld [vmem:[%s13 + $0x558] sm:$0xff]
      %v2404 = vld [vmem:[%s13 + $0x560] sm:$0xff]
      %v2405 = vld [vmem:[%s13 + $0x568] sm:$0xff]
      %v2406 = vld [vmem:[%s13 + $0x570] sm:$0xff]
      %v2407 = vld [vmem:[%s13 + $0x578] sm:$0xff]
      %v2408 = vld [vmem:[%s13 + $0x580] sm:$0xff]
      %v2409 = vld [vmem:[%s13 + $0x588] sm:$0xff]
      %v2410 = vld [vmem:[%s13 + $0x590] sm:$0xff]
      %v2411 = vld [vmem:[%s13 + $0x598] sm:$0xff]
      %v2412 = vld [vmem:[%s13 + $0x5a0] sm:$0xff]
      %v2413 = vld [vmem:[%s13 + $0x5a8] sm:$0xff]
      %v2414 = vld [vmem:[%s13 + $0x5b0] sm:$0xff]
      %v2415 = vld [vmem:[%s13 + $0x5b8] sm:$0xff]
      %v2416 = vld [vmem:[%s13 + $0x5c0] sm:$0xff]
      %v2417 = vld [vmem:[%s13 + $0x5c8] sm:$0xff]
      %v2418 = vld [vmem:[%s13 + $0x5d0] sm:$0xff]
      %v2419 = vld [vmem:[%s13 + $0x5d8] sm:$0xff]
      %v2420 = vld [vmem:[%s13 + $0x5e0] sm:$0xff]
      %v2421 = vld [vmem:[%s13 + $0x5e8] sm:$0xff]
      %v2422 = vld [vmem:[%s13 + $0x5f0] sm:$0xff]
      %v2423 = vld [vmem:[%s13 + $0x5f8] sm:$0xff]
      %v2424 = vld [vmem:[%s13 + $0x600] sm:$0xff]
      %v2425 = vld [vmem:[%s13 + $0x608] sm:$0xff]
      %v2426 = vld [vmem:[%s13 + $0x610] sm:$0xff]
      %v2427 = vld [vmem:[%s13 + $0x618] sm:$0xff]
      %v2428 = vld [vmem:[%s13 + $0x620] sm:$0xff]
      %v2429 = vld [vmem:[%s13 + $0x628] sm:$0xff]
      %v2430 = vld [vmem:[%s13 + $0x630] sm:$0xff]
      %v2431 = vld [vmem:[%s13 + $0x638] sm:$0xff]
      %v2432 = vld [vmem:[%s13 + $0x640] sm:$0xff]
      %v2433 = vld [vmem:[%s13 + $0x648] sm:$0xff]
      %v2434 = vld [vmem:[%s13 + $0x650] sm:$0xff]
      %v2435 = vld [vmem:[%s13 + $0x658] sm:$0xff]
      %v2436 = vld [vmem:[%s13 + $0x660] sm:$0xff]
      %v2437 = vld [vmem:[%s13 + $0x668] sm:$0xff]
      %v2438 = vld [vmem:[%s13 + $0x670] sm:$0xff]
      %v2439 = vld [vmem:[%s13 + $0x678] sm:$0xff]
      %v2440 = vld [vmem:[%s13 + $0x680] sm:$0xff]
      %v2441 = vld [vmem:[%s13 + $0x688] sm:$0xff]
      %v2442 = vld [vmem:[%s13 + $0x690] sm:$0xff]
      %v2443 = vld [vmem:[%s13 + $0x698] sm:$0xff]
      %v2444 = vld [vmem:[%s13 + $0x6a0] sm:$0xff]
      %v2445 = vld [vmem:[%s13 + $0x6a8] sm:$0xff]
      %v2446 = vld [vmem:[%s13 + $0x6b0] sm:$0xff]
      %v2447 = vld [vmem:[%s13 + $0x6b8] sm:$0xff]
      %v2448 = vld [vmem:[%s13 + $0x6c0] sm:$0xff]
      %v2449 = vld [vmem:[%s13 + $0x6c8] sm:$0xff]
      %v2450 = vld [vmem:[%s13 + $0x6d0] sm:$0xff]
      %v2451 = vld [vmem:[%s13 + $0x6d8] sm:$0xff]
      %v2452 = vld [vmem:[%s13 + $0x6e0] sm:$0xff]
      %v2453 = vld [vmem:[%s13 + $0x6e8] sm:$0xff]
      %v2454 = vld [vmem:[%s13 + $0x6f0] sm:$0xff]
      %v2455 = vld [vmem:[%s13 + $0x6f8] sm:$0xff]
      %v2456 = vld [vmem:[%s13 + $0x700] sm:$0xff]
      %v2457 = vld [vmem:[%s13 + $0x708] sm:$0xff]
      %v2458 = vld [vmem:[%s13 + $0x710] sm:$0xff]
      %v2459 = vld [vmem:[%s13 + $0x718] sm:$0xff]
      %v2460 = vld [vmem:[%s13 + $0x720] sm:$0xff]
      %v2461 = vld [vmem:[%s13 + $0x728] sm:$0xff]
      %v2462 = vld [vmem:[%s13 + $0x730] sm:$0xff]
      %v2463 = vld [vmem:[%s13 + $0x738] sm:$0xff]
      %v2464 = vld [vmem:[%s13 + $0x740] sm:$0xff]
      %v2465 = vld [vmem:[%s13 + $0x748] sm:$0xff]
      %v2466 = vld [vmem:[%s13 + $0x750] sm:$0xff]
      %v2467 = vld [vmem:[%s13 + $0x758] sm:$0xff]
      %v2468 = vld [vmem:[%s13 + $0x760] sm:$0xff]
      %v2469 = vld [vmem:[%s13 + $0x768] sm:$0xff]
      %v2470 = vld [vmem:[%s13 + $0x770] sm:$0xff]
      %v2471 = vld [vmem:[%s13 + $0x778] sm:$0xff]
      %v2472 = vld [vmem:[%s13 + $0x780] sm:$0xff]
      %v2473 = vld [vmem:[%s13 + $0x788] sm:$0xff]
      %v2474 = vld [vmem:[%s13 + $0x790] sm:$0xff]
      %v2475 = vld [vmem:[%s13 + $0x798] sm:$0xff]
      %v2476 = vld [vmem:[%s13 + $0x7a0] sm:$0xff]
      %v2477 = vld [vmem:[%s13 + $0x7a8] sm:$0xff]
      %v2478 = vld [vmem:[%s13 + $0x7b0] sm:$0xff]
      %v2479 = vld [vmem:[%s13 + $0x7b8] sm:$0xff]
      %v2480 = vld [vmem:[%s13 + $0x7c0] sm:$0xff]
      %v2481 = vld [vmem:[%s13 + $0x7c8] sm:$0xff]
      %v2482 = vld [vmem:[%s13 + $0x7d0] sm:$0xff]
      %v2483 = vld [vmem:[%s13 + $0x7d8] sm:$0xff]
      %v2484 = vld [vmem:[%s13 + $0x7e0] sm:$0xff]
      %v2485 = vld [vmem:[%s13 + $0x7e8] sm:$0xff]
      %v2486 = vld [vmem:[%s13 + $0x7f0] sm:$0xff]
      %v2487 = vld [vmem:[%s13 + $0x7f8] sm:$0xff]
      %v2488 = vld [vmem:[%s14] sm:$0x1]
      %v2490 = vperm.slane %v2488, 0
      %2492 = vmatpush.msra.mxu0 %v2247
      %2493 = vmatpush.msra.mxu0 %v2246
      %2494 = vmatpush.msra.mxu0 %v2245
      %2495 = vmatpush.msra.mxu0 %v2244
      %2496 = vmatpush.msra.mxu0 %v2243
      %2497 = vmatpush.msra.mxu0 %v2242
      %2498 = vmatpush.msra.mxu0 %v2241
      %2499 = vmatpush.msra.mxu0 %v2240
      %2500 = vmatpush.msra.mxu0 %v2239
      %2501 = vmatpush.msra.mxu0 %v2238
      %2502 = vmatpush.msra.mxu0 %v2237
      %2503 = vmatpush.msra.mxu0 %v2236
      %2504 = vmatpush.msra.mxu0 %v2235
      %2505 = vmatpush.msra.mxu0 %v2234
      %2506 = vmatpush.msra.mxu0 %v2233
      %2507 = vmatpush.msra.mxu0 %v2232
      %2508 = vmatmul.f32.gmra.mxu0 %v2200
      %v2509 = vpop.f32.mrf.mxu0
      %v2510 = vadd.f32 %v2490, %v2509
      %2511 = vmatmul.f32.gmra.mxu0 %v2216
      %v2512 = vpop.f32.mrf.mxu0
      %v2513 = vadd.f32 %v2490, %v2512
      %2514 = vdwg.mxu0
      %2515 = vmatpush.msra.mxu0 %v2263
      %2516 = vmatpush.msra.mxu0 %v2262
      %2517 = vmatpush.msra.mxu0 %v2261
      %2518 = vmatpush.msra.mxu0 %v2260
      %2519 = vmatpush.msra.mxu0 %v2259
      %2520 = vmatpush.msra.mxu0 %v2258
      %2521 = vmatpush.msra.mxu0 %v2257
      %2522 = vmatpush.msra.mxu0 %v2256
      %2523 = vmatpush.msra.mxu0 %v2255
      %2524 = vmatpush.msra.mxu0 %v2254
      %2525 = vmatpush.msra.mxu0 %v2253
      %2526 = vmatpush.msra.mxu0 %v2252
      %2527 = vmatpush.msra.mxu0 %v2251
      %2528 = vmatpush.msra.mxu0 %v2250
      %2529 = vmatpush.msra.mxu0 %v2249
      %2530 = vmatpush.msra.mxu0 %v2248
      %2531 = vmatmul.f32.gmra.mxu0 %v2201
      %v2532 = vpop.f32.mrf.mxu0
      %v2533 = vadd.f32 %v2510, %v2532
      %2534 = vmatmul.f32.gmra.mxu0 %v2217
      %v2535 = vpop.f32.mrf.mxu0
      %v2536 = vadd.f32 %v2513, %v2535
      %2537 = vdwg.mxu0
      %2538 = vmatpush.msra.mxu0 %v2279
      %2539 = vmatpush.msra.mxu0 %v2278
      %2540 = vmatpush.msra.mxu0 %v2277
      %2541 = vmatpush.msra.mxu0 %v2276
      %2542 = vmatpush.msra.mxu0 %v2275
      %2543 = vmatpush.msra.mxu0 %v2274
      %2544 = vmatpush.msra.mxu0 %v2273
      %2545 = vmatpush.msra.mxu0 %v2272
      %2546 = vmatpush.msra.mxu0 %v2271
      %2547 = vmatpush.msra.mxu0 %v2270
      %2548 = vmatpush.msra.mxu0 %v2269
      %2549 = vmatpush.msra.mxu0 %v2268
      %2550 = vmatpush.msra.mxu0 %v2267
      %2551 = vmatpush.msra.mxu0 %v2266
      %2552 = vmatpush.msra.mxu0 %v2265
      %2553 = vmatpush.msra.mxu0 %v2264
      %2554 = vmatmul.f32.gmra.mxu0 %v2202
      %v2555 = vpop.f32.mrf.mxu0
      %v2556 = vadd.f32 %v2533, %v2555
      %2557 = vmatmul.f32.gmra.mxu0 %v2218
      %v2558 = vpop.f32.mrf.mxu0
      %v2559 = vadd.f32 %v2536, %v2558
      %2560 = vdwg.mxu0
      %2561 = vmatpush.msra.mxu0 %v2295
      %2562 = vmatpush.msra.mxu0 %v2294
      %2563 = vmatpush.msra.mxu0 %v2293
      %2564 = vmatpush.msra.mxu0 %v2292
      %2565 = vmatpush.msra.mxu0 %v2291
      %2566 = vmatpush.msra.mxu0 %v2290
      %2567 = vmatpush.msra.mxu0 %v2289
      %2568 = vmatpush.msra.mxu0 %v2288
      %2569 = vmatpush.msra.mxu0 %v2287
      %2570 = vmatpush.msra.mxu0 %v2286
      %2571 = vmatpush.msra.mxu0 %v2285
      %2572 = vmatpush.msra.mxu0 %v2284
      %2573 = vmatpush.msra.mxu0 %v2283
      %2574 = vmatpush.msra.mxu0 %v2282
      %2575 = vmatpush.msra.mxu0 %v2281
      %2576 = vmatpush.msra.mxu0 %v2280
      %2577 = vmatmul.f32.gmra.mxu0 %v2203
      %v2578 = vpop.f32.mrf.mxu0
      %v2579 = vadd.f32 %v2556, %v2578
      %2580 = vmatmul.f32.gmra.mxu0 %v2219
      %v2581 = vpop.f32.mrf.mxu0
      %v2582 = vadd.f32 %v2559, %v2581
      %2583 = vdwg.mxu0
      %2584 = vmatpush.msra.mxu0 %v2311
      %2585 = vmatpush.msra.mxu0 %v2310
      %2586 = vmatpush.msra.mxu0 %v2309
      %2587 = vmatpush.msra.mxu0 %v2308
      %2588 = vmatpush.msra.mxu0 %v2307
      %2589 = vmatpush.msra.mxu0 %v2306
      %2590 = vmatpush.msra.mxu0 %v2305
      %2591 = vmatpush.msra.mxu0 %v2304
      %2592 = vmatpush.msra.mxu0 %v2303
      %2593 = vmatpush.msra.mxu0 %v2302
      %2594 = vmatpush.msra.mxu0 %v2301
      %2595 = vmatpush.msra.mxu0 %v2300
      %2596 = vmatpush.msra.mxu0 %v2299
      %2597 = vmatpush.msra.mxu0 %v2298
      %2598 = vmatpush.msra.mxu0 %v2297
      %2599 = vmatpush.msra.mxu0 %v2296
      %2600 = vmatmul.f32.gmra.mxu0 %v2204
      %v2601 = vpop.f32.mrf.mxu0
      %v2602 = vadd.f32 %v2579, %v2601
      %2603 = vmatmul.f32.gmra.mxu0 %v2220
      %v2604 = vpop.f32.mrf.mxu0
      %v2605 = vadd.f32 %v2582, %v2604
      %2606 = vdwg.mxu0
      %2607 = vmatpush.msra.mxu0 %v2327
      %2608 = vmatpush.msra.mxu0 %v2326
      %2609 = vmatpush.msra.mxu0 %v2325
      %2610 = vmatpush.msra.mxu0 %v2324
      %2611 = vmatpush.msra.mxu0 %v2323
      %2612 = vmatpush.msra.mxu0 %v2322
      %2613 = vmatpush.msra.mxu0 %v2321
      %2614 = vmatpush.msra.mxu0 %v2320
      %2615 = vmatpush.msra.mxu0 %v2319
      %2616 = vmatpush.msra.mxu0 %v2318
      %2617 = vmatpush.msra.mxu0 %v2317
      %2618 = vmatpush.msra.mxu0 %v2316
      %2619 = vmatpush.msra.mxu0 %v2315
      %2620 = vmatpush.msra.mxu0 %v2314
      %2621 = vmatpush.msra.mxu0 %v2313
      %2622 = vmatpush.msra.mxu0 %v2312
      %2623 = vmatmul.f32.gmra.mxu0 %v2205
      %v2624 = vpop.f32.mrf.mxu0
      %v2625 = vadd.f32 %v2602, %v2624
      %2626 = vmatmul.f32.gmra.mxu0 %v2221
      %v2627 = vpop.f32.mrf.mxu0
      %v2628 = vadd.f32 %v2605, %v2627
      %2629 = vdwg.mxu0
      %2630 = vmatpush.msra.mxu0 %v2343
      %2631 = vmatpush.msra.mxu0 %v2342
      %2632 = vmatpush.msra.mxu0 %v2341
      %2633 = vmatpush.msra.mxu0 %v2340
      %2634 = vmatpush.msra.mxu0 %v2339
      %2635 = vmatpush.msra.mxu0 %v2338
      %2636 = vmatpush.msra.mxu0 %v2337
      %2637 = vmatpush.msra.mxu0 %v2336
      %2638 = vmatpush.msra.mxu0 %v2335
      %2639 = vmatpush.msra.mxu0 %v2334
      %2640 = vmatpush.msra.mxu0 %v2333
      %2641 = vmatpush.msra.mxu0 %v2332
      %2642 = vmatpush.msra.mxu0 %v2331
      %2643 = vmatpush.msra.mxu0 %v2330
      %2644 = vmatpush.msra.mxu0 %v2329
      %2645 = vmatpush.msra.mxu0 %v2328
      %2646 = vmatmul.f32.gmra.mxu0 %v2206
      %v2647 = vpop.f32.mrf.mxu0
      %v2648 = vadd.f32 %v2625, %v2647
      %2649 = vmatmul.f32.gmra.mxu0 %v2222
      %v2650 = vpop.f32.mrf.mxu0
      %v2651 = vadd.f32 %v2628, %v2650
      %2652 = vdwg.mxu0
      %2653 = vmatpush.msra.mxu0 %v2359
      %2654 = vmatpush.msra.mxu0 %v2358
      %2655 = vmatpush.msra.mxu0 %v2357
      %2656 = vmatpush.msra.mxu0 %v2356
      %2657 = vmatpush.msra.mxu0 %v2355
      %2658 = vmatpush.msra.mxu0 %v2354
      %2659 = vmatpush.msra.mxu0 %v2353
      %2660 = vmatpush.msra.mxu0 %v2352
      %2661 = vmatpush.msra.mxu0 %v2351
      %2662 = vmatpush.msra.mxu0 %v2350
      %2663 = vmatpush.msra.mxu0 %v2349
      %2664 = vmatpush.msra.mxu0 %v2348
      %2665 = vmatpush.msra.mxu0 %v2347
      %2666 = vmatpush.msra.mxu0 %v2346
      %2667 = vmatpush.msra.mxu0 %v2345
      %2668 = vmatpush.msra.mxu0 %v2344
      %2669 = vmatmul.f32.gmra.mxu0 %v2207
      %v2670 = vpop.f32.mrf.mxu0
      %v2671 = vadd.f32 %v2648, %v2670
      %2672 = vmatmul.f32.gmra.mxu0 %v2223
      %v2673 = vpop.f32.mrf.mxu0
      %v2674 = vadd.f32 %v2651, %v2673
      %2675 = vdwg.mxu0
      %2676 = vmatpush.msra.mxu0 %v2375
      %2677 = vmatpush.msra.mxu0 %v2374
      %2678 = vmatpush.msra.mxu0 %v2373
      %2679 = vmatpush.msra.mxu0 %v2372
      %2680 = vmatpush.msra.mxu0 %v2371
      %2681 = vmatpush.msra.mxu0 %v2370
      %2682 = vmatpush.msra.mxu0 %v2369
      %2683 = vmatpush.msra.mxu0 %v2368
      %2684 = vmatpush.msra.mxu0 %v2367
      %2685 = vmatpush.msra.mxu0 %v2366
      %2686 = vmatpush.msra.mxu0 %v2365
      %2687 = vmatpush.msra.mxu0 %v2364
      %2688 = vmatpush.msra.mxu0 %v2363
      %2689 = vmatpush.msra.mxu0 %v2362
      %2690 = vmatpush.msra.mxu0 %v2361
      %2691 = vmatpush.msra.mxu0 %v2360
      %2692 = vmatmul.f32.gmra.mxu0 %v2208
      %v2693 = vpop.f32.mrf.mxu0
      %v2694 = vadd.f32 %v2671, %v2693
      %2695 = vmatmul.f32.gmra.mxu0 %v2224
      %v2696 = vpop.f32.mrf.mxu0
      %v2697 = vadd.f32 %v2674, %v2696
      %2698 = vdwg.mxu0
      %2699 = vmatpush.msra.mxu0 %v2391
      %2700 = vmatpush.msra.mxu0 %v2390
      %2701 = vmatpush.msra.mxu0 %v2389
      %2702 = vmatpush.msra.mxu0 %v2388
      %2703 = vmatpush.msra.mxu0 %v2387
      %2704 = vmatpush.msra.mxu0 %v2386
      %2705 = vmatpush.msra.mxu0 %v2385
      %2706 = vmatpush.msra.mxu0 %v2384
      %2707 = vmatpush.msra.mxu0 %v2383
      %2708 = vmatpush.msra.mxu0 %v2382
      %2709 = vmatpush.msra.mxu0 %v2381
      %2710 = vmatpush.msra.mxu0 %v2380
      %2711 = vmatpush.msra.mxu0 %v2379
      %2712 = vmatpush.msra.mxu0 %v2378
      %2713 = vmatpush.msra.mxu0 %v2377
      %2714 = vmatpush.msra.mxu0 %v2376
      %2715 = vmatmul.f32.gmra.mxu0 %v2209
      %v2716 = vpop.f32.mrf.mxu0
      %v2717 = vadd.f32 %v2694, %v2716
      %2718 = vmatmul.f32.gmra.mxu0 %v2225
      %v2719 = vpop.f32.mrf.mxu0
      %v2720 = vadd.f32 %v2697, %v2719
      %2721 = vdwg.mxu0
      %2722 = vmatpush.msra.mxu0 %v2407
      %2723 = vmatpush.msra.mxu0 %v2406
      %2724 = vmatpush.msra.mxu0 %v2405
      %2725 = vmatpush.msra.mxu0 %v2404
      %2726 = vmatpush.msra.mxu0 %v2403
      %2727 = vmatpush.msra.mxu0 %v2402
      %2728 = vmatpush.msra.mxu0 %v2401
      %2729 = vmatpush.msra.mxu0 %v2400
      %2730 = vmatpush.msra.mxu0 %v2399
      %2731 = vmatpush.msra.mxu0 %v2398
      %2732 = vmatpush.msra.mxu0 %v2397
      %2733 = vmatpush.msra.mxu0 %v2396
      %2734 = vmatpush.msra.mxu0 %v2395
      %2735 = vmatpush.msra.mxu0 %v2394
      %2736 = vmatpush.msra.mxu0 %v2393
      %2737 = vmatpush.msra.mxu0 %v2392
      %2738 = vmatmul.f32.gmra.mxu0 %v2210
      %v2739 = vpop.f32.mrf.mxu0
      %v2740 = vadd.f32 %v2717, %v2739
      %2741 = vmatmul.f32.gmra.mxu0 %v2226
      %v2742 = vpop.f32.mrf.mxu0
      %v2743 = vadd.f32 %v2720, %v2742
      %2744 = vdwg.mxu0
      %2745 = vmatpush.msra.mxu0 %v2423
      %2746 = vmatpush.msra.mxu0 %v2422
      %2747 = vmatpush.msra.mxu0 %v2421
      %2748 = vmatpush.msra.mxu0 %v2420
      %2749 = vmatpush.msra.mxu0 %v2419
      %2750 = vmatpush.msra.mxu0 %v2418
      %2751 = vmatpush.msra.mxu0 %v2417
      %2752 = vmatpush.msra.mxu0 %v2416
      %2753 = vmatpush.msra.mxu0 %v2415
      %2754 = vmatpush.msra.mxu0 %v2414
      %2755 = vmatpush.msra.mxu0 %v2413
      %2756 = vmatpush.msra.mxu0 %v2412
      %2757 = vmatpush.msra.mxu0 %v2411
      %2758 = vmatpush.msra.mxu0 %v2410
      %2759 = vmatpush.msra.mxu0 %v2409
      %2760 = vmatpush.msra.mxu0 %v2408
      %2761 = vmatmul.f32.gmra.mxu0 %v2211
      %v2762 = vpop.f32.mrf.mxu0
      %v2763 = vadd.f32 %v2740, %v2762
      %2764 = vmatmul.f32.gmra.mxu0 %v2227
      %v2765 = vpop.f32.mrf.mxu0
      %v2766 = vadd.f32 %v2743, %v2765
      %2767 = vdwg.mxu0
      %2768 = vmatpush.msra.mxu0 %v2439
      %2769 = vmatpush.msra.mxu0 %v2438
      %2770 = vmatpush.msra.mxu0 %v2437
      %2771 = vmatpush.msra.mxu0 %v2436
      %2772 = vmatpush.msra.mxu0 %v2435
      %2773 = vmatpush.msra.mxu0 %v2434
      %2774 = vmatpush.msra.mxu0 %v2433
      %2775 = vmatpush.msra.mxu0 %v2432
      %2776 = vmatpush.msra.mxu0 %v2431
      %2777 = vmatpush.msra.mxu0 %v2430
      %2778 = vmatpush.msra.mxu0 %v2429
      %2779 = vmatpush.msra.mxu0 %v2428
      %2780 = vmatpush.msra.mxu0 %v2427
      %2781 = vmatpush.msra.mxu0 %v2426
      %2782 = vmatpush.msra.mxu0 %v2425
      %2783 = vmatpush.msra.mxu0 %v2424
      %2784 = vmatmul.f32.gmra.mxu0 %v2212
      %v2785 = vpop.f32.mrf.mxu0
      %v2786 = vadd.f32 %v2763, %v2785
      %2787 = vmatmul.f32.gmra.mxu0 %v2228
      %v2788 = vpop.f32.mrf.mxu0
      %v2789 = vadd.f32 %v2766, %v2788
      %2790 = vdwg.mxu0
      %2791 = vmatpush.msra.mxu0 %v2455
      %2792 = vmatpush.msra.mxu0 %v2454
      %2793 = vmatpush.msra.mxu0 %v2453
      %2794 = vmatpush.msra.mxu0 %v2452
      %2795 = vmatpush.msra.mxu0 %v2451
      %2796 = vmatpush.msra.mxu0 %v2450
      %2797 = vmatpush.msra.mxu0 %v2449
      %2798 = vmatpush.msra.mxu0 %v2448
      %2799 = vmatpush.msra.mxu0 %v2447
      %2800 = vmatpush.msra.mxu0 %v2446
      %2801 = vmatpush.msra.mxu0 %v2445
      %2802 = vmatpush.msra.mxu0 %v2444
      %2803 = vmatpush.msra.mxu0 %v2443
      %2804 = vmatpush.msra.mxu0 %v2442
      %2805 = vmatpush.msra.mxu0 %v2441
      %2806 = vmatpush.msra.mxu0 %v2440
      %2807 = vmatmul.f32.gmra.mxu0 %v2213
      %v2808 = vpop.f32.mrf.mxu0
      %v2809 = vadd.f32 %v2786, %v2808
      %2810 = vmatmul.f32.gmra.mxu0 %v2229
      %v2811 = vpop.f32.mrf.mxu0
      %v2812 = vadd.f32 %v2789, %v2811
      %2813 = vdwg.mxu0
      %2814 = vmatpush.msra.mxu0 %v2471
      %2815 = vmatpush.msra.mxu0 %v2470
      %2816 = vmatpush.msra.mxu0 %v2469
      %2817 = vmatpush.msra.mxu0 %v2468
      %2818 = vmatpush.msra.mxu0 %v2467
      %2819 = vmatpush.msra.mxu0 %v2466
      %2820 = vmatpush.msra.mxu0 %v2465
      %2821 = vmatpush.msra.mxu0 %v2464
      %2822 = vmatpush.msra.mxu0 %v2463
      %2823 = vmatpush.msra.mxu0 %v2462
      %2824 = vmatpush.msra.mxu0 %v2461
      %2825 = vmatpush.msra.mxu0 %v2460
      %2826 = vmatpush.msra.mxu0 %v2459
      %2827 = vmatpush.msra.mxu0 %v2458
      %2828 = vmatpush.msra.mxu0 %v2457
      %2829 = vmatpush.msra.mxu0 %v2456
      %2830 = vmatmul.f32.gmra.mxu0 %v2214
      %v2831 = vpop.f32.mrf.mxu0
      %v2832 = vadd.f32 %v2809, %v2831
      %2833 = vmatmul.f32.gmra.mxu0 %v2230
      %v2834 = vpop.f32.mrf.mxu0
      %v2835 = vadd.f32 %v2812, %v2834
      %2836 = vdwg.mxu0
      %2837 = vmatpush.msra.mxu0 %v2487
      %2838 = vmatpush.msra.mxu0 %v2486
      %2839 = vmatpush.msra.mxu0 %v2485
      %2840 = vmatpush.msra.mxu0 %v2484
      %2841 = vmatpush.msra.mxu0 %v2483
      %2842 = vmatpush.msra.mxu0 %v2482
      %2843 = vmatpush.msra.mxu0 %v2481
      %2844 = vmatpush.msra.mxu0 %v2480
      %2845 = vmatpush.msra.mxu0 %v2479
      %2846 = vmatpush.msra.mxu0 %v2478
      %2847 = vmatpush.msra.mxu0 %v2477
      %2848 = vmatpush.msra.mxu0 %v2476
      %2849 = vmatpush.msra.mxu0 %v2475
      %2850 = vmatpush.msra.mxu0 %v2474
      %2851 = vmatpush.msra.mxu0 %v2473
      %2852 = vmatpush.msra.mxu0 %v2472
      %2853 = vmatmul.f32.gmra.mxu0 %v2215
      %v2854 = vpop.f32.mrf.mxu0
      %v2855 = vadd.f32 %v2832, %v2854
      %2856 = vmatmul.f32.gmra.mxu0 %v2231
      %v2857 = vpop.f32.mrf.mxu0
      %v2858 = vadd.f32 %v2835, %v2857
      %2859 = vdwg.mxu0
      %v2860 = vadd.f32 %v1724, %v2855
      %v2861 = vadd.f32 %v1725, %v2858
      %v2862 = vsel %vm1175, %v2860, 0.0
      %2863 = vadd.xlane.f32.xlu0 %v2862
      %v2864 = vpop.xlane.xlu0 %2863
      %v2865 = vsel %vm1175, %v2861, 0.0
      %2866 = vadd.xlane.f32.xlu0 %v2865
      %v2867 = vpop.xlane.xlu0 %2866
      %v2868 = vmul.f32 %v2864, %v1675
      %v2869 = vmul.f32 %v2867, %v1675
      %v2870 = vsub.f32 %v2860, %v2868
      %v2871 = vsub.f32 %v2861, %v2869
      %v2872 = vmul.f32 %v2870, %v2870
      %v2873 = vmul.f32 %v2871, %v2871
      %v2874 = vsel %vm1175, %v2872, 0.0
      %2875 = vadd.xlane.f32.xlu0 %v2874
      %v2876 = vpop.xlane.xlu0 %2875
      %v2877 = vsel %vm1175, %v2873, 0.0
      %2878 = vadd.xlane.f32.xlu0 %v2877
      %v2879 = vpop.xlane.xlu0 %2878
      %v2880 = vmul.f32 %v2876, %v1675
      %v2881 = vmul.f32 %v2879, %v1675
      %v2882 = vadd.f32 %v2880, 1e-05
      %v2883 = vadd.f32 %v2881, 1e-05
      %v2884 = vrsqrt.pop %v2882
      %v2885 = vmul.f32 %v2884, %v2882
      %v2886 = vmul.f32 %v2885, %v2884
      %v2887 = vmul.f32 0.5, %v2886
      %v2888 = vsub.f32 1.5, %v2887
      %v2889 = vmul.f32 %v2884, %v2888
      %vm2890 = vweird.f32 %v2882
      %vm2891 = vweird.f32 %v2884
      %vm2892 = vmor %vm2890, %vm2891
      %v2893 = vsel %vm2892, %v2884, %v2889
      %v2894 = vrsqrt.pop %v2883
      %v2895 = vmul.f32 %v2894, %v2883
      %v2896 = vmul.f32 %v2895, %v2894
      %v2897 = vmul.f32 0.5, %v2896
      %v2898 = vsub.f32 1.5, %v2897
      %v2899 = vmul.f32 %v2894, %v2898
      %vm2900 = vweird.f32 %v2883
      %vm2901 = vweird.f32 %v2894
      %vm2902 = vmor %vm2900, %vm2901
      %v2903 = vsel %vm2902, %v2894, %v2899
      %v2904 = vmul.f32 %v2870, %v2893
      %v2905 = vmul.f32 %v2871, %v2903
      %v2906 = vld [vmem:[%s17] sm:$0x1]
      %v2908 = vperm.slane %v2906, 0
      %v2910 = vmul.f32 %v2904, %v2908
      %v2911 = vmul.f32 %v2905, %v2908
      %v2912 = vld [vmem:[%s18] sm:$0x1]
      %v2914 = vperm.slane %v2912, 0
      %v2916 = vadd.f32 %v2910, %v2914
      %v2917 = vadd.f32 %v2911, %v2914
      %s2918 = scalar_lea.vmem %s7, 32
      %v2919 = vld [vmem:[%s2918] sm:$0xff]
      %v2920 = vld [vmem:[%s2918 + $0x8] sm:$0xff]
      %v2921 = vld [vmem:[%s2918 + $0x10] sm:$0xff]
      %v2922 = vld [vmem:[%s2918 + $0x18] sm:$0xff]
      %s2923 = scalar_lea.vmem %s8, 1
      %v2924 = vld [vmem:[%s2923] sm:$0x1]
      %v2926 = vperm.slane %v2924, 0
      %v2929 = vsel %vm1175, %v2916, 0
      %v2932 = vsel %vm1175, %v2917, 0
      %2934 = vmatpush.msra.mxu0 0.0
      %2935 = vmatpush.msra.mxu0 0.0
      %2936 = vmatpush.msra.mxu0 0.0
      %2937 = vmatpush.msra.mxu0 0.0
      %2938 = vmatpush.msra.mxu0 0.0
      %2939 = vmatpush.msra.mxu0 0.0
      %2940 = vmatpush.msra.mxu0 0.0
      %2941 = vmatpush.msra.mxu0 0.0
      %2942 = vmatpush.msra.mxu0 0.0
      %2943 = vmatpush.msra.mxu0 0.0
      %2944 = vmatpush.msra.mxu0 0.0
      %2945 = vmatpush.msra.mxu0 0.0
      %2946 = vmatpush.msra.mxu0 %v2922
      %2947 = vmatpush.msra.mxu0 %v2921
      %2948 = vmatpush.msra.mxu0 %v2920
      %2949 = vmatpush.msra.mxu0 %v2919
      %2950 = vmatmul.f32.gmra.mxu0 %v2929
      %v2951 = vpop.f32.mrf.mxu0
      %v2952 = vadd.f32 %v2926, %v2951
      %2953 = vmatmul.f32.gmra.mxu0 %v2932
      %v2954 = vpop.f32.mrf.mxu0
      %v2955 = vadd.f32 %v2926, %v2954
      %2956 = vdwg.mxu0
      %v2957 = vmul.f32 %v2952, 0.35355338
      %v2958 = vmul.f32 %v2955, 0.35355338
      %2961 = vrot.lane.b32.xlu0 %v2952, 96
      %v2962 = vpop.permute.xlu0 %2961
      %2963 = vrot.lane.b32.xlu0 %v2955, 96
      %v2964 = vpop.permute.xlu0 %2963
      %v2966 = vsel %vm1213, %v2957, 0
      %v2969 = vsel %vm1213, %v2958, 0
      %v2971 = vsel %vm1213, %v2962, 0
      %v2973 = vsel %vm1213, %v2964, 0
      %2975 = vmatpush.xpose.msra.mxu0 0.0
      %2976 = vmatpush.xpose.msra.mxu0 0.0
      %2977 = vmatpush.xpose.msra.mxu0 0.0
      %2978 = vmatpush.xpose.msra.mxu0 0.0
      %2979 = vmatpush.xpose.msra.mxu0 0.0
      %2980 = vmatpush.xpose.msra.mxu0 0.0
      %2981 = vmatpush.xpose.msra.mxu0 0.0
      %2982 = vmatpush.xpose.msra.mxu0 0.0
      %2983 = vmatpush.xpose.msra.mxu0 0.0
      %2984 = vmatpush.xpose.msra.mxu0 0.0
      %2985 = vmatpush.xpose.msra.mxu0 0.0
      %2986 = vmatpush.xpose.msra.mxu0 0.0
      %2987 = vmatpush.xpose.msra.mxu0 0.0
      %2988 = vmatpush.xpose.msra.mxu0 0.0
      %2989 = vmatpush.xpose.msra.mxu0 %v2973
      %2990 = vmatpush.xpose.msra.mxu0 %v2971
      %2991 = vmatmul.f32.gmra.mxu0 %v2966
      %v2992 = vpop.f32.mrf.mxu0
      %v2993 = vadd.f32 %v1166, %v2992
      %2994 = vmatmul.f32.gmra.mxu0 %v2969
      %v2995 = vpop.f32.mrf.mxu0
      %v2996 = vadd.f32 %v1166, %v2995
      %2997 = vdwg.mxu0
      %v2998 = vsel %vm1247, %v2993, -inf
      %2999 = vmax.xlane.f32.xlu0 %v2998
      %v3000 = vpop.xlane.xlu0 %2999
      %v3001 = vsel %vm1247, %v2996, -inf
      %3002 = vmax.xlane.f32.xlu0 %v3001
      %v3003 = vpop.xlane.xlu0 %3002
      %v3004 = vsub.f32 %v2993, %v3000
      %v3005 = vsub.f32 %v2996, %v3003
      %v3006 = vmul.f32 %v3004, 1.442695
      %v3007 = vpow.pop %v3006
      %v3008 = vmul.f32 %v3005, 1.442695
      %v3009 = vpow.pop %v3008
      %v3010 = vsel %vm1247, %v3007, 0.0
      %3011 = vadd.xlane.f32.xlu0 %v3010
      %v3012 = vpop.xlane.xlu0 %3011
      %v3013 = vsel %vm1247, %v3009, 0.0
      %3014 = vadd.xlane.f32.xlu0 %v3013
      %v3015 = vpop.xlane.xlu0 %3014
      %v3016 = vrcp.pop %v3012
      %v3017 = vrcp.pop %v3015
      %v3018 = vmul.f32 %v3007, %v3016
      %v3019 = vmul.f32 %v3009, %v3017
      %3020 = vrot.lane.b32.xlu0 %v2952, 64
      %v3021 = vpop.permute.xlu0 %3020
      %3022 = vrot.lane.b32.xlu0 %v2955, 64
      %v3023 = vpop.permute.xlu0 %3022
      %v3027 = vsel %vm1247, %v3018, 0
      %v3030 = vsel %vm1247, %v3019, 0
      %3032 = vmatpush.msra.mxu0 0.0
      %3033 = vmatpush.msra.mxu0 0.0
      %3034 = vmatpush.msra.mxu0 0.0
      %3035 = vmatpush.msra.mxu0 0.0
      %3036 = vmatpush.msra.mxu0 0.0
      %3037 = vmatpush.msra.mxu0 0.0
      %3038 = vmatpush.msra.mxu0 0.0
      %3039 = vmatpush.msra.mxu0 0.0
      %3040 = vmatpush.msra.mxu0 0.0
      %3041 = vmatpush.msra.mxu0 0.0
      %3042 = vmatpush.msra.mxu0 0.0
      %3043 = vmatpush.msra.mxu0 0.0
      %3044 = vmatpush.msra.mxu0 0.0
      %3045 = vmatpush.msra.mxu0 0.0
      %3046 = vmatpush.msra.mxu0 %v3023
      %3047 = vmatpush.msra.mxu0 %v3021
      %3048 = vmatmul.f32.gmra.mxu0 %v3027
      %v3049 = vpop.f32.mrf.mxu0
      %v3050 = vadd.f32 0.0, %v3049
      %3051 = vmatmul.f32.gmra.mxu0 %v3030
      %v3052 = vpop.f32.mrf.mxu0
      %v3053 = vadd.f32 0.0, %v3052
      %3054 = vdwg.mxu0
      %3055 = vrot.lane.b32.xlu0 %v2957, 120
      %v3056 = vpop.permute.xlu0 %3055
      %3057 = vrot.lane.b32.xlu0 %v2958, 120
      %v3058 = vpop.permute.xlu0 %3057
      %3059 = vrot.lane.b32.xlu0 %v2952, 88
      %v3060 = vpop.permute.xlu0 %3059
      %3061 = vrot.lane.b32.xlu0 %v2955, 88
      %v3062 = vpop.permute.xlu0 %3061
      %v3063 = vsel %vm1213, %v3056, 0
      %v3065 = vsel %vm1213, %v3058, 0
      %v3067 = vsel %vm1213, %v3060, 0
      %v3069 = vsel %vm1213, %v3062, 0
      %3071 = vmatpush.xpose.msra.mxu0 0.0
      %3072 = vmatpush.xpose.msra.mxu0 0.0
      %3073 = vmatpush.xpose.msra.mxu0 0.0
      %3074 = vmatpush.xpose.msra.mxu0 0.0
      %3075 = vmatpush.xpose.msra.mxu0 0.0
      %3076 = vmatpush.xpose.msra.mxu0 0.0
      %3077 = vmatpush.xpose.msra.mxu0 0.0
      %3078 = vmatpush.xpose.msra.mxu0 0.0
      %3079 = vmatpush.xpose.msra.mxu0 0.0
      %3080 = vmatpush.xpose.msra.mxu0 0.0
      %3081 = vmatpush.xpose.msra.mxu0 0.0
      %3082 = vmatpush.xpose.msra.mxu0 0.0
      %3083 = vmatpush.xpose.msra.mxu0 0.0
      %3084 = vmatpush.xpose.msra.mxu0 0.0
      %3085 = vmatpush.xpose.msra.mxu0 %v3069
      %3086 = vmatpush.xpose.msra.mxu0 %v3067
      %3087 = vmatmul.f32.gmra.mxu0 %v3063
      %v3088 = vpop.f32.mrf.mxu0
      %v3089 = vadd.f32 %v1166, %v3088
      %3090 = vmatmul.f32.gmra.mxu0 %v3065
      %v3091 = vpop.f32.mrf.mxu0
      %v3092 = vadd.f32 %v1166, %v3091
      %3093 = vdwg.mxu0
      %v3094 = vsel %vm1247, %v3089, -inf
      %3095 = vmax.xlane.f32.xlu0 %v3094
      %v3096 = vpop.xlane.xlu0 %3095
      %v3097 = vsel %vm1247, %v3092, -inf
      %3098 = vmax.xlane.f32.xlu0 %v3097
      %v3099 = vpop.xlane.xlu0 %3098
      %v3100 = vsub.f32 %v3089, %v3096
      %v3101 = vsub.f32 %v3092, %v3099
      %v3102 = vmul.f32 %v3100, 1.442695
      %v3103 = vpow.pop %v3102
      %v3104 = vmul.f32 %v3101, 1.442695
      %v3105 = vpow.pop %v3104
      %v3106 = vsel %vm1247, %v3103, 0.0
      %3107 = vadd.xlane.f32.xlu0 %v3106
      %v3108 = vpop.xlane.xlu0 %3107
      %v3109 = vsel %vm1247, %v3105, 0.0
      %3110 = vadd.xlane.f32.xlu0 %v3109
      %v3111 = vpop.xlane.xlu0 %3110
      %v3112 = vrcp.pop %v3108
      %v3113 = vrcp.pop %v3111
      %v3114 = vmul.f32 %v3103, %v3112
      %v3115 = vmul.f32 %v3105, %v3113
      %3116 = vrot.lane.b32.xlu0 %v2952, 56
      %v3117 = vpop.permute.xlu0 %3116
      %3118 = vrot.lane.b32.xlu0 %v2955, 56
      %v3119 = vpop.permute.xlu0 %3118
      %v3123 = vsel %vm1247, %v3114, 0
      %v3126 = vsel %vm1247, %v3115, 0
      %3128 = vmatpush.msra.mxu0 0.0
      %3129 = vmatpush.msra.mxu0 0.0
      %3130 = vmatpush.msra.mxu0 0.0
      %3131 = vmatpush.msra.mxu0 0.0
      %3132 = vmatpush.msra.mxu0 0.0
      %3133 = vmatpush.msra.mxu0 0.0
      %3134 = vmatpush.msra.mxu0 0.0
      %3135 = vmatpush.msra.mxu0 0.0
      %3136 = vmatpush.msra.mxu0 0.0
      %3137 = vmatpush.msra.mxu0 0.0
      %3138 = vmatpush.msra.mxu0 0.0
      %3139 = vmatpush.msra.mxu0 0.0
      %3140 = vmatpush.msra.mxu0 0.0
      %3141 = vmatpush.msra.mxu0 0.0
      %3142 = vmatpush.msra.mxu0 %v3119
      %3143 = vmatpush.msra.mxu0 %v3117
      %3144 = vmatmul.f32.gmra.mxu0 %v3123
      %v3145 = vpop.f32.mrf.mxu0
      %v3146 = vadd.f32 0.0, %v3145
      %3147 = vmatmul.f32.gmra.mxu0 %v3126
      %v3148 = vpop.f32.mrf.mxu0
      %v3149 = vadd.f32 0.0, %v3148
      %3150 = vdwg.mxu0
      %3151 = vrot.lane.b32.xlu0 %v2957, 112
      %v3152 = vpop.permute.xlu0 %3151
      %3153 = vrot.lane.b32.xlu0 %v2958, 112
      %v3154 = vpop.permute.xlu0 %3153
      %3155 = vrot.lane.b32.xlu0 %v2952, 80
      %v3156 = vpop.permute.xlu0 %3155
      %3157 = vrot.lane.b32.xlu0 %v2955, 80
      %v3158 = vpop.permute.xlu0 %3157
      %v3159 = vsel %vm1213, %v3152, 0
      %v3161 = vsel %vm1213, %v3154, 0
      %v3163 = vsel %vm1213, %v3156, 0
      %v3165 = vsel %vm1213, %v3158, 0
      %3167 = vmatpush.xpose.msra.mxu0 0.0
      %3168 = vmatpush.xpose.msra.mxu0 0.0
      %3169 = vmatpush.xpose.msra.mxu0 0.0
      %3170 = vmatpush.xpose.msra.mxu0 0.0
      %3171 = vmatpush.xpose.msra.mxu0 0.0
      %3172 = vmatpush.xpose.msra.mxu0 0.0
      %3173 = vmatpush.xpose.msra.mxu0 0.0
      %3174 = vmatpush.xpose.msra.mxu0 0.0
      %3175 = vmatpush.xpose.msra.mxu0 0.0
      %3176 = vmatpush.xpose.msra.mxu0 0.0
      %3177 = vmatpush.xpose.msra.mxu0 0.0
      %3178 = vmatpush.xpose.msra.mxu0 0.0
      %3179 = vmatpush.xpose.msra.mxu0 0.0
      %3180 = vmatpush.xpose.msra.mxu0 0.0
      %3181 = vmatpush.xpose.msra.mxu0 %v3165
      %3182 = vmatpush.xpose.msra.mxu0 %v3163
      %3183 = vmatmul.f32.gmra.mxu0 %v3159
      %v3184 = vpop.f32.mrf.mxu0
      %v3185 = vadd.f32 %v1166, %v3184
      %3186 = vmatmul.f32.gmra.mxu0 %v3161
      %v3187 = vpop.f32.mrf.mxu0
      %v3188 = vadd.f32 %v1166, %v3187
      %3189 = vdwg.mxu0
      %v3190 = vsel %vm1247, %v3185, -inf
      %3191 = vmax.xlane.f32.xlu0 %v3190
      %v3192 = vpop.xlane.xlu0 %3191
      %v3193 = vsel %vm1247, %v3188, -inf
      %3194 = vmax.xlane.f32.xlu0 %v3193
      %v3195 = vpop.xlane.xlu0 %3194
      %v3196 = vsub.f32 %v3185, %v3192
      %v3197 = vsub.f32 %v3188, %v3195
      %v3198 = vmul.f32 %v3196, 1.442695
      %v3199 = vpow.pop %v3198
      %v3200 = vmul.f32 %v3197, 1.442695
      %v3201 = vpow.pop %v3200
      %v3202 = vsel %vm1247, %v3199, 0.0
      %3203 = vadd.xlane.f32.xlu0 %v3202
      %v3204 = vpop.xlane.xlu0 %3203
      %v3205 = vsel %vm1247, %v3201, 0.0
      %3206 = vadd.xlane.f32.xlu0 %v3205
      %v3207 = vpop.xlane.xlu0 %3206
      %v3208 = vrcp.pop %v3204
      %v3209 = vrcp.pop %v3207
      %v3210 = vmul.f32 %v3199, %v3208
      %v3211 = vmul.f32 %v3201, %v3209
      %3212 = vrot.lane.b32.xlu0 %v2952, 48
      %v3213 = vpop.permute.xlu0 %3212
      %3214 = vrot.lane.b32.xlu0 %v2955, 48
      %v3215 = vpop.permute.xlu0 %3214
      %v3219 = vsel %vm1247, %v3210, 0
      %v3222 = vsel %vm1247, %v3211, 0
      %3224 = vmatpush.msra.mxu0 0.0
      %3225 = vmatpush.msra.mxu0 0.0
      %3226 = vmatpush.msra.mxu0 0.0
      %3227 = vmatpush.msra.mxu0 0.0
      %3228 = vmatpush.msra.mxu0 0.0
      %3229 = vmatpush.msra.mxu0 0.0
      %3230 = vmatpush.msra.mxu0 0.0
      %3231 = vmatpush.msra.mxu0 0.0
      %3232 = vmatpush.msra.mxu0 0.0
      %3233 = vmatpush.msra.mxu0 0.0
      %3234 = vmatpush.msra.mxu0 0.0
      %3235 = vmatpush.msra.mxu0 0.0
      %3236 = vmatpush.msra.mxu0 0.0
      %3237 = vmatpush.msra.mxu0 0.0
      %3238 = vmatpush.msra.mxu0 %v3215
      %3239 = vmatpush.msra.mxu0 %v3213
      %3240 = vmatmul.f32.gmra.mxu0 %v3219
      %v3241 = vpop.f32.mrf.mxu0
      %v3242 = vadd.f32 0.0, %v3241
      %3243 = vmatmul.f32.gmra.mxu0 %v3222
      %v3244 = vpop.f32.mrf.mxu0
      %v3245 = vadd.f32 0.0, %v3244
      %3246 = vdwg.mxu0
      %3247 = vrot.lane.b32.xlu0 %v2957, 104
      %v3248 = vpop.permute.xlu0 %3247
      %3249 = vrot.lane.b32.xlu0 %v2958, 104
      %v3250 = vpop.permute.xlu0 %3249
      %3251 = vrot.lane.b32.xlu0 %v2952, 72
      %v3252 = vpop.permute.xlu0 %3251
      %3253 = vrot.lane.b32.xlu0 %v2955, 72
      %v3254 = vpop.permute.xlu0 %3253
      %v3255 = vsel %vm1213, %v3248, 0
      %v3257 = vsel %vm1213, %v3250, 0
      %v3259 = vsel %vm1213, %v3252, 0
      %v3261 = vsel %vm1213, %v3254, 0
      %3263 = vmatpush.xpose.msra.mxu0 0.0
      %3264 = vmatpush.xpose.msra.mxu0 0.0
      %3265 = vmatpush.xpose.msra.mxu0 0.0
      %3266 = vmatpush.xpose.msra.mxu0 0.0
      %3267 = vmatpush.xpose.msra.mxu0 0.0
      %3268 = vmatpush.xpose.msra.mxu0 0.0
      %3269 = vmatpush.xpose.msra.mxu0 0.0
      %3270 = vmatpush.xpose.msra.mxu0 0.0
      %3271 = vmatpush.xpose.msra.mxu0 0.0
      %3272 = vmatpush.xpose.msra.mxu0 0.0
      %3273 = vmatpush.xpose.msra.mxu0 0.0
      %3274 = vmatpush.xpose.msra.mxu0 0.0
      %3275 = vmatpush.xpose.msra.mxu0 0.0
      %3276 = vmatpush.xpose.msra.mxu0 0.0
      %3277 = vmatpush.xpose.msra.mxu0 %v3261
      %3278 = vmatpush.xpose.msra.mxu0 %v3259
      %3279 = vmatmul.f32.gmra.mxu0 %v3255
      %v3280 = vpop.f32.mrf.mxu0
      %v3281 = vadd.f32 %v1166, %v3280
      %3282 = vmatmul.f32.gmra.mxu0 %v3257
      %v3283 = vpop.f32.mrf.mxu0
      %v3284 = vadd.f32 %v1166, %v3283
      %3285 = vdwg.mxu0
      %v3286 = vsel %vm1247, %v3281, -inf
      %3287 = vmax.xlane.f32.xlu0 %v3286
      %v3288 = vpop.xlane.xlu0 %3287
      %v3289 = vsel %vm1247, %v3284, -inf
      %3290 = vmax.xlane.f32.xlu0 %v3289
      %v3291 = vpop.xlane.xlu0 %3290
      %v3292 = vsub.f32 %v3281, %v3288
      %v3293 = vsub.f32 %v3284, %v3291
      %v3294 = vmul.f32 %v3292, 1.442695
      %v3295 = vpow.pop %v3294
      %v3296 = vmul.f32 %v3293, 1.442695
      %v3297 = vpow.pop %v3296
      %v3298 = vsel %vm1247, %v3295, 0.0
      %3299 = vadd.xlane.f32.xlu0 %v3298
      %v3300 = vpop.xlane.xlu0 %3299
      %v3301 = vsel %vm1247, %v3297, 0.0
      %3302 = vadd.xlane.f32.xlu0 %v3301
      %v3303 = vpop.xlane.xlu0 %3302
      %v3304 = vrcp.pop %v3300
      %v3305 = vrcp.pop %v3303
      %v3306 = vmul.f32 %v3295, %v3304
      %v3307 = vmul.f32 %v3297, %v3305
      %3308 = vrot.lane.b32.xlu0 %v2952, 40
      %v3309 = vpop.permute.xlu0 %3308
      %3310 = vrot.lane.b32.xlu0 %v2955, 40
      %v3311 = vpop.permute.xlu0 %3310
      %v3315 = vsel %vm1247, %v3306, 0
      %v3318 = vsel %vm1247, %v3307, 0
      %3320 = vmatpush.msra.mxu0 0.0
      %3321 = vmatpush.msra.mxu0 0.0
      %3322 = vmatpush.msra.mxu0 0.0
      %3323 = vmatpush.msra.mxu0 0.0
      %3324 = vmatpush.msra.mxu0 0.0
      %3325 = vmatpush.msra.mxu0 0.0
      %3326 = vmatpush.msra.mxu0 0.0
      %3327 = vmatpush.msra.mxu0 0.0
      %3328 = vmatpush.msra.mxu0 0.0
      %3329 = vmatpush.msra.mxu0 0.0
      %3330 = vmatpush.msra.mxu0 0.0
      %3331 = vmatpush.msra.mxu0 0.0
      %3332 = vmatpush.msra.mxu0 0.0
      %3333 = vmatpush.msra.mxu0 0.0
      %3334 = vmatpush.msra.mxu0 %v3311
      %3335 = vmatpush.msra.mxu0 %v3309
      %3336 = vmatmul.f32.gmra.mxu0 %v3315
      %v3337 = vpop.f32.mrf.mxu0
      %v3338 = vadd.f32 0.0, %v3337
      %3339 = vmatmul.f32.gmra.mxu0 %v3318
      %v3340 = vpop.f32.mrf.mxu0
      %v3341 = vadd.f32 0.0, %v3340
      %3342 = vdwg.mxu0
      %3345 = vrot.lane.b32.xlu0 %v3146, 8
      %v3346 = vpop.permute.xlu0 %3345
      %3347 = vrot.lane.b32.xlu0 %v3149, 8
      %v3348 = vpop.permute.xlu0 %3347
      %3353 = vrot.lane.b32.xlu0 %v3242, 16
      %v3354 = vpop.permute.xlu0 %3353
      %3355 = vrot.lane.b32.xlu0 %v3245, 16
      %v3356 = vpop.permute.xlu0 %3355
      %3361 = vrot.lane.b32.xlu0 %v3338, 24
      %v3362 = vpop.permute.xlu0 %3361
      %3363 = vrot.lane.b32.xlu0 %v3341, 24
      %v3364 = vpop.permute.xlu0 %3363
      %v3367 = vsel %vm1213, %v3050, %v3346
      %v3368 = vsel %vm1213, %v3053, %v3348
      %v3369 = vsel %vm1247, %v3367, %v3354
      %v3370 = vsel %vm1247, %v3368, %v3356
      %v3371 = vsel %vm1621, %v3369, %v3362
      %v3372 = vsel %vm1621, %v3370, %v3364
      %s3373 = scalar_lea.vmem %s9, 32
      %v3374 = vld [vmem:[%s3373] sm:$0xff]
      %v3375 = vld [vmem:[%s3373 + $0x8] sm:$0xff]
      %v3376 = vld [vmem:[%s3373 + $0x10] sm:$0xff]
      %v3377 = vld [vmem:[%s3373 + $0x18] sm:$0xff]
      %s3378 = scalar_lea.vmem %s10, 1
      %v3379 = vld [vmem:[%s3378] sm:$0x1]
      %v3381 = vperm.slane %v3379, 0
      %v3384 = vsel %vm1175, %v3371, 0
      %v3387 = vsel %vm1175, %v3372, 0
      %3389 = vmatpush.msra.mxu0 0.0
      %3390 = vmatpush.msra.mxu0 0.0
      %3391 = vmatpush.msra.mxu0 0.0
      %3392 = vmatpush.msra.mxu0 0.0
      %3393 = vmatpush.msra.mxu0 0.0
      %3394 = vmatpush.msra.mxu0 0.0
      %3395 = vmatpush.msra.mxu0 0.0
      %3396 = vmatpush.msra.mxu0 0.0
      %3397 = vmatpush.msra.mxu0 0.0
      %3398 = vmatpush.msra.mxu0 0.0
      %3399 = vmatpush.msra.mxu0 0.0
      %3400 = vmatpush.msra.mxu0 0.0
      %3401 = vmatpush.msra.mxu0 %v3377
      %3402 = vmatpush.msra.mxu0 %v3376
      %3403 = vmatpush.msra.mxu0 %v3375
      %3404 = vmatpush.msra.mxu0 %v3374
      %3405 = vmatmul.f32.gmra.mxu0 %v3384
      %v3406 = vpop.f32.mrf.mxu0
      %v3407 = vadd.f32 %v3381, %v3406
      %3408 = vmatmul.f32.gmra.mxu0 %v3387
      %v3409 = vpop.f32.mrf.mxu0
      %v3410 = vadd.f32 %v3381, %v3409
      %3411 = vdwg.mxu0
      %v3412 = vadd.f32 %v2916, %v3407
      %v3413 = vadd.f32 %v2917, %v3410
      %v3414 = vsel %vm1175, %v3412, 0.0
      %3415 = vadd.xlane.f32.xlu0 %v3414
      %v3416 = vpop.xlane.xlu0 %3415
      %v3417 = vsel %vm1175, %v3413, 0.0
      %3418 = vadd.xlane.f32.xlu0 %v3417
      %v3419 = vpop.xlane.xlu0 %3418
      %v3420 = vmul.f32 %v3416, %v1675
      %v3421 = vmul.f32 %v3419, %v1675
      %v3422 = vsub.f32 %v3412, %v3420
      %v3423 = vsub.f32 %v3413, %v3421
      %v3424 = vmul.f32 %v3422, %v3422
      %v3425 = vmul.f32 %v3423, %v3423
      %v3426 = vsel %vm1175, %v3424, 0.0
      %3427 = vadd.xlane.f32.xlu0 %v3426
      %v3428 = vpop.xlane.xlu0 %3427
      %v3429 = vsel %vm1175, %v3425, 0.0
      %3430 = vadd.xlane.f32.xlu0 %v3429
      %v3431 = vpop.xlane.xlu0 %3430
      %v3432 = vmul.f32 %v3428, %v1675
      %v3433 = vmul.f32 %v3431, %v1675
      %v3434 = vadd.f32 %v3432, 1e-05
      %v3435 = vadd.f32 %v3433, 1e-05
      %v3436 = vrsqrt.pop %v3434
      %v3437 = vmul.f32 %v3436, %v3434
      %v3438 = vmul.f32 %v3437, %v3436
      %v3439 = vmul.f32 0.5, %v3438
      %v3440 = vsub.f32 1.5, %v3439
      %v3441 = vmul.f32 %v3436, %v3440
      %vm3442 = vweird.f32 %v3434
      %vm3443 = vweird.f32 %v3436
      %vm3444 = vmor %vm3442, %vm3443
      %v3445 = vsel %vm3444, %v3436, %v3441
      %v3446 = vrsqrt.pop %v3435
      %v3447 = vmul.f32 %v3446, %v3435
      %v3448 = vmul.f32 %v3447, %v3446
      %v3449 = vmul.f32 0.5, %v3448
      %v3450 = vsub.f32 1.5, %v3449
      %v3451 = vmul.f32 %v3446, %v3450
      %vm3452 = vweird.f32 %v3435
      %vm3453 = vweird.f32 %v3446
      %vm3454 = vmor %vm3452, %vm3453
      %v3455 = vsel %vm3454, %v3446, %v3451
      %v3456 = vmul.f32 %v3422, %v3445
      %v3457 = vmul.f32 %v3423, %v3455
      %s3458 = scalar_lea.vmem %s15, 1
      %v3459 = vld [vmem:[%s3458] sm:$0x1]
      %v3461 = vperm.slane %v3459, 0
      %v3463 = vmul.f32 %v3456, %v3461
      %v3464 = vmul.f32 %v3457, %v3461
      %s3465 = scalar_lea.vmem %s16, 1
      %v3466 = vld [vmem:[%s3465] sm:$0x1]
      %v3468 = vperm.slane %v3466, 0
      %v3470 = vadd.f32 %v3463, %v3468
      %v3471 = vadd.f32 %v3464, %v3468
      %s3472 = scalar_lea.vmem %s11, 512
      %v3473 = vld [vmem:[%s3472] sm:$0xff]
      %v3474 = vld [vmem:[%s3472 + $0x8] sm:$0xff]
      %v3475 = vld [vmem:[%s3472 + $0x10] sm:$0xff]
      %v3476 = vld [vmem:[%s3472 + $0x18] sm:$0xff]
      %v3477 = vld [vmem:[%s3472 + $0x20] sm:$0xff]
      %v3478 = vld [vmem:[%s3472 + $0x28] sm:$0xff]
      %v3479 = vld [vmem:[%s3472 + $0x30] sm:$0xff]
      %v3480 = vld [vmem:[%s3472 + $0x38] sm:$0xff]
      %v3481 = vld [vmem:[%s3472 + $0x40] sm:$0xff]
      %v3482 = vld [vmem:[%s3472 + $0x48] sm:$0xff]
      %v3483 = vld [vmem:[%s3472 + $0x50] sm:$0xff]
      %v3484 = vld [vmem:[%s3472 + $0x58] sm:$0xff]
      %v3485 = vld [vmem:[%s3472 + $0x60] sm:$0xff]
      %v3486 = vld [vmem:[%s3472 + $0x68] sm:$0xff]
      %v3487 = vld [vmem:[%s3472 + $0x70] sm:$0xff]
      %v3488 = vld [vmem:[%s3472 + $0x78] sm:$0xff]
      %v3489 = vld [vmem:[%s3472 + $0x80] sm:$0xff]
      %v3490 = vld [vmem:[%s3472 + $0x88] sm:$0xff]
      %v3491 = vld [vmem:[%s3472 + $0x90] sm:$0xff]
      %v3492 = vld [vmem:[%s3472 + $0x98] sm:$0xff]
      %v3493 = vld [vmem:[%s3472 + $0xa0] sm:$0xff]
      %v3494 = vld [vmem:[%s3472 + $0xa8] sm:$0xff]
      %v3495 = vld [vmem:[%s3472 + $0xb0] sm:$0xff]
      %v3496 = vld [vmem:[%s3472 + $0xb8] sm:$0xff]
      %v3497 = vld [vmem:[%s3472 + $0xc0] sm:$0xff]
      %v3498 = vld [vmem:[%s3472 + $0xc8] sm:$0xff]
      %v3499 = vld [vmem:[%s3472 + $0xd0] sm:$0xff]
      %v3500 = vld [vmem:[%s3472 + $0xd8] sm:$0xff]
      %v3501 = vld [vmem:[%s3472 + $0xe0] sm:$0xff]
      %v3502 = vld [vmem:[%s3472 + $0xe8] sm:$0xff]
      %v3503 = vld [vmem:[%s3472 + $0xf0] sm:$0xff]
      %v3504 = vld [vmem:[%s3472 + $0xf8] sm:$0xff]
      %v3505 = vld [vmem:[%s3472 + $0x100] sm:$0xff]
      %v3506 = vld [vmem:[%s3472 + $0x108] sm:$0xff]
      %v3507 = vld [vmem:[%s3472 + $0x110] sm:$0xff]
      %v3508 = vld [vmem:[%s3472 + $0x118] sm:$0xff]
      %v3509 = vld [vmem:[%s3472 + $0x120] sm:$0xff]
      %v3510 = vld [vmem:[%s3472 + $0x128] sm:$0xff]
      %v3511 = vld [vmem:[%s3472 + $0x130] sm:$0xff]
      %v3512 = vld [vmem:[%s3472 + $0x138] sm:$0xff]
      %v3513 = vld [vmem:[%s3472 + $0x140] sm:$0xff]
      %v3514 = vld [vmem:[%s3472 + $0x148] sm:$0xff]
      %v3515 = vld [vmem:[%s3472 + $0x150] sm:$0xff]
      %v3516 = vld [vmem:[%s3472 + $0x158] sm:$0xff]
      %v3517 = vld [vmem:[%s3472 + $0x160] sm:$0xff]
      %v3518 = vld [vmem:[%s3472 + $0x168] sm:$0xff]
      %v3519 = vld [vmem:[%s3472 + $0x170] sm:$0xff]
      %v3520 = vld [vmem:[%s3472 + $0x178] sm:$0xff]
      %v3521 = vld [vmem:[%s3472 + $0x180] sm:$0xff]
      %v3522 = vld [vmem:[%s3472 + $0x188] sm:$0xff]
      %v3523 = vld [vmem:[%s3472 + $0x190] sm:$0xff]
      %v3524 = vld [vmem:[%s3472 + $0x198] sm:$0xff]
      %v3525 = vld [vmem:[%s3472 + $0x1a0] sm:$0xff]
      %v3526 = vld [vmem:[%s3472 + $0x1a8] sm:$0xff]
      %v3527 = vld [vmem:[%s3472 + $0x1b0] sm:$0xff]
      %v3528 = vld [vmem:[%s3472 + $0x1b8] sm:$0xff]
      %v3529 = vld [vmem:[%s3472 + $0x1c0] sm:$0xff]
      %v3530 = vld [vmem:[%s3472 + $0x1c8] sm:$0xff]
      %v3531 = vld [vmem:[%s3472 + $0x1d0] sm:$0xff]
      %v3532 = vld [vmem:[%s3472 + $0x1d8] sm:$0xff]
      %v3533 = vld [vmem:[%s3472 + $0x1e0] sm:$0xff]
      %v3534 = vld [vmem:[%s3472 + $0x1e8] sm:$0xff]
      %v3535 = vld [vmem:[%s3472 + $0x1f0] sm:$0xff]
      %v3536 = vld [vmem:[%s3472 + $0x1f8] sm:$0xff]
      %s3537 = scalar_lea.vmem %s12, 16
      %v3538 = vld [vmem:[%s3537] sm:$0xff]
      %v3539 = vld [vmem:[%s3537 + $0x8] sm:$0xff]
      %v3542 = vperm.slane %v3538, 0
      %v3543 = vperm.slane %v3538, 1
      %v3544 = vperm.slane %v3538, 2
      %v3545 = vperm.slane %v3538, 3
      %v3546 = vperm.slane %v3538, 4
      %v3547 = vperm.slane %v3538, 5
      %v3548 = vperm.slane %v3538, 6
      %v3549 = vperm.slane %v3538, 7
      %v3550 = vperm.slane %v3539, 0
      %v3551 = vperm.slane %v3539, 1
      %v3552 = vperm.slane %v3539, 2
      %v3553 = vperm.slane %v3539, 3
      %v3554 = vperm.slane %v3539, 4
      %v3555 = vperm.slane %v3539, 5
      %v3556 = vperm.slane %v3539, 6
      %v3557 = vperm.slane %v3539, 7
      %v3575 = vsel %vm1175, %v3470, 0
      %v3578 = vsel %vm1175, %v3471, 0
      %3580 = vmatpush.msra.mxu0 0.0
      %3581 = vmatpush.msra.mxu0 0.0
      %3582 = vmatpush.msra.mxu0 0.0
      %3583 = vmatpush.msra.mxu0 0.0
      %3584 = vmatpush.msra.mxu0 0.0
      %3585 = vmatpush.msra.mxu0 0.0
      %3586 = vmatpush.msra.mxu0 0.0
      %3587 = vmatpush.msra.mxu0 0.0
      %3588 = vmatpush.msra.mxu0 0.0
      %3589 = vmatpush.msra.mxu0 0.0
      %3590 = vmatpush.msra.mxu0 0.0
      %3591 = vmatpush.msra.mxu0 0.0
      %3592 = vmatpush.msra.mxu0 %v3521
      %3593 = vmatpush.msra.mxu0 %v3505
      %3594 = vmatpush.msra.mxu0 %v3489
      %3595 = vmatpush.msra.mxu0 %v3473
      %3596 = vmatmul.f32.gmra.mxu0 %v3575
      %v3597 = vpop.f32.mrf.mxu0
      %v3598 = vadd.f32 %v3542, %v3597
      %3599 = vmatmul.f32.gmra.mxu0 %v3578
      %v3600 = vpop.f32.mrf.mxu0
      %v3601 = vadd.f32 %v3542, %v3600
      %3602 = vdwg.mxu0
      %3603 = vmatpush.msra.mxu0 0.0
      %3604 = vmatpush.msra.mxu0 0.0
      %3605 = vmatpush.msra.mxu0 0.0
      %3606 = vmatpush.msra.mxu0 0.0
      %3607 = vmatpush.msra.mxu0 0.0
      %3608 = vmatpush.msra.mxu0 0.0
      %3609 = vmatpush.msra.mxu0 0.0
      %3610 = vmatpush.msra.mxu0 0.0
      %3611 = vmatpush.msra.mxu0 0.0
      %3612 = vmatpush.msra.mxu0 0.0
      %3613 = vmatpush.msra.mxu0 0.0
      %3614 = vmatpush.msra.mxu0 0.0
      %3615 = vmatpush.msra.mxu0 %v3522
      %3616 = vmatpush.msra.mxu0 %v3506
      %3617 = vmatpush.msra.mxu0 %v3490
      %3618 = vmatpush.msra.mxu0 %v3474
      %3619 = vmatmul.f32.gmra.mxu0 %v3575
      %v3620 = vpop.f32.mrf.mxu0
      %v3621 = vadd.f32 %v3543, %v3620
      %3622 = vmatmul.f32.gmra.mxu0 %v3578
      %v3623 = vpop.f32.mrf.mxu0
      %v3624 = vadd.f32 %v3543, %v3623
      %3625 = vdwg.mxu0
      %3626 = vmatpush.msra.mxu0 0.0
      %3627 = vmatpush.msra.mxu0 0.0
      %3628 = vmatpush.msra.mxu0 0.0
      %3629 = vmatpush.msra.mxu0 0.0
      %3630 = vmatpush.msra.mxu0 0.0
      %3631 = vmatpush.msra.mxu0 0.0
      %3632 = vmatpush.msra.mxu0 0.0
      %3633 = vmatpush.msra.mxu0 0.0
      %3634 = vmatpush.msra.mxu0 0.0
      %3635 = vmatpush.msra.mxu0 0.0
      %3636 = vmatpush.msra.mxu0 0.0
      %3637 = vmatpush.msra.mxu0 0.0
      %3638 = vmatpush.msra.mxu0 %v3523
      %3639 = vmatpush.msra.mxu0 %v3507
      %3640 = vmatpush.msra.mxu0 %v3491
      %3641 = vmatpush.msra.mxu0 %v3475
      %3642 = vmatmul.f32.gmra.mxu0 %v3575
      %v3643 = vpop.f32.mrf.mxu0
      %v3644 = vadd.f32 %v3544, %v3643
      %3645 = vmatmul.f32.gmra.mxu0 %v3578
      %v3646 = vpop.f32.mrf.mxu0
      %v3647 = vadd.f32 %v3544, %v3646
      %3648 = vdwg.mxu0
      %3649 = vmatpush.msra.mxu0 0.0
      %3650 = vmatpush.msra.mxu0 0.0
      %3651 = vmatpush.msra.mxu0 0.0
      %3652 = vmatpush.msra.mxu0 0.0
      %3653 = vmatpush.msra.mxu0 0.0
      %3654 = vmatpush.msra.mxu0 0.0
      %3655 = vmatpush.msra.mxu0 0.0
      %3656 = vmatpush.msra.mxu0 0.0
      %3657 = vmatpush.msra.mxu0 0.0
      %3658 = vmatpush.msra.mxu0 0.0
      %3659 = vmatpush.msra.mxu0 0.0
      %3660 = vmatpush.msra.mxu0 0.0
      %3661 = vmatpush.msra.mxu0 %v3524
      %3662 = vmatpush.msra.mxu0 %v3508
      %3663 = vmatpush.msra.mxu0 %v3492
      %3664 = vmatpush.msra.mxu0 %v3476
      %3665 = vmatmul.f32.gmra.mxu0 %v3575
      %v3666 = vpop.f32.mrf.mxu0
      %v3667 = vadd.f32 %v3545, %v3666
      %3668 = vmatmul.f32.gmra.mxu0 %v3578
      %v3669 = vpop.f32.mrf.mxu0
      %v3670 = vadd.f32 %v3545, %v3669
      %3671 = vdwg.mxu0
      %3672 = vmatpush.msra.mxu0 0.0
      %3673 = vmatpush.msra.mxu0 0.0
      %3674 = vmatpush.msra.mxu0 0.0
      %3675 = vmatpush.msra.mxu0 0.0
      %3676 = vmatpush.msra.mxu0 0.0
      %3677 = vmatpush.msra.mxu0 0.0
      %3678 = vmatpush.msra.mxu0 0.0
      %3679 = vmatpush.msra.mxu0 0.0
      %3680 = vmatpush.msra.mxu0 0.0
      %3681 = vmatpush.msra.mxu0 0.0
      %3682 = vmatpush.msra.mxu0 0.0
      %3683 = vmatpush.msra.mxu0 0.0
      %3684 = vmatpush.msra.mxu0 %v3525
      %3685 = vmatpush.msra.mxu0 %v3509
      %3686 = vmatpush.msra.mxu0 %v3493
      %3687 = vmatpush.msra.mxu0 %v3477
      %3688 = vmatmul.f32.gmra.mxu0 %v3575
      %v3689 = vpop.f32.mrf.mxu0
      %v3690 = vadd.f32 %v3546, %v3689
      %3691 = vmatmul.f32.gmra.mxu0 %v3578
      %v3692 = vpop.f32.mrf.mxu0
      %v3693 = vadd.f32 %v3546, %v3692
      %3694 = vdwg.mxu0
      %3695 = vmatpush.msra.mxu0 0.0
      %3696 = vmatpush.msra.mxu0 0.0
      %3697 = vmatpush.msra.mxu0 0.0
      %3698 = vmatpush.msra.mxu0 0.0
      %3699 = vmatpush.msra.mxu0 0.0
      %3700 = vmatpush.msra.mxu0 0.0
      %3701 = vmatpush.msra.mxu0 0.0
      %3702 = vmatpush.msra.mxu0 0.0
      %3703 = vmatpush.msra.mxu0 0.0
      %3704 = vmatpush.msra.mxu0 0.0
      %3705 = vmatpush.msra.mxu0 0.0
      %3706 = vmatpush.msra.mxu0 0.0
      %3707 = vmatpush.msra.mxu0 %v3526
      %3708 = vmatpush.msra.mxu0 %v3510
      %3709 = vmatpush.msra.mxu0 %v3494
      %3710 = vmatpush.msra.mxu0 %v3478
      %3711 = vmatmul.f32.gmra.mxu0 %v3575
      %v3712 = vpop.f32.mrf.mxu0
      %v3713 = vadd.f32 %v3547, %v3712
      %3714 = vmatmul.f32.gmra.mxu0 %v3578
      %v3715 = vpop.f32.mrf.mxu0
      %v3716 = vadd.f32 %v3547, %v3715
      %3717 = vdwg.mxu0
      %3718 = vmatpush.msra.mxu0 0.0
      %3719 = vmatpush.msra.mxu0 0.0
      %3720 = vmatpush.msra.mxu0 0.0
      %3721 = vmatpush.msra.mxu0 0.0
      %3722 = vmatpush.msra.mxu0 0.0
      %3723 = vmatpush.msra.mxu0 0.0
      %3724 = vmatpush.msra.mxu0 0.0
      %3725 = vmatpush.msra.mxu0 0.0
      %3726 = vmatpush.msra.mxu0 0.0
      %3727 = vmatpush.msra.mxu0 0.0
      %3728 = vmatpush.msra.mxu0 0.0
      %3729 = vmatpush.msra.mxu0 0.0
      %3730 = vmatpush.msra.mxu0 %v3527
      %3731 = vmatpush.msra.mxu0 %v3511
      %3732 = vmatpush.msra.mxu0 %v3495
      %3733 = vmatpush.msra.mxu0 %v3479
      %3734 = vmatmul.f32.gmra.mxu0 %v3575
      %v3735 = vpop.f32.mrf.mxu0
      %v3736 = vadd.f32 %v3548, %v3735
      %3737 = vmatmul.f32.gmra.mxu0 %v3578
      %v3738 = vpop.f32.mrf.mxu0
      %v3739 = vadd.f32 %v3548, %v3738
      %3740 = vdwg.mxu0
      %3741 = vmatpush.msra.mxu0 0.0
      %3742 = vmatpush.msra.mxu0 0.0
      %3743 = vmatpush.msra.mxu0 0.0
      %3744 = vmatpush.msra.mxu0 0.0
      %3745 = vmatpush.msra.mxu0 0.0
      %3746 = vmatpush.msra.mxu0 0.0
      %3747 = vmatpush.msra.mxu0 0.0
      %3748 = vmatpush.msra.mxu0 0.0
      %3749 = vmatpush.msra.mxu0 0.0
      %3750 = vmatpush.msra.mxu0 0.0
      %3751 = vmatpush.msra.mxu0 0.0
      %3752 = vmatpush.msra.mxu0 0.0
      %3753 = vmatpush.msra.mxu0 %v3528
      %3754 = vmatpush.msra.mxu0 %v3512
      %3755 = vmatpush.msra.mxu0 %v3496
      %3756 = vmatpush.msra.mxu0 %v3480
      %3757 = vmatmul.f32.gmra.mxu0 %v3575
      %v3758 = vpop.f32.mrf.mxu0
      %v3759 = vadd.f32 %v3549, %v3758
      %3760 = vmatmul.f32.gmra.mxu0 %v3578
      %v3761 = vpop.f32.mrf.mxu0
      %v3762 = vadd.f32 %v3549, %v3761
      %3763 = vdwg.mxu0
      %3764 = vmatpush.msra.mxu0 0.0
      %3765 = vmatpush.msra.mxu0 0.0
      %3766 = vmatpush.msra.mxu0 0.0
      %3767 = vmatpush.msra.mxu0 0.0
      %3768 = vmatpush.msra.mxu0 0.0
      %3769 = vmatpush.msra.mxu0 0.0
      %3770 = vmatpush.msra.mxu0 0.0
      %3771 = vmatpush.msra.mxu0 0.0
      %3772 = vmatpush.msra.mxu0 0.0
      %3773 = vmatpush.msra.mxu0 0.0
      %3774 = vmatpush.msra.mxu0 0.0
      %3775 = vmatpush.msra.mxu0 0.0
      %3776 = vmatpush.msra.mxu0 %v3529
      %3777 = vmatpush.msra.mxu0 %v3513
      %3778 = vmatpush.msra.mxu0 %v3497
      %3779 = vmatpush.msra.mxu0 %v3481
      %3780 = vmatmul.f32.gmra.mxu0 %v3575
      %v3781 = vpop.f32.mrf.mxu0
      %v3782 = vadd.f32 %v3550, %v3781
      %3783 = vmatmul.f32.gmra.mxu0 %v3578
      %v3784 = vpop.f32.mrf.mxu0
      %v3785 = vadd.f32 %v3550, %v3784
      %3786 = vdwg.mxu0
      %3787 = vmatpush.msra.mxu0 0.0
      %3788 = vmatpush.msra.mxu0 0.0
      %3789 = vmatpush.msra.mxu0 0.0
      %3790 = vmatpush.msra.mxu0 0.0
      %3791 = vmatpush.msra.mxu0 0.0
      %3792 = vmatpush.msra.mxu0 0.0
      %3793 = vmatpush.msra.mxu0 0.0
      %3794 = vmatpush.msra.mxu0 0.0
      %3795 = vmatpush.msra.mxu0 0.0
      %3796 = vmatpush.msra.mxu0 0.0
      %3797 = vmatpush.msra.mxu0 0.0
      %3798 = vmatpush.msra.mxu0 0.0
      %3799 = vmatpush.msra.mxu0 %v3530
      %3800 = vmatpush.msra.mxu0 %v3514
      %3801 = vmatpush.msra.mxu0 %v3498
      %3802 = vmatpush.msra.mxu0 %v3482
      %3803 = vmatmul.f32.gmra.mxu0 %v3575
      %v3804 = vpop.f32.mrf.mxu0
      %v3805 = vadd.f32 %v3551, %v3804
      %3806 = vmatmul.f32.gmra.mxu0 %v3578
      %v3807 = vpop.f32.mrf.mxu0
      %v3808 = vadd.f32 %v3551, %v3807
      %3809 = vdwg.mxu0
      %3810 = vmatpush.msra.mxu0 0.0
      %3811 = vmatpush.msra.mxu0 0.0
      %3812 = vmatpush.msra.mxu0 0.0
      %3813 = vmatpush.msra.mxu0 0.0
      %3814 = vmatpush.msra.mxu0 0.0
      %3815 = vmatpush.msra.mxu0 0.0
      %3816 = vmatpush.msra.mxu0 0.0
      %3817 = vmatpush.msra.mxu0 0.0
      %3818 = vmatpush.msra.mxu0 0.0
      %3819 = vmatpush.msra.mxu0 0.0
      %3820 = vmatpush.msra.mxu0 0.0
      %3821 = vmatpush.msra.mxu0 0.0
      %3822 = vmatpush.msra.mxu0 %v3531
      %3823 = vmatpush.msra.mxu0 %v3515
      %3824 = vmatpush.msra.mxu0 %v3499
      %3825 = vmatpush.msra.mxu0 %v3483
      %3826 = vmatmul.f32.gmra.mxu0 %v3575
      %v3827 = vpop.f32.mrf.mxu0
      %v3828 = vadd.f32 %v3552, %v3827
      %3829 = vmatmul.f32.gmra.mxu0 %v3578
      %v3830 = vpop.f32.mrf.mxu0
      %v3831 = vadd.f32 %v3552, %v3830
      %3832 = vdwg.mxu0
      %3833 = vmatpush.msra.mxu0 0.0
      %3834 = vmatpush.msra.mxu0 0.0
      %3835 = vmatpush.msra.mxu0 0.0
      %3836 = vmatpush.msra.mxu0 0.0
      %3837 = vmatpush.msra.mxu0 0.0
      %3838 = vmatpush.msra.mxu0 0.0
      %3839 = vmatpush.msra.mxu0 0.0
      %3840 = vmatpush.msra.mxu0 0.0
      %3841 = vmatpush.msra.mxu0 0.0
      %3842 = vmatpush.msra.mxu0 0.0
      %3843 = vmatpush.msra.mxu0 0.0
      %3844 = vmatpush.msra.mxu0 0.0
      %3845 = vmatpush.msra.mxu0 %v3532
      %3846 = vmatpush.msra.mxu0 %v3516
      %3847 = vmatpush.msra.mxu0 %v3500
      %3848 = vmatpush.msra.mxu0 %v3484
      %3849 = vmatmul.f32.gmra.mxu0 %v3575
      %v3850 = vpop.f32.mrf.mxu0
      %v3851 = vadd.f32 %v3553, %v3850
      %3852 = vmatmul.f32.gmra.mxu0 %v3578
      %v3853 = vpop.f32.mrf.mxu0
      %v3854 = vadd.f32 %v3553, %v3853
      %3855 = vdwg.mxu0
      %3856 = vmatpush.msra.mxu0 0.0
      %3857 = vmatpush.msra.mxu0 0.0
      %3858 = vmatpush.msra.mxu0 0.0
      %3859 = vmatpush.msra.mxu0 0.0
      %3860 = vmatpush.msra.mxu0 0.0
      %3861 = vmatpush.msra.mxu0 0.0
      %3862 = vmatpush.msra.mxu0 0.0
      %3863 = vmatpush.msra.mxu0 0.0
      %3864 = vmatpush.msra.mxu0 0.0
      %3865 = vmatpush.msra.mxu0 0.0
      %3866 = vmatpush.msra.mxu0 0.0
      %3867 = vmatpush.msra.mxu0 0.0
      %3868 = vmatpush.msra.mxu0 %v3533
      %3869 = vmatpush.msra.mxu0 %v3517
      %3870 = vmatpush.msra.mxu0 %v3501
      %3871 = vmatpush.msra.mxu0 %v3485
      %3872 = vmatmul.f32.gmra.mxu0 %v3575
      %v3873 = vpop.f32.mrf.mxu0
      %v3874 = vadd.f32 %v3554, %v3873
      %3875 = vmatmul.f32.gmra.mxu0 %v3578
      %v3876 = vpop.f32.mrf.mxu0
      %v3877 = vadd.f32 %v3554, %v3876
      %3878 = vdwg.mxu0
      %3879 = vmatpush.msra.mxu0 0.0
      %3880 = vmatpush.msra.mxu0 0.0
      %3881 = vmatpush.msra.mxu0 0.0
      %3882 = vmatpush.msra.mxu0 0.0
      %3883 = vmatpush.msra.mxu0 0.0
      %3884 = vmatpush.msra.mxu0 0.0
      %3885 = vmatpush.msra.mxu0 0.0
      %3886 = vmatpush.msra.mxu0 0.0
      %3887 = vmatpush.msra.mxu0 0.0
      %3888 = vmatpush.msra.mxu0 0.0
      %3889 = vmatpush.msra.mxu0 0.0
      %3890 = vmatpush.msra.mxu0 0.0
      %3891 = vmatpush.msra.mxu0 %v3534
      %3892 = vmatpush.msra.mxu0 %v3518
      %3893 = vmatpush.msra.mxu0 %v3502
      %3894 = vmatpush.msra.mxu0 %v3486
      %3895 = vmatmul.f32.gmra.mxu0 %v3575
      %v3896 = vpop.f32.mrf.mxu0
      %v3897 = vadd.f32 %v3555, %v3896
      %3898 = vmatmul.f32.gmra.mxu0 %v3578
      %v3899 = vpop.f32.mrf.mxu0
      %v3900 = vadd.f32 %v3555, %v3899
      %3901 = vdwg.mxu0
      %3902 = vmatpush.msra.mxu0 0.0
      %3903 = vmatpush.msra.mxu0 0.0
      %3904 = vmatpush.msra.mxu0 0.0
      %3905 = vmatpush.msra.mxu0 0.0
      %3906 = vmatpush.msra.mxu0 0.0
      %3907 = vmatpush.msra.mxu0 0.0
      %3908 = vmatpush.msra.mxu0 0.0
      %3909 = vmatpush.msra.mxu0 0.0
      %3910 = vmatpush.msra.mxu0 0.0
      %3911 = vmatpush.msra.mxu0 0.0
      %3912 = vmatpush.msra.mxu0 0.0
      %3913 = vmatpush.msra.mxu0 0.0
      %3914 = vmatpush.msra.mxu0 %v3535
      %3915 = vmatpush.msra.mxu0 %v3519
      %3916 = vmatpush.msra.mxu0 %v3503
      %3917 = vmatpush.msra.mxu0 %v3487
      %3918 = vmatmul.f32.gmra.mxu0 %v3575
      %v3919 = vpop.f32.mrf.mxu0
      %v3920 = vadd.f32 %v3556, %v3919
      %3921 = vmatmul.f32.gmra.mxu0 %v3578
      %v3922 = vpop.f32.mrf.mxu0
      %v3923 = vadd.f32 %v3556, %v3922
      %3924 = vdwg.mxu0
      %3925 = vmatpush.msra.mxu0 0.0
      %3926 = vmatpush.msra.mxu0 0.0
      %3927 = vmatpush.msra.mxu0 0.0
      %3928 = vmatpush.msra.mxu0 0.0
      %3929 = vmatpush.msra.mxu0 0.0
      %3930 = vmatpush.msra.mxu0 0.0
      %3931 = vmatpush.msra.mxu0 0.0
      %3932 = vmatpush.msra.mxu0 0.0
      %3933 = vmatpush.msra.mxu0 0.0
      %3934 = vmatpush.msra.mxu0 0.0
      %3935 = vmatpush.msra.mxu0 0.0
      %3936 = vmatpush.msra.mxu0 0.0
      %3937 = vmatpush.msra.mxu0 %v3536
      %3938 = vmatpush.msra.mxu0 %v3520
      %3939 = vmatpush.msra.mxu0 %v3504
      %3940 = vmatpush.msra.mxu0 %v3488
      %3941 = vmatmul.f32.gmra.mxu0 %v3575
      %v3942 = vpop.f32.mrf.mxu0
      %v3943 = vadd.f32 %v3557, %v3942
      %3944 = vmatmul.f32.gmra.mxu0 %v3578
      %v3945 = vpop.f32.mrf.mxu0
      %v3946 = vadd.f32 %v3557, %v3945
      %3947 = vdwg.mxu0
      %v3948 = vmax.f32 %v3598, 0.0
      %v3949 = vmax.f32 %v3621, 0.0
      %v3950 = vmax.f32 %v3644, 0.0
      %v3951 = vmax.f32 %v3667, 0.0
      %v3952 = vmax.f32 %v3690, 0.0
      %v3953 = vmax.f32 %v3713, 0.0
      %v3954 = vmax.f32 %v3736, 0.0
      %v3955 = vmax.f32 %v3759, 0.0
      %v3956 = vmax.f32 %v3782, 0.0
      %v3957 = vmax.f32 %v3805, 0.0
      %v3958 = vmax.f32 %v3828, 0.0
      %v3959 = vmax.f32 %v3851, 0.0
      %v3960 = vmax.f32 %v3874, 0.0
      %v3961 = vmax.f32 %v3897, 0.0
      %v3962 = vmax.f32 %v3920, 0.0
      %v3963 = vmax.f32 %v3943, 0.0
      %v3964 = vmax.f32 %v3601, 0.0
      %v3965 = vmax.f32 %v3624, 0.0
      %v3966 = vmax.f32 %v3647, 0.0
      %v3967 = vmax.f32 %v3670, 0.0
      %v3968 = vmax.f32 %v3693, 0.0
      %v3969 = vmax.f32 %v3716, 0.0
      %v3970 = vmax.f32 %v3739, 0.0
      %v3971 = vmax.f32 %v3762, 0.0
      %v3972 = vmax.f32 %v3785, 0.0
      %v3973 = vmax.f32 %v3808, 0.0
      %v3974 = vmax.f32 %v3831, 0.0
      %v3975 = vmax.f32 %v3854, 0.0
      %v3976 = vmax.f32 %v3877, 0.0
      %v3977 = vmax.f32 %v3900, 0.0
      %v3978 = vmax.f32 %v3923, 0.0
      %v3979 = vmax.f32 %v3946, 0.0
      %s3980 = scalar_lea.vmem %s13, 2048
      %v3981 = vld [vmem:[%s3980] sm:$0xff]
      %v3982 = vld [vmem:[%s3980 + $0x8] sm:$0xff]
      %v3983 = vld [vmem:[%s3980 + $0x10] sm:$0xff]
      %v3984 = vld [vmem:[%s3980 + $0x18] sm:$0xff]
      %v3985 = vld [vmem:[%s3980 + $0x20] sm:$0xff]
      %v3986 = vld [vmem:[%s3980 + $0x28] sm:$0xff]
      %v3987 = vld [vmem:[%s3980 + $0x30] sm:$0xff]
      %v3988 = vld [vmem:[%s3980 + $0x38] sm:$0xff]
      %v3989 = vld [vmem:[%s3980 + $0x40] sm:$0xff]
      %v3990 = vld [vmem:[%s3980 + $0x48] sm:$0xff]
      %v3991 = vld [vmem:[%s3980 + $0x50] sm:$0xff]
      %v3992 = vld [vmem:[%s3980 + $0x58] sm:$0xff]
      %v3993 = vld [vmem:[%s3980 + $0x60] sm:$0xff]
      %v3994 = vld [vmem:[%s3980 + $0x68] sm:$0xff]
      %v3995 = vld [vmem:[%s3980 + $0x70] sm:$0xff]
      %v3996 = vld [vmem:[%s3980 + $0x78] sm:$0xff]
      %v3997 = vld [vmem:[%s3980 + $0x80] sm:$0xff]
      %v3998 = vld [vmem:[%s3980 + $0x88] sm:$0xff]
      %v3999 = vld [vmem:[%s3980 + $0x90] sm:$0xff]
      %v4000 = vld [vmem:[%s3980 + $0x98] sm:$0xff]
      %v4001 = vld [vmem:[%s3980 + $0xa0] sm:$0xff]
      %v4002 = vld [vmem:[%s3980 + $0xa8] sm:$0xff]
      %v4003 = vld [vmem:[%s3980 + $0xb0] sm:$0xff]
      %v4004 = vld [vmem:[%s3980 + $0xb8] sm:$0xff]
      %v4005 = vld [vmem:[%s3980 + $0xc0] sm:$0xff]
      %v4006 = vld [vmem:[%s3980 + $0xc8] sm:$0xff]
      %v4007 = vld [vmem:[%s3980 + $0xd0] sm:$0xff]
      %v4008 = vld [vmem:[%s3980 + $0xd8] sm:$0xff]
      %v4009 = vld [vmem:[%s3980 + $0xe0] sm:$0xff]
      %v4010 = vld [vmem:[%s3980 + $0xe8] sm:$0xff]
      %v4011 = vld [vmem:[%s3980 + $0xf0] sm:$0xff]
      %v4012 = vld [vmem:[%s3980 + $0xf8] sm:$0xff]
      %v4013 = vld [vmem:[%s3980 + $0x100] sm:$0xff]
      %v4014 = vld [vmem:[%s3980 + $0x108] sm:$0xff]
      %v4015 = vld [vmem:[%s3980 + $0x110] sm:$0xff]
      %v4016 = vld [vmem:[%s3980 + $0x118] sm:$0xff]
      %v4017 = vld [vmem:[%s3980 + $0x120] sm:$0xff]
      %v4018 = vld [vmem:[%s3980 + $0x128] sm:$0xff]
      %v4019 = vld [vmem:[%s3980 + $0x130] sm:$0xff]
      %v4020 = vld [vmem:[%s3980 + $0x138] sm:$0xff]
      %v4021 = vld [vmem:[%s3980 + $0x140] sm:$0xff]
      %v4022 = vld [vmem:[%s3980 + $0x148] sm:$0xff]
      %v4023 = vld [vmem:[%s3980 + $0x150] sm:$0xff]
      %v4024 = vld [vmem:[%s3980 + $0x158] sm:$0xff]
      %v4025 = vld [vmem:[%s3980 + $0x160] sm:$0xff]
      %v4026 = vld [vmem:[%s3980 + $0x168] sm:$0xff]
      %v4027 = vld [vmem:[%s3980 + $0x170] sm:$0xff]
      %v4028 = vld [vmem:[%s3980 + $0x178] sm:$0xff]
      %v4029 = vld [vmem:[%s3980 + $0x180] sm:$0xff]
      %v4030 = vld [vmem:[%s3980 + $0x188] sm:$0xff]
      %v4031 = vld [vmem:[%s3980 + $0x190] sm:$0xff]
      %v4032 = vld [vmem:[%s3980 + $0x198] sm:$0xff]
      %v4033 = vld [vmem:[%s3980 + $0x1a0] sm:$0xff]
      %v4034 = vld [vmem:[%s3980 + $0x1a8] sm:$0xff]
      %v4035 = vld [vmem:[%s3980 + $0x1b0] sm:$0xff]
      %v4036 = vld [vmem:[%s3980 + $0x1b8] sm:$0xff]
      %v4037 = vld [vmem:[%s3980 + $0x1c0] sm:$0xff]
      %v4038 = vld [vmem:[%s3980 + $0x1c8] sm:$0xff]
      %v4039 = vld [vmem:[%s3980 + $0x1d0] sm:$0xff]
      %v4040 = vld [vmem:[%s3980 + $0x1d8] sm:$0xff]
      %v4041 = vld [vmem:[%s3980 + $0x1e0] sm:$0xff]
      %v4042 = vld [vmem:[%s3980 + $0x1e8] sm:$0xff]
      %v4043 = vld [vmem:[%s3980 + $0x1f0] sm:$0xff]
      %v4044 = vld [vmem:[%s3980 + $0x1f8] sm:$0xff]
      %v4045 = vld [vmem:[%s3980 + $0x200] sm:$0xff]
      %v4046 = vld [vmem:[%s3980 + $0x208] sm:$0xff]
      %v4047 = vld [vmem:[%s3980 + $0x210] sm:$0xff]
      %v4048 = vld [vmem:[%s3980 + $0x218] sm:$0xff]
      %v4049 = vld [vmem:[%s3980 + $0x220] sm:$0xff]
      %v4050 = vld [vmem:[%s3980 + $0x228] sm:$0xff]
      %v4051 = vld [vmem:[%s3980 + $0x230] sm:$0xff]
      %v4052 = vld [vmem:[%s3980 + $0x238] sm:$0xff]
      %v4053 = vld [vmem:[%s3980 + $0x240] sm:$0xff]
      %v4054 = vld [vmem:[%s3980 + $0x248] sm:$0xff]
      %v4055 = vld [vmem:[%s3980 + $0x250] sm:$0xff]
      %v4056 = vld [vmem:[%s3980 + $0x258] sm:$0xff]
      %v4057 = vld [vmem:[%s3980 + $0x260] sm:$0xff]
      %v4058 = vld [vmem:[%s3980 + $0x268] sm:$0xff]
      %v4059 = vld [vmem:[%s3980 + $0x270] sm:$0xff]
      %v4060 = vld [vmem:[%s3980 + $0x278] sm:$0xff]
      %v4061 = vld [vmem:[%s3980 + $0x280] sm:$0xff]
      %v4062 = vld [vmem:[%s3980 + $0x288] sm:$0xff]
      %v4063 = vld [vmem:[%s3980 + $0x290] sm:$0xff]
      %v4064 = vld [vmem:[%s3980 + $0x298] sm:$0xff]
      %v4065 = vld [vmem:[%s3980 + $0x2a0] sm:$0xff]
      %v4066 = vld [vmem:[%s3980 + $0x2a8] sm:$0xff]
      %v4067 = vld [vmem:[%s3980 + $0x2b0] sm:$0xff]
      %v4068 = vld [vmem:[%s3980 + $0x2b8] sm:$0xff]
      %v4069 = vld [vmem:[%s3980 + $0x2c0] sm:$0xff]
      %v4070 = vld [vmem:[%s3980 + $0x2c8] sm:$0xff]
      %v4071 = vld [vmem:[%s3980 + $0x2d0] sm:$0xff]
      %v4072 = vld [vmem:[%s3980 + $0x2d8] sm:$0xff]
      %v4073 = vld [vmem:[%s3980 + $0x2e0] sm:$0xff]
      %v4074 = vld [vmem:[%s3980 + $0x2e8] sm:$0xff]
      %v4075 = vld [vmem:[%s3980 + $0x2f0] sm:$0xff]
      %v4076 = vld [vmem:[%s3980 + $0x2f8] sm:$0xff]
      %v4077 = vld [vmem:[%s3980 + $0x300] sm:$0xff]
      %v4078 = vld [vmem:[%s3980 + $0x308] sm:$0xff]
      %v4079 = vld [vmem:[%s3980 + $0x310] sm:$0xff]
      %v4080 = vld [vmem:[%s3980 + $0x318] sm:$0xff]
      %v4081 = vld [vmem:[%s3980 + $0x320] sm:$0xff]
      %v4082 = vld [vmem:[%s3980 + $0x328] sm:$0xff]
      %v4083 = vld [vmem:[%s3980 + $0x330] sm:$0xff]
      %v4084 = vld [vmem:[%s3980 + $0x338] sm:$0xff]
      %v4085 = vld [vmem:[%s3980 + $0x340] sm:$0xff]
      %v4086 = vld [vmem:[%s3980 + $0x348] sm:$0xff]
      %v4087 = vld [vmem:[%s3980 + $0x350] sm:$0xff]
      %v4088 = vld [vmem:[%s3980 + $0x358] sm:$0xff]
      %v4089 = vld [vmem:[%s3980 + $0x360] sm:$0xff]
      %v4090 = vld [vmem:[%s3980 + $0x368] sm:$0xff]
      %v4091 = vld [vmem:[%s3980 + $0x370] sm:$0xff]
      %v4092 = vld [vmem:[%s3980 + $0x378] sm:$0xff]
      %v4093 = vld [vmem:[%s3980 + $0x380] sm:$0xff]
      %v4094 = vld [vmem:[%s3980 + $0x388] sm:$0xff]
      %v4095 = vld [vmem:[%s3980 + $0x390] sm:$0xff]
      %v4096 = vld [vmem:[%s3980 + $0x398] sm:$0xff]
      %v4097 = vld [vmem:[%s3980 + $0x3a0] sm:$0xff]
      %v4098 = vld [vmem:[%s3980 + $0x3a8] sm:$0xff]
      %v4099 = vld [vmem:[%s3980 + $0x3b0] sm:$0xff]
      %v4100 = vld [vmem:[%s3980 + $0x3b8] sm:$0xff]
      %v4101 = vld [vmem:[%s3980 + $0x3c0] sm:$0xff]
      %v4102 = vld [vmem:[%s3980 + $0x3c8] sm:$0xff]
      %v4103 = vld [vmem:[%s3980 + $0x3d0] sm:$0xff]
      %v4104 = vld [vmem:[%s3980 + $0x3d8] sm:$0xff]
      %v4105 = vld [vmem:[%s3980 + $0x3e0] sm:$0xff]
      %v4106 = vld [vmem:[%s3980 + $0x3e8] sm:$0xff]
      %v4107 = vld [vmem:[%s3980 + $0x3f0] sm:$0xff]
      %v4108 = vld [vmem:[%s3980 + $0x3f8] sm:$0xff]
      %v4109 = vld [vmem:[%s3980 + $0x400] sm:$0xff]
      %v4110 = vld [vmem:[%s3980 + $0x408] sm:$0xff]
      %v4111 = vld [vmem:[%s3980 + $0x410] sm:$0xff]
      %v4112 = vld [vmem:[%s3980 + $0x418] sm:$0xff]
      %v4113 = vld [vmem:[%s3980 + $0x420] sm:$0xff]
      %v4114 = vld [vmem:[%s3980 + $0x428] sm:$0xff]
      %v4115 = vld [vmem:[%s3980 + $0x430] sm:$0xff]
      %v4116 = vld [vmem:[%s3980 + $0x438] sm:$0xff]
      %v4117 = vld [vmem:[%s3980 + $0x440] sm:$0xff]
      %v4118 = vld [vmem:[%s3980 + $0x448] sm:$0xff]
      %v4119 = vld [vmem:[%s3980 + $0x450] sm:$0xff]
      %v4120 = vld [vmem:[%s3980 + $0x458] sm:$0xff]
      %v4121 = vld [vmem:[%s3980 + $0x460] sm:$0xff]
      %v4122 = vld [vmem:[%s3980 + $0x468] sm:$0xff]
      %v4123 = vld [vmem:[%s3980 + $0x470] sm:$0xff]
      %v4124 = vld [vmem:[%s3980 + $0x478] sm:$0xff]
      %v4125 = vld [vmem:[%s3980 + $0x480] sm:$0xff]
      %v4126 = vld [vmem:[%s3980 + $0x488] sm:$0xff]
      %v4127 = vld [vmem:[%s3980 + $0x490] sm:$0xff]
      %v4128 = vld [vmem:[%s3980 + $0x498] sm:$0xff]
      %v4129 = vld [vmem:[%s3980 + $0x4a0] sm:$0xff]
      %v4130 = vld [vmem:[%s3980 + $0x4a8] sm:$0xff]
      %v4131 = vld [vmem:[%s3980 + $0x4b0] sm:$0xff]
      %v4132 = vld [vmem:[%s3980 + $0x4b8] sm:$0xff]
      %v4133 = vld [vmem:[%s3980 + $0x4c0] sm:$0xff]
      %v4134 = vld [vmem:[%s3980 + $0x4c8] sm:$0xff]
      %v4135 = vld [vmem:[%s3980 + $0x4d0] sm:$0xff]
      %v4136 = vld [vmem:[%s3980 + $0x4d8] sm:$0xff]
      %v4137 = vld [vmem:[%s3980 + $0x4e0] sm:$0xff]
      %v4138 = vld [vmem:[%s3980 + $0x4e8] sm:$0xff]
      %v4139 = vld [vmem:[%s3980 + $0x4f0] sm:$0xff]
      %v4140 = vld [vmem:[%s3980 + $0x4f8] sm:$0xff]
      %v4141 = vld [vmem:[%s3980 + $0x500] sm:$0xff]
      %v4142 = vld [vmem:[%s3980 + $0x508] sm:$0xff]
      %v4143 = vld [vmem:[%s3980 + $0x510] sm:$0xff]
      %v4144 = vld [vmem:[%s3980 + $0x518] sm:$0xff]
      %v4145 = vld [vmem:[%s3980 + $0x520] sm:$0xff]
      %v4146 = vld [vmem:[%s3980 + $0x528] sm:$0xff]
      %v4147 = vld [vmem:[%s3980 + $0x530] sm:$0xff]
      %v4148 = vld [vmem:[%s3980 + $0x538] sm:$0xff]
      %v4149 = vld [vmem:[%s3980 + $0x540] sm:$0xff]
      %v4150 = vld [vmem:[%s3980 + $0x548] sm:$0xff]
      %v4151 = vld [vmem:[%s3980 + $0x550] sm:$0xff]
      %v4152 = vld [vmem:[%s3980 + $0x558] sm:$0xff]
      %v4153 = vld [vmem:[%s3980 + $0x560] sm:$0xff]
      %v4154 = vld [vmem:[%s3980 + $0x568] sm:$0xff]
      %v4155 = vld [vmem:[%s3980 + $0x570] sm:$0xff]
      %v4156 = vld [vmem:[%s3980 + $0x578] sm:$0xff]
      %v4157 = vld [vmem:[%s3980 + $0x580] sm:$0xff]
      %v4158 = vld [vmem:[%s3980 + $0x588] sm:$0xff]
      %v4159 = vld [vmem:[%s3980 + $0x590] sm:$0xff]
      %v4160 = vld [vmem:[%s3980 + $0x598] sm:$0xff]
      %v4161 = vld [vmem:[%s3980 + $0x5a0] sm:$0xff]
      %v4162 = vld [vmem:[%s3980 + $0x5a8] sm:$0xff]
      %v4163 = vld [vmem:[%s3980 + $0x5b0] sm:$0xff]
      %v4164 = vld [vmem:[%s3980 + $0x5b8] sm:$0xff]
      %v4165 = vld [vmem:[%s3980 + $0x5c0] sm:$0xff]
      %v4166 = vld [vmem:[%s3980 + $0x5c8] sm:$0xff]
      %v4167 = vld [vmem:[%s3980 + $0x5d0] sm:$0xff]
      %v4168 = vld [vmem:[%s3980 + $0x5d8] sm:$0xff]
      %v4169 = vld [vmem:[%s3980 + $0x5e0] sm:$0xff]
      %v4170 = vld [vmem:[%s3980 + $0x5e8] sm:$0xff]
      %v4171 = vld [vmem:[%s3980 + $0x5f0] sm:$0xff]
      %v4172 = vld [vmem:[%s3980 + $0x5f8] sm:$0xff]
      %v4173 = vld [vmem:[%s3980 + $0x600] sm:$0xff]
      %v4174 = vld [vmem:[%s3980 + $0x608] sm:$0xff]
      %v4175 = vld [vmem:[%s3980 + $0x610] sm:$0xff]
      %v4176 = vld [vmem:[%s3980 + $0x618] sm:$0xff]
      %v4177 = vld [vmem:[%s3980 + $0x620] sm:$0xff]
      %v4178 = vld [vmem:[%s3980 + $0x628] sm:$0xff]
      %v4179 = vld [vmem:[%s3980 + $0x630] sm:$0xff]
      %v4180 = vld [vmem:[%s3980 + $0x638] sm:$0xff]
      %v4181 = vld [vmem:[%s3980 + $0x640] sm:$0xff]
      %v4182 = vld [vmem:[%s3980 + $0x648] sm:$0xff]
      %v4183 = vld [vmem:[%s3980 + $0x650] sm:$0xff]
      %v4184 = vld [vmem:[%s3980 + $0x658] sm:$0xff]
      %v4185 = vld [vmem:[%s3980 + $0x660] sm:$0xff]
      %v4186 = vld [vmem:[%s3980 + $0x668] sm:$0xff]
      %v4187 = vld [vmem:[%s3980 + $0x670] sm:$0xff]
      %v4188 = vld [vmem:[%s3980 + $0x678] sm:$0xff]
      %v4189 = vld [vmem:[%s3980 + $0x680] sm:$0xff]
      %v4190 = vld [vmem:[%s3980 + $0x688] sm:$0xff]
      %v4191 = vld [vmem:[%s3980 + $0x690] sm:$0xff]
      %v4192 = vld [vmem:[%s3980 + $0x698] sm:$0xff]
      %v4193 = vld [vmem:[%s3980 + $0x6a0] sm:$0xff]
      %v4194 = vld [vmem:[%s3980 + $0x6a8] sm:$0xff]
      %v4195 = vld [vmem:[%s3980 + $0x6b0] sm:$0xff]
      %v4196 = vld [vmem:[%s3980 + $0x6b8] sm:$0xff]
      %v4197 = vld [vmem:[%s3980 + $0x6c0] sm:$0xff]
      %v4198 = vld [vmem:[%s3980 + $0x6c8] sm:$0xff]
      %v4199 = vld [vmem:[%s3980 + $0x6d0] sm:$0xff]
      %v4200 = vld [vmem:[%s3980 + $0x6d8] sm:$0xff]
      %v4201 = vld [vmem:[%s3980 + $0x6e0] sm:$0xff]
      %v4202 = vld [vmem:[%s3980 + $0x6e8] sm:$0xff]
      %v4203 = vld [vmem:[%s3980 + $0x6f0] sm:$0xff]
      %v4204 = vld [vmem:[%s3980 + $0x6f8] sm:$0xff]
      %v4205 = vld [vmem:[%s3980 + $0x700] sm:$0xff]
      %v4206 = vld [vmem:[%s3980 + $0x708] sm:$0xff]
      %v4207 = vld [vmem:[%s3980 + $0x710] sm:$0xff]
      %v4208 = vld [vmem:[%s3980 + $0x718] sm:$0xff]
      %v4209 = vld [vmem:[%s3980 + $0x720] sm:$0xff]
      %v4210 = vld [vmem:[%s3980 + $0x728] sm:$0xff]
      %v4211 = vld [vmem:[%s3980 + $0x730] sm:$0xff]
      %v4212 = vld [vmem:[%s3980 + $0x738] sm:$0xff]
      %v4213 = vld [vmem:[%s3980 + $0x740] sm:$0xff]
      %v4214 = vld [vmem:[%s3980 + $0x748] sm:$0xff]
      %v4215 = vld [vmem:[%s3980 + $0x750] sm:$0xff]
      %v4216 = vld [vmem:[%s3980 + $0x758] sm:$0xff]
      %v4217 = vld [vmem:[%s3980 + $0x760] sm:$0xff]
      %v4218 = vld [vmem:[%s3980 + $0x768] sm:$0xff]
      %v4219 = vld [vmem:[%s3980 + $0x770] sm:$0xff]
      %v4220 = vld [vmem:[%s3980 + $0x778] sm:$0xff]
      %v4221 = vld [vmem:[%s3980 + $0x780] sm:$0xff]
      %v4222 = vld [vmem:[%s3980 + $0x788] sm:$0xff]
      %v4223 = vld [vmem:[%s3980 + $0x790] sm:$0xff]
      %v4224 = vld [vmem:[%s3980 + $0x798] sm:$0xff]
      %v4225 = vld [vmem:[%s3980 + $0x7a0] sm:$0xff]
      %v4226 = vld [vmem:[%s3980 + $0x7a8] sm:$0xff]
      %v4227 = vld [vmem:[%s3980 + $0x7b0] sm:$0xff]
      %v4228 = vld [vmem:[%s3980 + $0x7b8] sm:$0xff]
      %v4229 = vld [vmem:[%s3980 + $0x7c0] sm:$0xff]
      %v4230 = vld [vmem:[%s3980 + $0x7c8] sm:$0xff]
      %v4231 = vld [vmem:[%s3980 + $0x7d0] sm:$0xff]
      %v4232 = vld [vmem:[%s3980 + $0x7d8] sm:$0xff]
      %v4233 = vld [vmem:[%s3980 + $0x7e0] sm:$0xff]
      %v4234 = vld [vmem:[%s3980 + $0x7e8] sm:$0xff]
      %v4235 = vld [vmem:[%s3980 + $0x7f0] sm:$0xff]
      %v4236 = vld [vmem:[%s3980 + $0x7f8] sm:$0xff]
      %s4237 = scalar_lea.vmem %s14, 1
      %v4238 = vld [vmem:[%s4237] sm:$0x1]
      %v4240 = vperm.slane %v4238, 0
      %4242 = vmatpush.msra.mxu0 %v3996
      %4243 = vmatpush.msra.mxu0 %v3995
      %4244 = vmatpush.msra.mxu0 %v3994
      %4245 = vmatpush.msra.mxu0 %v3993
      %4246 = vmatpush.msra.mxu0 %v3992
      %4247 = vmatpush.msra.mxu0 %v3991
      %4248 = vmatpush.msra.mxu0 %v3990
      %4249 = vmatpush.msra.mxu0 %v3989
      %4250 = vmatpush.msra.mxu0 %v3988
      %4251 = vmatpush.msra.mxu0 %v3987
      %4252 = vmatpush.msra.mxu0 %v3986
      %4253 = vmatpush.msra.mxu0 %v3985
      %4254 = vmatpush.msra.mxu0 %v3984
      %4255 = vmatpush.msra.mxu0 %v3983
      %4256 = vmatpush.msra.mxu0 %v3982
      %4257 = vmatpush.msra.mxu0 %v3981
      %4258 = vmatmul.f32.gmra.mxu0 %v3948
      %v4259 = vpop.f32.mrf.mxu0
      %v4260 = vadd.f32 %v4240, %v4259
      %4261 = vmatmul.f32.gmra.mxu0 %v3964
      %v4262 = vpop.f32.mrf.mxu0
      %4263 = vdwg.mxu0
      %4264 = vmatpush.msra.mxu0 %v4012
      %4265 = vmatpush.msra.mxu0 %v4011
      %4266 = vmatpush.msra.mxu0 %v4010
      %4267 = vmatpush.msra.mxu0 %v4009
      %4268 = vmatpush.msra.mxu0 %v4008
      %4269 = vmatpush.msra.mxu0 %v4007
      %4270 = vmatpush.msra.mxu0 %v4006
      %4271 = vmatpush.msra.mxu0 %v4005
      %4272 = vmatpush.msra.mxu0 %v4004
      %4273 = vmatpush.msra.mxu0 %v4003
      %4274 = vmatpush.msra.mxu0 %v4002
      %4275 = vmatpush.msra.mxu0 %v4001
      %4276 = vmatpush.msra.mxu0 %v4000
      %4277 = vmatpush.msra.mxu0 %v3999
      %4278 = vmatpush.msra.mxu0 %v3998
      %4279 = vmatpush.msra.mxu0 %v3997
      %4280 = vmatmul.f32.gmra.mxu0 %v3949
      %v4281 = vpop.f32.mrf.mxu0
      %v4282 = vadd.f32 %v4260, %v4281
      %4283 = vmatmul.f32.gmra.mxu0 %v3965
      %v4284 = vpop.f32.mrf.mxu0
      %4285 = vdwg.mxu0
      %4286 = vmatpush.msra.mxu0 %v4028
      %4287 = vmatpush.msra.mxu0 %v4027
      %4288 = vmatpush.msra.mxu0 %v4026
      %4289 = vmatpush.msra.mxu0 %v4025
      %4290 = vmatpush.msra.mxu0 %v4024
      %4291 = vmatpush.msra.mxu0 %v4023
      %4292 = vmatpush.msra.mxu0 %v4022
      %4293 = vmatpush.msra.mxu0 %v4021
      %4294 = vmatpush.msra.mxu0 %v4020
      %4295 = vmatpush.msra.mxu0 %v4019
      %4296 = vmatpush.msra.mxu0 %v4018
      %4297 = vmatpush.msra.mxu0 %v4017
      %4298 = vmatpush.msra.mxu0 %v4016
      %4299 = vmatpush.msra.mxu0 %v4015
      %4300 = vmatpush.msra.mxu0 %v4014
      %4301 = vmatpush.msra.mxu0 %v4013
      %4302 = vmatmul.f32.gmra.mxu0 %v3950
      %v4303 = vpop.f32.mrf.mxu0
      %v4304 = vadd.f32 %v4282, %v4303
      %4305 = vmatmul.f32.gmra.mxu0 %v3966
      %v4306 = vpop.f32.mrf.mxu0
      %4307 = vdwg.mxu0
      %4308 = vmatpush.msra.mxu0 %v4044
      %4309 = vmatpush.msra.mxu0 %v4043
      %4310 = vmatpush.msra.mxu0 %v4042
      %4311 = vmatpush.msra.mxu0 %v4041
      %4312 = vmatpush.msra.mxu0 %v4040
      %4313 = vmatpush.msra.mxu0 %v4039
      %4314 = vmatpush.msra.mxu0 %v4038
      %4315 = vmatpush.msra.mxu0 %v4037
      %4316 = vmatpush.msra.mxu0 %v4036
      %4317 = vmatpush.msra.mxu0 %v4035
      %4318 = vmatpush.msra.mxu0 %v4034
      %4319 = vmatpush.msra.mxu0 %v4033
      %4320 = vmatpush.msra.mxu0 %v4032
      %4321 = vmatpush.msra.mxu0 %v4031
      %4322 = vmatpush.msra.mxu0 %v4030
      %4323 = vmatpush.msra.mxu0 %v4029
      %4324 = vmatmul.f32.gmra.mxu0 %v3951
      %v4325 = vpop.f32.mrf.mxu0
      %v4326 = vadd.f32 %v4304, %v4325
      %4327 = vmatmul.f32.gmra.mxu0 %v3967
      %v4328 = vpop.f32.mrf.mxu0
      %4329 = vdwg.mxu0
      %4330 = vmatpush.msra.mxu0 %v4060
      %4331 = vmatpush.msra.mxu0 %v4059
      %4332 = vmatpush.msra.mxu0 %v4058
      %4333 = vmatpush.msra.mxu0 %v4057
      %4334 = vmatpush.msra.mxu0 %v4056
      %4335 = vmatpush.msra.mxu0 %v4055
      %4336 = vmatpush.msra.mxu0 %v4054
      %4337 = vmatpush.msra.mxu0 %v4053
      %4338 = vmatpush.msra.mxu0 %v4052
      %4339 = vmatpush.msra.mxu0 %v4051
      %4340 = vmatpush.msra.mxu0 %v4050
      %4341 = vmatpush.msra.mxu0 %v4049
      %4342 = vmatpush.msra.mxu0 %v4048
      %4343 = vmatpush.msra.mxu0 %v4047
      %4344 = vmatpush.msra.mxu0 %v4046
      %4345 = vmatpush.msra.mxu0 %v4045
      %4346 = vmatmul.f32.gmra.mxu0 %v3952
      %v4347 = vpop.f32.mrf.mxu0
      %v4348 = vadd.f32 %v4326, %v4347
      %4349 = vmatmul.f32.gmra.mxu0 %v3968
      %v4350 = vpop.f32.mrf.mxu0
      %4351 = vdwg.mxu0
      %4352 = vmatpush.msra.mxu0 %v4076
      %4353 = vmatpush.msra.mxu0 %v4075
      %4354 = vmatpush.msra.mxu0 %v4074
      %4355 = vmatpush.msra.mxu0 %v4073
      %4356 = vmatpush.msra.mxu0 %v4072
      %4357 = vmatpush.msra.mxu0 %v4071
      %4358 = vmatpush.msra.mxu0 %v4070
      %4359 = vmatpush.msra.mxu0 %v4069
      %4360 = vmatpush.msra.mxu0 %v4068
      %4361 = vmatpush.msra.mxu0 %v4067
      %4362 = vmatpush.msra.mxu0 %v4066
      %4363 = vmatpush.msra.mxu0 %v4065
      %4364 = vmatpush.msra.mxu0 %v4064
      %4365 = vmatpush.msra.mxu0 %v4063
      %4366 = vmatpush.msra.mxu0 %v4062
      %4367 = vmatpush.msra.mxu0 %v4061
      %4368 = vmatmul.f32.gmra.mxu0 %v3953
      %v4369 = vpop.f32.mrf.mxu0
      %v4370 = vadd.f32 %v4348, %v4369
      %4371 = vmatmul.f32.gmra.mxu0 %v3969
      %v4372 = vpop.f32.mrf.mxu0
      %4373 = vdwg.mxu0
      %4374 = vmatpush.msra.mxu0 %v4092
      %4375 = vmatpush.msra.mxu0 %v4091
      %4376 = vmatpush.msra.mxu0 %v4090
      %4377 = vmatpush.msra.mxu0 %v4089
      %4378 = vmatpush.msra.mxu0 %v4088
      %4379 = vmatpush.msra.mxu0 %v4087
      %4380 = vmatpush.msra.mxu0 %v4086
      %4381 = vmatpush.msra.mxu0 %v4085
      %4382 = vmatpush.msra.mxu0 %v4084
      %4383 = vmatpush.msra.mxu0 %v4083
      %4384 = vmatpush.msra.mxu0 %v4082
      %4385 = vmatpush.msra.mxu0 %v4081
      %4386 = vmatpush.msra.mxu0 %v4080
      %4387 = vmatpush.msra.mxu0 %v4079
      %4388 = vmatpush.msra.mxu0 %v4078
      %4389 = vmatpush.msra.mxu0 %v4077
      %4390 = vmatmul.f32.gmra.mxu0 %v3954
      %v4391 = vpop.f32.mrf.mxu0
      %v4392 = vadd.f32 %v4370, %v4391
      %4393 = vmatmul.f32.gmra.mxu0 %v3970
      %v4394 = vpop.f32.mrf.mxu0
      %4395 = vdwg.mxu0
      %4396 = vmatpush.msra.mxu0 %v4108
      %4397 = vmatpush.msra.mxu0 %v4107
      %4398 = vmatpush.msra.mxu0 %v4106
      %4399 = vmatpush.msra.mxu0 %v4105
      %4400 = vmatpush.msra.mxu0 %v4104
      %4401 = vmatpush.msra.mxu0 %v4103
      %4402 = vmatpush.msra.mxu0 %v4102
      %4403 = vmatpush.msra.mxu0 %v4101
      %4404 = vmatpush.msra.mxu0 %v4100
      %4405 = vmatpush.msra.mxu0 %v4099
      %4406 = vmatpush.msra.mxu0 %v4098
      %4407 = vmatpush.msra.mxu0 %v4097
      %4408 = vmatpush.msra.mxu0 %v4096
      %4409 = vmatpush.msra.mxu0 %v4095
      %4410 = vmatpush.msra.mxu0 %v4094
      %4411 = vmatpush.msra.mxu0 %v4093
      %4412 = vmatmul.f32.gmra.mxu0 %v3955
      %v4413 = vpop.f32.mrf.mxu0
      %v4414 = vadd.f32 %v4392, %v4413
      %4415 = vmatmul.f32.gmra.mxu0 %v3971
      %v4416 = vpop.f32.mrf.mxu0
      %4417 = vdwg.mxu0
      %4418 = vmatpush.msra.mxu0 %v4124
      %4419 = vmatpush.msra.mxu0 %v4123
      %4420 = vmatpush.msra.mxu0 %v4122
      %4421 = vmatpush.msra.mxu0 %v4121
      %4422 = vmatpush.msra.mxu0 %v4120
      %4423 = vmatpush.msra.mxu0 %v4119
      %4424 = vmatpush.msra.mxu0 %v4118
      %4425 = vmatpush.msra.mxu0 %v4117
      %4426 = vmatpush.msra.mxu0 %v4116
      %4427 = vmatpush.msra.mxu0 %v4115
      %4428 = vmatpush.msra.mxu0 %v4114
      %4429 = vmatpush.msra.mxu0 %v4113
      %4430 = vmatpush.msra.mxu0 %v4112
      %4431 = vmatpush.msra.mxu0 %v4111
      %4432 = vmatpush.msra.mxu0 %v4110
      %4433 = vmatpush.msra.mxu0 %v4109
      %4434 = vmatmul.f32.gmra.mxu0 %v3956
      %v4435 = vpop.f32.mrf.mxu0
      %v4436 = vadd.f32 %v4414, %v4435
      %4437 = vmatmul.f32.gmra.mxu0 %v3972
      %v4438 = vpop.f32.mrf.mxu0
      %4439 = vdwg.mxu0
      %4440 = vmatpush.msra.mxu0 %v4140
      %4441 = vmatpush.msra.mxu0 %v4139
      %4442 = vmatpush.msra.mxu0 %v4138
      %4443 = vmatpush.msra.mxu0 %v4137
      %4444 = vmatpush.msra.mxu0 %v4136
      %4445 = vmatpush.msra.mxu0 %v4135
      %4446 = vmatpush.msra.mxu0 %v4134
      %4447 = vmatpush.msra.mxu0 %v4133
      %4448 = vmatpush.msra.mxu0 %v4132
      %4449 = vmatpush.msra.mxu0 %v4131
      %4450 = vmatpush.msra.mxu0 %v4130
      %4451 = vmatpush.msra.mxu0 %v4129
      %4452 = vmatpush.msra.mxu0 %v4128
      %4453 = vmatpush.msra.mxu0 %v4127
      %4454 = vmatpush.msra.mxu0 %v4126
      %4455 = vmatpush.msra.mxu0 %v4125
      %4456 = vmatmul.f32.gmra.mxu0 %v3957
      %v4457 = vpop.f32.mrf.mxu0
      %v4458 = vadd.f32 %v4436, %v4457
      %4459 = vmatmul.f32.gmra.mxu0 %v3973
      %v4460 = vpop.f32.mrf.mxu0
      %4461 = vdwg.mxu0
      %4462 = vmatpush.msra.mxu0 %v4156
      %4463 = vmatpush.msra.mxu0 %v4155
      %4464 = vmatpush.msra.mxu0 %v4154
      %4465 = vmatpush.msra.mxu0 %v4153
      %4466 = vmatpush.msra.mxu0 %v4152
      %4467 = vmatpush.msra.mxu0 %v4151
      %4468 = vmatpush.msra.mxu0 %v4150
      %4469 = vmatpush.msra.mxu0 %v4149
      %4470 = vmatpush.msra.mxu0 %v4148
      %4471 = vmatpush.msra.mxu0 %v4147
      %4472 = vmatpush.msra.mxu0 %v4146
      %4473 = vmatpush.msra.mxu0 %v4145
      %4474 = vmatpush.msra.mxu0 %v4144
      %4475 = vmatpush.msra.mxu0 %v4143
      %4476 = vmatpush.msra.mxu0 %v4142
      %4477 = vmatpush.msra.mxu0 %v4141
      %4478 = vmatmul.f32.gmra.mxu0 %v3958
      %v4479 = vpop.f32.mrf.mxu0
      %v4480 = vadd.f32 %v4458, %v4479
      %4481 = vmatmul.f32.gmra.mxu0 %v3974
      %v4482 = vpop.f32.mrf.mxu0
      %4483 = vdwg.mxu0
      %4484 = vmatpush.msra.mxu0 %v4172
      %4485 = vmatpush.msra.mxu0 %v4171
      %4486 = vmatpush.msra.mxu0 %v4170
      %4487 = vmatpush.msra.mxu0 %v4169
      %4488 = vmatpush.msra.mxu0 %v4168
      %4489 = vmatpush.msra.mxu0 %v4167
      %4490 = vmatpush.msra.mxu0 %v4166
      %4491 = vmatpush.msra.mxu0 %v4165
      %4492 = vmatpush.msra.mxu0 %v4164
      %4493 = vmatpush.msra.mxu0 %v4163
      %4494 = vmatpush.msra.mxu0 %v4162
      %4495 = vmatpush.msra.mxu0 %v4161
      %4496 = vmatpush.msra.mxu0 %v4160
      %4497 = vmatpush.msra.mxu0 %v4159
      %4498 = vmatpush.msra.mxu0 %v4158
      %4499 = vmatpush.msra.mxu0 %v4157
      %4500 = vmatmul.f32.gmra.mxu0 %v3959
      %v4501 = vpop.f32.mrf.mxu0
      %v4502 = vadd.f32 %v4480, %v4501
      %4503 = vmatmul.f32.gmra.mxu0 %v3975
      %v4504 = vpop.f32.mrf.mxu0
      %4505 = vdwg.mxu0
      %4506 = vmatpush.msra.mxu0 %v4188
      %4507 = vmatpush.msra.mxu0 %v4187
      %4508 = vmatpush.msra.mxu0 %v4186
      %4509 = vmatpush.msra.mxu0 %v4185
      %4510 = vmatpush.msra.mxu0 %v4184
      %4511 = vmatpush.msra.mxu0 %v4183
      %4512 = vmatpush.msra.mxu0 %v4182
      %4513 = vmatpush.msra.mxu0 %v4181
      %4514 = vmatpush.msra.mxu0 %v4180
      %4515 = vmatpush.msra.mxu0 %v4179
      %4516 = vmatpush.msra.mxu0 %v4178
      %4517 = vmatpush.msra.mxu0 %v4177
      %4518 = vmatpush.msra.mxu0 %v4176
      %4519 = vmatpush.msra.mxu0 %v4175
      %4520 = vmatpush.msra.mxu0 %v4174
      %4521 = vmatpush.msra.mxu0 %v4173
      %4522 = vmatmul.f32.gmra.mxu0 %v3960
      %v4523 = vpop.f32.mrf.mxu0
      %v4524 = vadd.f32 %v4502, %v4523
      %4525 = vmatmul.f32.gmra.mxu0 %v3976
      %v4526 = vpop.f32.mrf.mxu0
      %4527 = vdwg.mxu0
      %4528 = vmatpush.msra.mxu0 %v4204
      %4529 = vmatpush.msra.mxu0 %v4203
      %4530 = vmatpush.msra.mxu0 %v4202
      %4531 = vmatpush.msra.mxu0 %v4201
      %4532 = vmatpush.msra.mxu0 %v4200
      %4533 = vmatpush.msra.mxu0 %v4199
      %4534 = vmatpush.msra.mxu0 %v4198
      %4535 = vmatpush.msra.mxu0 %v4197
      %4536 = vmatpush.msra.mxu0 %v4196
      %4537 = vmatpush.msra.mxu0 %v4195
      %4538 = vmatpush.msra.mxu0 %v4194
      %4539 = vmatpush.msra.mxu0 %v4193
      %4540 = vmatpush.msra.mxu0 %v4192
      %4541 = vmatpush.msra.mxu0 %v4191
      %4542 = vmatpush.msra.mxu0 %v4190
      %4543 = vmatpush.msra.mxu0 %v4189
      %4544 = vmatmul.f32.gmra.mxu0 %v3961
      %v4545 = vpop.f32.mrf.mxu0
      %v4546 = vadd.f32 %v4524, %v4545
      %4547 = vmatmul.f32.gmra.mxu0 %v3977
      %v4548 = vpop.f32.mrf.mxu0
      %4549 = vdwg.mxu0
      %4550 = vmatpush.msra.mxu0 %v4220
      %4551 = vmatpush.msra.mxu0 %v4219
      %4552 = vmatpush.msra.mxu0 %v4218
      %4553 = vmatpush.msra.mxu0 %v4217
      %4554 = vmatpush.msra.mxu0 %v4216
      %4555 = vmatpush.msra.mxu0 %v4215
      %4556 = vmatpush.msra.mxu0 %v4214
      %4557 = vmatpush.msra.mxu0 %v4213
      %4558 = vmatpush.msra.mxu0 %v4212
      %4559 = vmatpush.msra.mxu0 %v4211
      %4560 = vmatpush.msra.mxu0 %v4210
      %4561 = vmatpush.msra.mxu0 %v4209
      %4562 = vmatpush.msra.mxu0 %v4208
      %4563 = vmatpush.msra.mxu0 %v4207
      %4564 = vmatpush.msra.mxu0 %v4206
      %4565 = vmatpush.msra.mxu0 %v4205
      %4566 = vmatmul.f32.gmra.mxu0 %v3962
      %v4567 = vpop.f32.mrf.mxu0
      %v4568 = vadd.f32 %v4546, %v4567
      %4569 = vmatmul.f32.gmra.mxu0 %v3978
      %v4570 = vpop.f32.mrf.mxu0
      %4571 = vdwg.mxu0
      %4572 = vmatpush.msra.mxu0 %v4236
      %4573 = vmatpush.msra.mxu0 %v4235
      %4574 = vmatpush.msra.mxu0 %v4234
      %4575 = vmatpush.msra.mxu0 %v4233
      %4576 = vmatpush.msra.mxu0 %v4232
      %4577 = vmatpush.msra.mxu0 %v4231
      %4578 = vmatpush.msra.mxu0 %v4230
      %4579 = vmatpush.msra.mxu0 %v4229
      %4580 = vmatpush.msra.mxu0 %v4228
      %4581 = vmatpush.msra.mxu0 %v4227
      %4582 = vmatpush.msra.mxu0 %v4226
      %4583 = vmatpush.msra.mxu0 %v4225
      %4584 = vmatpush.msra.mxu0 %v4224
      %4585 = vmatpush.msra.mxu0 %v4223
      %4586 = vmatpush.msra.mxu0 %v4222
      %4587 = vmatpush.msra.mxu0 %v4221
      %4588 = vmatmul.f32.gmra.mxu0 %v3963
      %v4589 = vpop.f32.mrf.mxu0
      %v4590 = vadd.f32 %v4568, %v4589
      %4591 = vmatmul.f32.gmra.mxu0 %v3979
      %v4592 = vpop.f32.mrf.mxu0
      %4593 = vdwg.mxu0
      %v4594 = vadd.f32 %v3470, %v4590
      %v4595 = vsel %vm1175, %v4594, 0.0
      %4596 = vadd.xlane.f32.xlu0 %v4595
      %v4597 = vpop.xlane.xlu0 %4596
      %v4598 = vmul.f32 %v4597, %v1675
      %v4599 = vsub.f32 %v4594, %v4598
      %v4600 = vmul.f32 %v4599, %v4599
      %v4601 = vsel %vm1175, %v4600, 0.0
      %4602 = vadd.xlane.f32.xlu0 %v4601
      %v4603 = vpop.xlane.xlu0 %4602
      %v4604 = vmul.f32 %v4603, %v1675
      %v4605 = vadd.f32 %v4604, 1e-05
      %v4606 = vrsqrt.pop %v4605
      %v4607 = vmul.f32 %v4606, %v4605
      %v4608 = vmul.f32 %v4607, %v4606
      %v4609 = vmul.f32 0.5, %v4608
      %v4610 = vsub.f32 1.5, %v4609
      %v4611 = vmul.f32 %v4606, %v4610
      %vm4612 = vweird.f32 %v4605
      %vm4613 = vweird.f32 %v4606
      %vm4614 = vmor %vm4612, %vm4613
      %v4615 = vsel %vm4614, %v4606, %v4611
      %v4616 = vmul.f32 %v4599, %v4615
      %s4617 = scalar_lea.vmem %s17, 1
      %v4618 = vld [vmem:[%s4617] sm:$0x1]
      %v4620 = vperm.slane %v4618, 0
      %v4622 = vmul.f32 %v4616, %v4620
      %s4623 = scalar_lea.vmem %s18, 1
      %v4624 = vld [vmem:[%s4623] sm:$0x1]
      %v4626 = vperm.slane %v4624, 0
      %v4628 = vadd.f32 %v4622, %v4626
      %v4629 = vld [vmem:[%s19] sm:$0x1]
      %v4630 = vmul.f32 %v4628, %v4629
      %vm4631 = vcmask 253952
      %v4632 = vsel %vm4631, %v4630, 0.0
      %4633 = vadd.xlane.f32.xlu0 %v4632
      %v4634 = vpop.xlane.xlu0 %4633
      %v4635 = vld [vmem:[#allocation2] sm:$0x1]
      %v4636 = vadd.f32 %v4634, %v4635
      %vm4637 = vcmask 0
      %4638 = vst.msk [vmem:[%s688] sm:$0x1] %vm4637, %v4636
      %p4639 = scmp.lt.s32.totalorder %s34, 1
      %s4640 = scalar_select %p4639, %s34, 1
      %s4641 = scalar_lea.vmem %s21, %s4640
      // Predicated region
      $region105: #{model_forward_pallas.1} parent=103 // pred_check
        %p4642 = pneg %p508
      $region106: #{model_forward_pallas.1} parent=103 // pred_check_branch
        %4644 = sbr.rel (%p4642) target = $region108
      $region107: #{model_forward_pallas.1} parent=103 // pred_region
        _
      $region108: #{model_forward_pallas.1} parent=103 // pred_fallthru
        _
    $region104: #{model_forward_pallas.1} parent=5 // pred_fallthru
      _
    %p4645 = scmp.le.s32.totalorder 2, %s29
    // Predicated region
    $region109: #{model_forward_pallas.1} parent=5 // pred_check
      %p4646 = pneg %p4645
    $region110: #{model_forward_pallas.1} parent=5 // pred_check_branch
      %4648 = sbr.rel (%p4646) target = $region112
    $region111: #{model_forward_pallas.1} parent=5 // pred_region
      %s4649 = ssub.s32 %s29, 2
      // Predicated region
      $region113: #{model_forward_pallas.1} parent=111 // pred_check
        %p4650 = pneg %p514
      $region114: #{model_forward_pallas.1} parent=111 // pred_check_branch
        %4652 = sbr.rel (%p4650) target = $region116
      $region115: #{model_forward_pallas.1} parent=111 // pred_region
        %p4653 = scmp.lt.s32.totalorder %s35, 1
        %s4654 = scalar_select %p4653, %s35, 1
        %s4655 = scalar_lea.vmem %s21, %s4654
      $region116: #{model_forward_pallas.1} parent=111 // pred_fallthru
        _
    $region112: #{model_forward_pallas.1} parent=5 // pred_fallthru
      _
  $region6: #{model_forward_pallas.1} parent=0 // loop_footer
    %s33 = sadd.s32 1, %s29
  $region7: #{model_forward_pallas.1} parent=0 // loop_footer_branch
    %28 = sbr.rel target = $region3
  $region8: #{model_forward_pallas.1} parent=0 // loop_exit
    _

</llo_original>
